<compile_context>
chip_gen: v6e
topology: v6e:2x2x1
jax: 0.10.0
libtpu: 0.0.40
codegen_flags: <defaults>
</compile_context>

<pallas_src>
import math
from functools import partial

import jax
import jax.numpy as jnp
from jax.experimental import pallas as pl
from jax.experimental.pallas import tpu as pltpu


# ------------------------------- helpers ------------------------------------

def _round_up(x, m):
    return (x + m - 1) // m * m


def _fit(dim, pref, align):
    """Return (padded_dim, tile): tile divides padded_dim, tile <= pref,
    and tile is a multiple of `align` (pref must be a multiple of align)."""
    if dim <= pref:
        d = _round_up(dim, align)
        return d, d
    d = _round_up(dim, pref)
    return d, pref


# ----------------------------- Pallas kernels ------------------------------

def _matmul_kernel(x_ref, w_ref, b_ref, o_ref, acc_ref, *, relu):
    """Tiled matmul with f32 accumulator, fused bias (+ optional ReLU)."""
    @pl.when(pl.program_id(2) == 0)
    def _():
        acc_ref[...] = jnp.zeros_like(acc_ref)

    acc_ref[...] += jnp.dot(x_ref[...], w_ref[...],
                            preferred_element_type=jnp.float32)

    @pl.when(pl.program_id(2) == pl.num_programs(2) - 1)
    def _():
        r = acc_ref[...] + b_ref[...]
        if relu:
            r = jnp.maximum(r, 0.0)
        o_ref[...] = r.astype(o_ref.dtype)


def _add_ln_kernel(y_ref, r_ref, g_ref, b_ref, o_ref):
    """Fused residual add + LayerNorm: LN(y + r), stats in f32, eps=1e-5."""
    x = y_ref[...].astype(jnp.float32) + r_ref[...].astype(jnp.float32)
    mean = jnp.mean(x, axis=-1, keepdims=True)
    var = jnp.mean(jnp.square(x - mean), axis=-1, keepdims=True)
    y = (x - mean) * jax.lax.rsqrt(var + 1e-5)      # nn.LayerNorm default eps
    o_ref[...] = (y * g_ref[...] + b_ref[...]).astype(o_ref.dtype)


def _mha_kernel(q_ref, k_ref, v_ref, m_ref, wo_ref, bo_ref, o_ref, *,
                num_heads, causal, scale):
    """One batch element per program; all heads + output projection in-kernel.

    q_ref: [1, Sq, D], k_ref/v_ref: [1, Sk, D], m_ref: [1, 1, Sk] (>0 = keep
    key), wo_ref: [D, D], bo_ref: [1, D] (f32), o_ref: [1, Sq, D] (bf16).
    """
    Sq = q_ref.shape[1]
    Sk = k_ref.shape[1]
    D = q_ref.shape[2]
    dk = D // num_heads

    # 1/sqrt(dk) folded into q before the QK matmul.
    q = q_ref[0].astype(jnp.float32) * scale          # [Sq, D]
    k = k_ref[0].astype(jnp.float32)                  # [Sk, D]
    v = v_ref[0].astype(jnp.float32)                  # [Sk, D]
    wo = wo_ref[...].astype(jnp.float32)              # [D, D]

    keep = m_ref[0] > 0.0                             # [1, Sk] key-pad mask
    if causal:
        row = jax.lax.broadcasted_iota(jnp.int32, (Sq, Sk), 0)
        col = jax.lax.broadcasted_iota(jnp.int32, (Sq, Sk), 1)
        keep = jnp.logical_and(keep, col <= row)      # [Sq, Sk]

    acc = jnp.zeros((Sq, D), jnp.float32)
    for h in range(num_heads):                        # static unroll over heads
        sl = slice(h * dk, (h + 1) * dk)
        qh, kh, vh = q[:, sl], k[:, sl], v[:, sl]
        # q @ k.T without an explicit transpose (MXU-native contraction).
        s = jax.lax.dot_general(qh, kh, (((1,), (1,)), ((), ())),
                                preferred_element_type=jnp.float32)   # [Sq, Sk]
        s = jnp.where(keep, s, jnp.float32(-1e9))     # masked_fill(mask==0, -1e9)
        s = s - jnp.max(s, axis=-1, keepdims=True)
        p = jnp.exp(s)
        p = p * pl.reciprocal(jnp.sum(p, axis=-1, keepdims=True), approx=True)
        ctx = jnp.dot(p, vh, preferred_element_type=jnp.float32)      # [Sq, dk]
        # Fused head-merge + output projection: sum_h ctx_h @ wo[h*dk:(h+1)*dk].
        acc = acc + jnp.dot(ctx, wo[sl, :], preferred_element_type=jnp.float32)

    o_ref[0] = (acc + bo_ref[...]).astype(o_ref.dtype)


# ----------------------------- kernel wrappers ------------------------------

def pallas_linear(x, w, b, *, relu=False, out_dtype=jnp.bfloat16):
    """y = x @ w + b (optional ReLU). Tiled, bf16 operands, f32 accumulation."""
    M, K = x.shape
    _, N = w.shape
    Mp, tm = _fit(M, 256, 16)
    Kp, tk = _fit(K, 512, 128)
    Np, tn = _fit(N, 512, 128)

    xp = jnp.pad(x.astype(jnp.bfloat16), ((0, Mp - M), (0, Kp - K)))
    wp = jnp.pad(w.astype(jnp.bfloat16), ((0, Kp - K), (0, Np - N)))
    bp = jnp.pad(b.astype(jnp.float32), (0, Np - N)).reshape(1, Np)

    grid = (Mp // tm, Np // tn, Kp // tk)
    out = pl.pallas_call(
        partial(_matmul_kernel, relu=relu),
        out_shape=jax.ShapeDtypeStruct((Mp, Np), out_dtype),
        grid=grid,
        in_specs=[
            pl.BlockSpec((tm, tk), lambda i, j, k: (i, k)),
            pl.BlockSpec((tk, tn), lambda i, j, k: (k, j)),
            pl.BlockSpec((1, tn), lambda i, j, k: (0, j)),
        ],
        out_specs=pl.BlockSpec((tm, tn), lambda i, j, k: (i, j)),
        scratch_shapes=[pltpu.VMEM((tm, tn), jnp.float32)],
        compiler_params=pltpu.CompilerParams(
            dimension_semantics=("parallel", "parallel", "arbitrary")),
        cost_estimate=pl.CostEstimate(
            flops=2 * Mp * Np * Kp,
            transcendentals=0,
            bytes_accessed=2 * (Mp * Kp + Kp * Np) + 4 * Mp * Np),
    )(xp, wp, bp)
    return out[:M, :N]


def pallas_add_layernorm(y, r, g, b):
    """LayerNorm(y + r) over the last dim; y, r: [M, D]."""
    M, D = y.shape
    Mp, tm = _fit(M, 256, 16)
    yp = jnp.pad(y.astype(jnp.bfloat16), ((0, Mp - M), (0, 0)))
    rp = jnp.pad(r.astype(jnp.bfloat16), ((0, Mp - M), (0, 0)))
    out = pl.pallas_call(
        _add_ln_kernel,
        out_shape=jax.ShapeDtypeStruct((Mp, D), jnp.bfloat16),
        grid=(Mp // tm,),
        in_specs=[
            pl.BlockSpec((tm, D), lambda i: (i, 0)),
            pl.BlockSpec((tm, D), lambda i: (i, 0)),
            pl.BlockSpec((1, D), lambda i: (0, 0)),
            pl.BlockSpec((1, D), lambda i: (0, 0)),
        ],
        out_specs=pl.BlockSpec((tm, D), lambda i: (i, 0)),
        compiler_params=pltpu.CompilerParams(dimension_semantics=("parallel",)),
    )(yp, rp, g.reshape(1, D).astype(jnp.float32),
      b.reshape(1, D).astype(jnp.float32))
    return out[:M]


def pallas_attention(q, k, v, key_mask, wo, bo, *, num_heads, causal):
    """q/k/v: [B, S, D] (head-interleaved features); key_mask: [B, 1, Sk] f32.
    wo: [D, D], bo: [D] — output projection fused into the kernel.
    Returns [B, Sq, D] bf16 (heads already merged and projected)."""
    B, Sq, D = q.shape
    Sk = k.shape[1]
    dk = D // num_heads
    out = pl.pallas_call(
        partial(_mha_kernel, num_heads=num_heads, causal=causal,
                scale=1.0 / math.sqrt(dk)),
        out_shape=jax.ShapeDtypeStruct((B, Sq, D), jnp.bfloat16),
        grid=(B,),
        in_specs=[
            pl.BlockSpec((1, Sq, D), lambda b: (b, 0, 0)),
            pl.BlockSpec((1, Sk, D), lambda b: (b, 0, 0)),
            pl.BlockSpec((1, Sk, D), lambda b: (b, 0, 0)),
            pl.BlockSpec((1, 1, Sk), lambda b: (b, 0, 0)),
            pl.BlockSpec((D, D), lambda b: (0, 0)),
            pl.BlockSpec((1, D), lambda b: (0, 0)),
        ],
        out_specs=pl.BlockSpec((1, Sq, D), lambda b: (b, 0, 0)),
        compiler_params=pltpu.CompilerParams(dimension_semantics=("parallel",)),
        cost_estimate=pl.CostEstimate(
            flops=4 * B * num_heads * Sq * Sk * dk + 2 * B * Sq * D * D,
            transcendentals=B * num_heads * Sq * Sk,
            bytes_accessed=2 * (q.size + k.size + v.size + wo.size)
                           + 2 * B * Sq * D),
    )(q.astype(jnp.bfloat16), k.astype(jnp.bfloat16), v.astype(jnp.bfloat16),
      key_mask, wo.astype(jnp.bfloat16), bo.reshape(1, D).astype(jnp.float32))
    return out


# ------------------------------ model pieces --------------------------------

def _dense(key, din, dout):
    w = jax.random.normal(key, (din, dout), jnp.float32) * 0.02
    return {"w": w, "b": jnp.zeros((dout,), jnp.float32)}


def _ln(d):
    return {"g": jnp.ones((d,), jnp.float32), "b": jnp.zeros((d,), jnp.float32)}


def _mha_params(key, d):
    ks = jax.random.split(key, 4)
    return {"wq": _dense(ks[0], d, d), "wk": _dense(ks[1], d, d),
            "wv": _dense(ks[2], d, d), "wo": _dense(ks[3], d, d)}


def _enc_layer_params(key, d, ffn):
    ks = jax.random.split(key, 3)
    return {"attn": _mha_params(ks[0], d), "ln1": _ln(d),
            "ffn": {"w1": _dense(ks[1], d, ffn), "w2": _dense(ks[2], ffn, d)},
            "ln2": _ln(d)}


def _dec_layer_params(key, d, ffn):
    ks = jax.random.split(key, 4)
    return {"self_attn": _mha_params(ks[0], d), "ln1": _ln(d),
            "cross_attn": _mha_params(ks[1], d), "ln2": _ln(d),
            "ffn": {"w1": _dense(ks[2], d, ffn), "w2": _dense(ks[3], ffn, d)},
            "ln3": _ln(d)}


def _positional_encoding(max_len, d):
    pos = jnp.arange(max_len, dtype=jnp.float32)[:, None]
    i = jnp.arange(0, d, 2, dtype=jnp.float32)[None, :]
    angle = pos / jnp.power(10000.0, i / d)
    pe = jnp.zeros((max_len, d), jnp.float32)
    pe = pe.at[:, 0::2].set(jnp.sin(angle))
    pe = pe.at[:, 1::2].set(jnp.cos(angle))
    return pe


def init_transformer(key, src_vocab, tgt_vocab, d_model, num_layers, num_heads,
                     ffn_hidden, max_len):
    keys = jax.random.split(key, 3 + 2 * num_layers)
    return {
        "enc_emb": jax.random.normal(keys[0], (src_vocab, d_model), jnp.float32) * 0.02,
        "dec_emb": jax.random.normal(keys[1], (tgt_vocab, d_model), jnp.float32) * 0.02,
        "out": _dense(keys[2], d_model, tgt_vocab),
        "pe": _positional_encoding(max_len, d_model),
        "enc_layers": [_enc_layer_params(keys[3 + i], d_model, ffn_hidden)
                       for i in range(num_layers)],
        "dec_layers": [_dec_layer_params(keys[3 + num_layers + i], d_model, ffn_hidden)
                       for i in range(num_layers)],
    }


def multi_head_attention(x_q, x_kv, key_mask, p, num_heads, *, causal, self_attn):
    B, Sq, D = x_q.shape
    Sk = x_kv.shape[1]
    xq2 = x_q.reshape(B * Sq, D)
    if self_attn:
        # Fused QKV projection: one matmul with N = 3*D.
        w = jnp.concatenate([p["wq"]["w"], p["wk"]["w"], p["wv"]["w"]], axis=1)
        bias = jnp.concatenate([p["wq"]["b"], p["wk"]["b"], p["wv"]["b"]])
        qkv = pallas_linear(xq2, w, bias)                       # [B*Sq, 3D]
        q, k, v = qkv[:, :D], qkv[:, D:2 * D], qkv[:, 2 * D:]
    else:
        q = pallas_linear(xq2, p["wq"]["w"], p["wq"]["b"])
        xkv2 = x_kv.reshape(B * Sk, D)
        wkv = jnp.concatenate([p["wk"]["w"], p["wv"]["w"]], axis=1)
        bkv = jnp.concatenate([p["wk"]["b"], p["wv"]["b"]])
        kv = pallas_linear(xkv2, wkv, bkv)                      # [B*Sk, 2D]
        k, v = kv[:, :D], kv[:, D:]
    q = q.reshape(B, Sq, D)
    k = k.reshape(B, Sk, D)
    v = v.reshape(B, Sk, D)
    # Attention + head merge + output projection (wo) all inside one kernel.
    return pallas_attention(q, k, v, key_mask, p["wo"]["w"], p["wo"]["b"],
                            num_heads=num_heads, causal=causal)


def feed_forward(x, p):
    B, S, D = x.shape
    h = pallas_linear(x.reshape(B * S, D), p["w1"]["w"], p["w1"]["b"], relu=True)
    o = pallas_linear(h, p["w2"]["w"], p["w2"]["b"])
    return o.reshape(B, S, D)


def add_layer_norm(y, residual, p):
    B, S, D = y.shape
    return pallas_add_layernorm(y.reshape(B * S, D), residual.reshape(B * S, D),
                                p["g"], p["b"]).reshape(B, S, D)


def encoder_layer(x, src_key_mask, p, H):
    a = multi_head_attention(x, x, src_key_mask, p["attn"], H,
                             causal=False, self_attn=True)
    x = add_layer_norm(a, x, p["ln1"])
    f = feed_forward(x, p["ffn"])
    x = add_layer_norm(f, x, p["ln2"])
    return x


def decoder_layer(x, enc, src_key_mask, tgt_key_mask, p, H):
    a = multi_head_attention(x, x, tgt_key_mask, p["self_attn"], H,
                             causal=True, self_attn=True)
    x = add_layer_norm(a, x, p["ln1"])
    c = multi_head_attention(x, enc, src_key_mask, p["cross_attn"], H,
                             causal=False, self_attn=False)
    x = add_layer_norm(c, x, p["ln2"])
    f = feed_forward(x, p["ffn"])
    x = add_layer_norm(f, x, p["ln3"])
    return x


@partial(jax.jit, static_argnames=("src_pad_idx", "num_heads"))
def transformer_forward(params, src, tgt, *, src_pad_idx, num_heads):
    # TODO(synk): dropout layers run as identity (inference mode).
    B, Ss = src.shape
    _, St = tgt.shape
    # Pad mask over keys only: [B, 1, Ss]; causal mask generated in-kernel.
    src_key_mask = (src != src_pad_idx).astype(jnp.float32)[:, None, :]
    tgt_key_mask = jnp.ones((B, 1, St), jnp.float32)

    x = (params["enc_emb"][src] + params["pe"][:Ss][None]).astype(jnp.bfloat16)
    for lp in params["enc_layers"]:
        x = encoder_layer(x, src_key_mask, lp, num_heads)
    enc = x

    y = (params["dec_emb"][tgt] + params["pe"][:St][None]).astype(jnp.bfloat16)
    for lp in params["dec_layers"]:
        y = decoder_layer(y, enc, src_key_mask, tgt_key_mask, lp, num_heads)

    D = y.shape[-1]
    # Output dim (tgt_vocab) is padded to a lane multiple inside pallas_linear.
    logits = pallas_linear(y.reshape(B * St, D),
                           params["out"]["w"], params["out"]["b"],
                           out_dtype=jnp.float32)
    return logits.reshape(B, St, -1)


# ---------------------------------- main -------------------------------------

if __name__ == "__main__":
    # Small, module-consistent shapes.
    SRC_VOCAB, TGT_VOCAB = 37, 41
    SRC_PAD_IDX, TGT_PAD_IDX = 0, 0
    D_MODEL, NUM_LAYERS, NUM_HEADS, FFN_HID, MAX_LEN = 32, 2, 4, 64, 16
    B, S_SRC, S_TGT = 2, 8, 8

    key = jax.random.PRNGKey(0)
    k_param, k_src, k_tgt = jax.random.split(key, 3)

    params = init_transformer(k_param, SRC_VOCAB, TGT_VOCAB, D_MODEL,
                              NUM_LAYERS, NUM_HEADS, FFN_HID, MAX_LEN)

    src = jax.random.randint(k_src, (B, S_SRC), 0, SRC_VOCAB, dtype=jnp.int32)
    tgt = jax.random.randint(k_tgt, (B, S_TGT), 1, TGT_VOCAB, dtype=jnp.int32)
    # make sure the pad mask is exercised
    src = src.at[:, -2:].set(SRC_PAD_IDX)

    out = transformer_forward(params, src, tgt,
                              src_pad_idx=SRC_PAD_IDX, num_heads=NUM_HEADS)
    out = jax.block_until_ready(out)

    assert out.shape == (B, S_TGT, TGT_VOCAB), out.shape
    assert bool(jnp.all(jnp.isfinite(out)))
    print("KERNEL_OK")
</pallas_src>

<mosaic_0001>
module attributes {stable_mosaic.version = 11 : i64} {
  func.func @_matmul_kernel(%arg0: i32, %arg1: i32, %arg2: i32, %arg3: memref<16x128xbf16, #tpu.memory_space<vmem>>, %arg4: memref<128x128xbf16, #tpu.memory_space<vmem>>, %arg5: memref<1x128xf32, #tpu.memory_space<vmem>>, %arg6: memref<16x128xbf16, #tpu.memory_space<vmem>>, %arg7: memref<16x128xf32, #tpu.memory_space<vmem>>) attributes {dimension_semantics = [#tpu.dimension_semantics<parallel>, #tpu.dimension_semantics<parallel>, #tpu.dimension_semantics<arbitrary>], iteration_bounds = array<i64: 1, 1, 1>, scalar_prefetch = 0 : i64, scratch_operands = 1 : i64, tpu.core_type = #tpu.core_type<tc>, window_params = [{transform_indices = @transform_0, window_bounds = array<i64: 16, 128>}, {transform_indices = @transform_1, window_bounds = array<i64: 128, 128>}, {transform_indices = @transform_2, window_bounds = array<i64: 1, 128>}, {transform_indices = @transform_3, window_bounds = array<i64: 16, 128>}]} {
    %c0_i32 = arith.constant 0 : i32
    %0 = arith.cmpi eq, %arg2, %c0_i32 : i32
    %1 = arith.extui %0 : i1 to i32
    %c0_i32_0 = arith.constant 0 : i32
    %2 = arith.cmpi ne, %1, %c0_i32_0 : i32
    scf.if %2 {
      %cst_10 = arith.constant 0.000000e+00 : f32
      %12 = vector.broadcast %cst_10 : f32 to vector<16x128xf32>
      %c0_11 = arith.constant 0 : index
      %c0_12 = arith.constant 0 : index
      %13 = vector.load %arg7[%c0_11, %c0_12] : memref<16x128xf32, #tpu.memory_space<vmem>>, vector<16x128xf32>
      tpu.vector_store %arg7[%c0_11, %c0_12], %12 {strides = array<i32>} : memref<16x128xf32, #tpu.memory_space<vmem>>, vector<16x128xf32>,
    } else {
    }
    %c0 = arith.constant 0 : index
    %c0_1 = arith.constant 0 : index
    %3 = vector.load %arg7[%c0, %c0_1] : memref<16x128xf32, #tpu.memory_space<vmem>>, vector<16x128xf32>
    %c0_2 = arith.constant 0 : index
    %c0_3 = arith.constant 0 : index
    %4 = vector.load %arg3[%c0_2, %c0_3] : memref<16x128xbf16, #tpu.memory_space<vmem>>, vector<16x128xbf16>
    %c0_4 = arith.constant 0 : index
    %c0_5 = arith.constant 0 : index
    %5 = vector.load %arg4[%c0_4, %c0_5] : memref<128x128xbf16, #tpu.memory_space<vmem>>, vector<128x128xbf16>
    %cst = arith.constant dense<0.000000e+00> : vector<16x128xf32>
    %6 = tpu.matmul %4, %5, %cst {dimension_numbers = #tpu.dot_dimension_numbers<[1], [0], [0], [1], [0, 0, 1, 1], [], []>} : vector<16x128xbf16>, vector<128x128xbf16>, vector<16x128xf32> -> vector<16x128xf32>
    %7 = arith.addf %3, %6 : vector<16x128xf32>
    %c0_6 = arith.constant 0 : index
    %c0_7 = arith.constant 0 : index
    %8 = vector.load %arg7[%c0_6, %c0_7] : memref<16x128xf32, #tpu.memory_space<vmem>>, vector<16x128xf32>
    tpu.vector_store %arg7[%c0_6, %c0_7], %7 {strides = array<i32>} : memref<16x128xf32, #tpu.memory_space<vmem>>, vector<16x128xf32>,
    %c0_i32_8 = arith.constant 0 : i32
    %9 = arith.cmpi eq, %arg2, %c0_i32_8 : i32
    %10 = arith.extui %9 : i1 to i32
    %c0_i32_9 = arith.constant 0 : i32
    %11 = arith.cmpi ne, %10, %c0_i32_9 : i32
    scf.if %11 {
      %c0_10 = arith.constant 0 : index
      %c0_11 = arith.constant 0 : index
      %12 = vector.load %arg7[%c0_10, %c0_11] : memref<16x128xf32, #tpu.memory_space<vmem>>, vector<16x128xf32>
      %c0_12 = arith.constant 0 : index
      %c0_13 = arith.constant 0 : index
      %13 = vector.load %arg5[%c0_12, %c0_13] : memref<1x128xf32, #tpu.memory_space<vmem>>, vector<1x128xf32>
      %14 = vector.broadcast %13 : vector<1x128xf32> to vector<16x128xf32>
      %15 = arith.addf %12, %14 : vector<16x128xf32>
      %16 = arith.truncf %15 : vector<16x128xf32> to vector<16x128xbf16>
      %c0_14 = arith.constant 0 : index
      %c0_15 = arith.constant 0 : index
      %17 = vector.load %arg6[%c0_14, %c0_15] : memref<16x128xbf16, #tpu.memory_space<vmem>>, vector<16x128xbf16>
      tpu.vector_store %arg6[%c0_14, %c0_15], %16 {strides = array<i32>} : memref<16x128xbf16, #tpu.memory_space<vmem>>, vector<16x128xbf16>,
    } else {
    }
    return
  }
  func.func @transform_0(%arg0: i32, %arg1: i32, %arg2: i32) -> (i32, i32) {
    %c0_i32 = arith.constant 0 : i32
    return %arg0, %arg2 : i32, i32
  }
  func.func @transform_1(%arg0: i32, %arg1: i32, %arg2: i32) -> (i32, i32) {
    %c0_i32 = arith.constant 0 : i32
    return %arg2, %arg1 : i32, i32
  }
  func.func @transform_2(%arg0: i32, %arg1: i32, %arg2: i32) -> (i32, i32) {
    %c0_i32 = arith.constant 0 : i32
    %c0_i32_0 = arith.constant 0 : i32
    return %c0_i32, %arg1 : i32, i32
  }
  func.func @transform_3(%arg0: i32, %arg1: i32, %arg2: i32) -> (i32, i32) {
    %c0_i32 = arith.constant 0 : i32
    return %arg0, %arg1 : i32, i32
  }
}

module attributes {stable_mosaic.version = 11 : i64} {
  func.func @_add_ln_kernel(%arg0: i32, %arg1: memref<16x32xbf16, #tpu.memory_space<vmem>>, %arg2: memref<16x32xbf16, #tpu.memory_space<vmem>>, %arg3: memref<1x32xf32, #tpu.memory_space<vmem>>, %arg4: memref<1x32xf32, #tpu.memory_space<vmem>>, %arg5: memref<16x32xbf16, #tpu.memory_space<vmem>>) attributes {dimension_semantics = [#tpu.dimension_semantics<parallel>], iteration_bounds = array<i64: 1>, scalar_prefetch = 0 : i64, scratch_operands = 0 : i64, tpu.core_type = #tpu.core_type<tc>, window_params = [{transform_indices = @transform_0, window_bounds = array<i64: 16, 32>}, {transform_indices = @transform_1, window_bounds = array<i64: 16, 32>}, {pipeline_mode = #tpu.pipeline_mode<synchronous>, transform_indices = @transform_2, window_bounds = array<i64: 1, 32>}, {pipeline_mode = #tpu.pipeline_mode<synchronous>, transform_indices = @transform_3, window_bounds = array<i64: 1, 32>}, {transform_indices = @transform_4, window_bounds = array<i64: 16, 32>}]} {
    %c0 = arith.constant 0 : index
    %c0_0 = arith.constant 0 : index
    %0 = vector.load %arg1[%c0, %c0_0] : memref<16x32xbf16, #tpu.memory_space<vmem>>, vector<16x32xbf16>
    %1 = arith.extf %0 : vector<16x32xbf16> to vector<16x32xf32>
    %c0_1 = arith.constant 0 : index
    %c0_2 = arith.constant 0 : index
    %2 = vector.load %arg2[%c0_1, %c0_2] : memref<16x32xbf16, #tpu.memory_space<vmem>>, vector<16x32xbf16>
    %3 = arith.extf %2 : vector<16x32xbf16> to vector<16x32xf32>
    %4 = arith.addf %1, %3 : vector<16x32xf32>
    %cst = arith.constant dense<0.000000e+00> : vector<16xf32>
    %5 = vector.multi_reduction <add>, %4, %cst [1] : vector<16x32xf32> to vector<16xf32>
    %6 = vector.shape_cast %5 : vector<16xf32> to vector<16x1xf32>
    %cst_3 = arith.constant 3.200000e+01 : f32
    %7 = vector.broadcast %cst_3 : f32 to vector<16x1xf32>
    %8 = arith.divf %6, %7 : vector<16x1xf32>
    %9 = vector.broadcast %8 : vector<16x1xf32> to vector<16x32xf32>
    %10 = arith.subf %4, %9 : vector<16x32xf32>
    %11 = arith.mulf %10, %10 : vector<16x32xf32>
    %cst_4 = arith.constant dense<0.000000e+00> : vector<16xf32>
    %12 = vector.multi_reduction <add>, %11, %cst_4 [1] : vector<16x32xf32> to vector<16xf32>
    %13 = vector.shape_cast %12 : vector<16xf32> to vector<16x1xf32>
    %cst_5 = arith.constant 3.200000e+01 : f32
    %14 = vector.broadcast %cst_5 : f32 to vector<16x1xf32>
    %15 = arith.divf %13, %14 : vector<16x1xf32>
    %16 = vector.broadcast %8 : vector<16x1xf32> to vector<16x32xf32>
    %17 = arith.subf %4, %16 : vector<16x32xf32>
    %cst_6 = arith.constant 9.99999974E-6 : f32
    %18 = vector.broadcast %cst_6 : f32 to vector<16x1xf32>
    %19 = arith.addf %15, %18 : vector<16x1xf32>
    %20 = math.rsqrt %19 : vector<16x1xf32>
    %21 = vector.broadcast %20 : vector<16x1xf32> to vector<16x32xf32>
    %22 = arith.mulf %17, %21 : vector<16x32xf32>
    %c0_7 = arith.constant 0 : index
    %c0_8 = arith.constant 0 : index
    %23 = vector.load %arg3[%c0_7, %c0_8] : memref<1x32xf32, #tpu.memory_space<vmem>>, vector<1x32xf32>
    %24 = vector.broadcast %23 : vector<1x32xf32> to vector<16x32xf32>
    %25 = arith.mulf %22, %24 : vector<16x32xf32>
    %c0_9 = arith.constant 0 : index
    %c0_10 = arith.constant 0 : index
    %26 = vector.load %arg4[%c0_9, %c0_10] : memref<1x32xf32, #tpu.memory_space<vmem>>, vector<1x32xf32>
    %27 = vector.broadcast %26 : vector<1x32xf32> to vector<16x32xf32>
    %28 = arith.addf %25, %27 : vector<16x32xf32>
    %29 = arith.truncf %28 : vector<16x32xf32> to vector<16x32xbf16>
    %c0_11 = arith.constant 0 : index
    %c0_12 = arith.constant 0 : index
    %30 = vector.load %arg5[%c0_11, %c0_12] : memref<16x32xbf16, #tpu.memory_space<vmem>>, vector<16x32xbf16>
    tpu.vector_store %arg5[%c0_11, %c0_12], %29 {strides = array<i32>} : memref<16x32xbf16, #tpu.memory_space<vmem>>, vector<16x32xbf16>,
    return
  }
  func.func @transform_0(%arg0: i32) -> (i32, i32) {
    %c0_i32 = arith.constant 0 : i32
    %c0_i32_0 = arith.constant 0 : i32
    return %arg0, %c0_i32 : i32, i32
  }
  func.func @transform_1(%arg0: i32) -> (i32, i32) {
    %c0_i32 = arith.constant 0 : i32
    %c0_i32_0 = arith.constant 0 : i32
    return %arg0, %c0_i32 : i32, i32
  }
  func.func @transform_2(%arg0: i32) -> (i32, i32) {
    %c0_i32 = arith.constant 0 : i32
    %c0_i32_0 = arith.constant 0 : i32
    %c0_i32_1 = arith.constant 0 : i32
    return %c0_i32, %c0_i32_0 : i32, i32
  }
  func.func @transform_3(%arg0: i32) -> (i32, i32) {
    %c0_i32 = arith.constant 0 : i32
    %c0_i32_0 = arith.constant 0 : i32
    %c0_i32_1 = arith.constant 0 : i32
    return %c0_i32, %c0_i32_0 : i32, i32
  }
  func.func @transform_4(%arg0: i32) -> (i32, i32) {
    %c0_i32 = arith.constant 0 : i32
    %c0_i32_0 = arith.constant 0 : i32
    return %arg0, %c0_i32 : i32, i32
  }
}

module attributes {stable_mosaic.version = 11 : i64} {
  func.func @_mha_kernel(%arg0: i32, %arg1: memref<1x8x32xbf16, #tpu.memory_space<vmem>>, %arg2: memref<1x8x32xbf16, #tpu.memory_space<vmem>>, %arg3: memref<1x8x32xbf16, #tpu.memory_space<vmem>>, %arg4: memref<1x1x8xf32, #tpu.memory_space<vmem>>, %arg5: memref<32x32xbf16, #tpu.memory_space<vmem>>, %arg6: memref<1x32xf32, #tpu.memory_space<vmem>>, %arg7: memref<1x8x32xbf16, #tpu.memory_space<vmem>>) attributes {dimension_semantics = [#tpu.dimension_semantics<parallel>], iteration_bounds = array<i64: 2>, scalar_prefetch = 0 : i64, scratch_operands = 0 : i64, tpu.core_type = #tpu.core_type<tc>, window_params = [{transform_indices = @transform_0, window_bounds = array<i64: 1, 8, 32>}, {transform_indices = @transform_1, window_bounds = array<i64: 1, 8, 32>}, {transform_indices = @transform_2, window_bounds = array<i64: 1, 8, 32>}, {transform_indices = @transform_3, window_bounds = array<i64: 1, 1, 8>}, {pipeline_mode = #tpu.pipeline_mode<synchronous>, transform_indices = @transform_4, window_bounds = array<i64: 32, 32>}, {pipeline_mode = #tpu.pipeline_mode<synchronous>, transform_indices = @transform_5, window_bounds = array<i64: 1, 32>}, {transform_indices = @transform_6, window_bounds = array<i64: 1, 8, 32>}]} {
    %c0 = arith.constant 0 : index
    %c0_0 = arith.constant 0 : index
    %c0_1 = arith.constant 0 : index
    %0 = vector.load %arg1[%c0, %c0_0, %c0_1] : memref<1x8x32xbf16, #tpu.memory_space<vmem>>, vector<1x8x32xbf16>
    %1 = vector.shape_cast %0 : vector<1x8x32xbf16> to vector<8x32xbf16>
    %2 = arith.extf %1 : vector<8x32xbf16> to vector<8x32xf32>
    %cst = arith.constant 0.353553385 : f32
    %3 = vector.broadcast %cst : f32 to vector<8x32xf32>
    %4 = arith.mulf %2, %3 : vector<8x32xf32>
    %c0_2 = arith.constant 0 : index
    %c0_3 = arith.constant 0 : index
    %c0_4 = arith.constant 0 : index
    %5 = vector.load %arg2[%c0_2, %c0_3, %c0_4] : memref<1x8x32xbf16, #tpu.memory_space<vmem>>, vector<1x8x32xbf16>
    %6 = vector.shape_cast %5 : vector<1x8x32xbf16> to vector<8x32xbf16>
    %7 = arith.extf %6 : vector<8x32xbf16> to vector<8x32xf32>
    %c0_5 = arith.constant 0 : index
    %c0_6 = arith.constant 0 : index
    %c0_7 = arith.constant 0 : index
    %8 = vector.load %arg3[%c0_5, %c0_6, %c0_7] : memref<1x8x32xbf16, #tpu.memory_space<vmem>>, vector<1x8x32xbf16>
    %9 = vector.shape_cast %8 : vector<1x8x32xbf16> to vector<8x32xbf16>
    %10 = arith.extf %9 : vector<8x32xbf16> to vector<8x32xf32>
    %c0_8 = arith.constant 0 : index
    %c0_9 = arith.constant 0 : index
    %11 = vector.load %arg5[%c0_8, %c0_9] : memref<32x32xbf16, #tpu.memory_space<vmem>>, vector<32x32xbf16>
    %12 = arith.extf %11 : vector<32x32xbf16> to vector<32x32xf32>
    %c0_10 = arith.constant 0 : index
    %c0_11 = arith.constant 0 : index
    %c0_12 = arith.constant 0 : index
    %13 = vector.load %arg4[%c0_10, %c0_11, %c0_12] : memref<1x1x8xf32, #tpu.memory_space<vmem>>, vector<1x1x8xf32>
    %14 = vector.shape_cast %13 : vector<1x1x8xf32> to vector<1x8xf32>
    %cst_13 = arith.constant 0.000000e+00 : f32
    %15 = vector.broadcast %cst_13 : f32 to vector<1x8xf32>
    %16 = arith.cmpf ogt, %14, %15 : vector<1x8xf32>
    %cst_14 = arith.constant 0.000000e+00 : f32
    %17 = vector.broadcast %cst_14 : f32 to vector<8x32xf32>
    %18 = vector.extract_strided_slice %4 {offsets = [0, 0], sizes = [8, 8], strides = [1, 1]} : vector<8x32xf32> to vector<8x8xf32>
    %19 = vector.extract_strided_slice %7 {offsets = [0, 0], sizes = [8, 8], strides = [1, 1]} : vector<8x32xf32> to vector<8x8xf32>
    %20 = vector.extract_strided_slice %10 {offsets = [0, 0], sizes = [8, 8], strides = [1, 1]} : vector<8x32xf32> to vector<8x8xf32>
    %cst_15 = arith.constant dense<0.000000e+00> : vector<8x8xf32>
    %21 = tpu.matmul %18, %19, %cst_15 {dimension_numbers = #tpu.dot_dimension_numbers<[1], [1], [0], [0], [0, 0, 1, 0], [], []>} : vector<8x8xf32>, vector<8x8xf32>, vector<8x8xf32> -> vector<8x8xf32>
    %cst_16 = arith.constant -1.000000e+09 : f32
    %22 = vector.shape_cast %16 : vector<1x8xi1> to vector<1x8xi1>
    %23 = vector.broadcast %22 : vector<1x8xi1> to vector<8x8xi1>
    %24 = vector.broadcast %cst_16 : f32 to vector<8x8xf32>
    %25 = arith.select %23, %21, %24 : vector<8x8xi1>, vector<8x8xf32>
    %cst_17 = arith.constant dense<0xFF800000> : vector<8xf32>
    %26 = vector.multi_reduction <maximumf>, %25, %cst_17 [1] : vector<8x8xf32> to vector<8xf32>
    %27 = vector.shape_cast %26 : vector<8xf32> to vector<8x1xf32>
    %28 = vector.broadcast %27 : vector<8x1xf32> to vector<8x8xf32>
    %29 = arith.subf %25, %28 : vector<8x8xf32>
    %30 = math.exp %29 : vector<8x8xf32>
    %cst_18 = arith.constant dense<0.000000e+00> : vector<8xf32>
    %31 = vector.multi_reduction <add>, %30, %cst_18 [1] : vector<8x8xf32> to vector<8xf32>
    %32 = vector.shape_cast %31 : vector<8xf32> to vector<8x1xf32>
    %33 = tpu.reciprocal %32 {approx = true} : vector<8x1xf32> -> vector<8x1xf32>
    %34 = vector.broadcast %33 : vector<8x1xf32> to vector<8x8xf32>
    %35 = arith.mulf %30, %34 : vector<8x8xf32>
    %cst_19 = arith.constant dense<0.000000e+00> : vector<8x8xf32>
    %36 = tpu.matmul %35, %20, %cst_19 {dimension_numbers = #tpu.dot_dimension_numbers<[1], [0], [0], [1], [0, 0, 1, 1], [], []>} : vector<8x8xf32>, vector<8x8xf32>, vector<8x8xf32> -> vector<8x8xf32>
    %37 = vector.extract_strided_slice %12 {offsets = [0, 0], sizes = [8, 32], strides = [1, 1]} : vector<32x32xf32> to vector<8x32xf32>
    %cst_20 = arith.constant dense<0.000000e+00> : vector<8x32xf32>
    %38 = tpu.matmul %36, %37, %cst_20 {dimension_numbers = #tpu.dot_dimension_numbers<[1], [0], [0], [1], [0, 0, 1, 1], [], []>} : vector<8x8xf32>, vector<8x32xf32>, vector<8x32xf32> -> vector<8x32xf32>
    %39 = arith.addf %17, %38 : vector<8x32xf32>
    %40 = vector.extract_strided_slice %4 {offsets = [0, 8], sizes = [8, 8], strides = [1, 1]} : vector<8x32xf32> to vector<8x8xf32>
    %41 = vector.extract_strided_slice %7 {offsets = [0, 8], sizes = [8, 8], strides = [1, 1]} : vector<8x32xf32> to vector<8x8xf32>
    %42 = vector.extract_strided_slice %10 {offsets = [0, 8], sizes = [8, 8], strides = [1, 1]} : vector<8x32xf32> to vector<8x8xf32>
    %cst_21 = arith.constant dense<0.000000e+00> : vector<8x8xf32>
    %43 = tpu.matmul %40, %41, %cst_21 {dimension_numbers = #tpu.dot_dimension_numbers<[1], [1], [0], [0], [0, 0, 1, 0], [], []>} : vector<8x8xf32>, vector<8x8xf32>, vector<8x8xf32> -> vector<8x8xf32>
    %cst_22 = arith.constant -1.000000e+09 : f32
    %44 = vector.shape_cast %16 : vector<1x8xi1> to vector<1x8xi1>
    %45 = vector.broadcast %44 : vector<1x8xi1> to vector<8x8xi1>
    %46 = vector.broadcast %cst_22 : f32 to vector<8x8xf32>
    %47 = arith.select %45, %43, %46 : vector<8x8xi1>, vector<8x8xf32>
    %cst_23 = arith.constant dense<0xFF800000> : vector<8xf32>
    %48 = vector.multi_reduction <maximumf>, %47, %cst_23 [1] : vector<8x8xf32> to vector<8xf32>
    %49 = vector.shape_cast %48 : vector<8xf32> to vector<8x1xf32>
    %50 = vector.broadcast %49 : vector<8x1xf32> to vector<8x8xf32>
    %51 = arith.subf %47, %50 : vector<8x8xf32>
    %52 = math.exp %51 : vector<8x8xf32>
    %cst_24 = arith.constant dense<0.000000e+00> : vector<8xf32>
    %53 = vector.multi_reduction <add>, %52, %cst_24 [1] : vector<8x8xf32> to vector<8xf32>
    %54 = vector.shape_cast %53 : vector<8xf32> to vector<8x1xf32>
    %55 = tpu.reciprocal %54 {approx = true} : vector<8x1xf32> -> vector<8x1xf32>
    %56 = vector.broadcast %55 : vector<8x1xf32> to vector<8x8xf32>
    %57 = arith.mulf %52, %56 : vector<8x8xf32>
    %cst_25 = arith.constant dense<0.000000e+00> : vector<8x8xf32>
    %58 = tpu.matmul %57, %42, %cst_25 {dimension_numbers = #tpu.dot_dimension_numbers<[1], [0], [0], [1], [0, 0, 1, 1], [], []>} : vector<8x8xf32>, vector<8x8xf32>, vector<8x8xf32> -> vector<8x8xf32>
    %59 = vector.extract_strided_slice %12 {offsets = [8, 0], sizes = [8, 32], strides = [1, 1]} : vector<32x32xf32> to vector<8x32xf32>
    %cst_26 = arith.constant dense<0.000000e+00> : vector<8x32xf32>
    %60 = tpu.matmul %58, %59, %cst_26 {dimension_numbers = #tpu.dot_dimension_numbers<[1], [0], [0], [1], [0, 0, 1, 1], [], []>} : vector<8x8xf32>, vector<8x32xf32>, vector<8x32xf32> -> vector<8x32xf32>
    %61 = arith.addf %39, %60 : vector<8x32xf32>
    %62 = vector.extract_strided_slice %4 {offsets = [0, 16], sizes = [8, 8], strides = [1, 1]} : vector<8x32xf32> to vector<8x8xf32>
    %63 = vector.extract_strided_slice %7 {offsets = [0, 16], sizes = [8, 8], strides = [1, 1]} : vector<8x32xf32> to vector<8x8xf32>
    %64 = vector.extract_strided_slice %10 {offsets = [0, 16], sizes = [8, 8], strides = [1, 1]} : vector<8x32xf32> to vector<8x8xf32>
    %cst_27 = arith.constant dense<0.000000e+00> : vector<8x8xf32>
    %65 = tpu.matmul %62, %63, %cst_27 {dimension_numbers = #tpu.dot_dimension_numbers<[1], [1], [0], [0], [0, 0, 1, 0], [], []>} : vector<8x8xf32>, vector<8x8xf32>, vector<8x8xf32> -> vector<8x8xf32>
    %cst_28 = arith.constant -1.000000e+09 : f32
    %66 = vector.shape_cast %16 : vector<1x8xi1> to vector<1x8xi1>
    %67 = vector.broadcast %66 : vector<1x8xi1> to vector<8x8xi1>
    %68 = vector.broadcast %cst_28 : f32 to vector<8x8xf32>
    %69 = arith.select %67, %65, %68 : vector<8x8xi1>, vector<8x8xf32>
    %cst_29 = arith.constant dense<0xFF800000> : vector<8xf32>
    %70 = vector.multi_reduction <maximumf>, %69, %cst_29 [1] : vector<8x8xf32> to vector<8xf32>
    %71 = vector.shape_cast %70 : vector<8xf32> to vector<8x1xf32>
    %72 = vector.broadcast %71 : vector<8x1xf32> to vector<8x8xf32>
    %73 = arith.subf %69, %72 : vector<8x8xf32>
    %74 = math.exp %73 : vector<8x8xf32>
    %cst_30 = arith.constant dense<0.000000e+00> : vector<8xf32>
    %75 = vector.multi_reduction <add>, %74, %cst_30 [1] : vector<8x8xf32> to vector<8xf32>
    %76 = vector.shape_cast %75 : vector<8xf32> to vector<8x1xf32>
    %77 = tpu.reciprocal %76 {approx = true} : vector<8x1xf32> -> vector<8x1xf32>
    %78 = vector.broadcast %77 : vector<8x1xf32> to vector<8x8xf32>
    %79 = arith.mulf %74, %78 : vector<8x8xf32>
    %cst_31 = arith.constant dense<0.000000e+00> : vector<8x8xf32>
    %80 = tpu.matmul %79, %64, %cst_31 {dimension_numbers = #tpu.dot_dimension_numbers<[1], [0], [0], [1], [0, 0, 1, 1], [], []>} : vector<8x8xf32>, vector<8x8xf32>, vector<8x8xf32> -> vector<8x8xf32>
    %81 = vector.extract_strided_slice %12 {offsets = [16, 0], sizes = [8, 32], strides = [1, 1]} : vector<32x32xf32> to vector<8x32xf32>
    %cst_32 = arith.constant dense<0.000000e+00> : vector<8x32xf32>
    %82 = tpu.matmul %80, %81, %cst_32 {dimension_numbers = #tpu.dot_dimension_numbers<[1], [0], [0], [1], [0, 0, 1, 1], [], []>} : vector<8x8xf32>, vector<8x32xf32>, vector<8x32xf32> -> vector<8x32xf32>
    %83 = arith.addf %61, %82 : vector<8x32xf32>
    %84 = vector.extract_strided_slice %4 {offsets = [0, 24], sizes = [8, 8], strides = [1, 1]} : vector<8x32xf32> to vector<8x8xf32>
    %85 = vector.extract_strided_slice %7 {offsets = [0, 24], sizes = [8, 8], strides = [1, 1]} : vector<8x32xf32> to vector<8x8xf32>
    %86 = vector.extract_strided_slice %10 {offsets = [0, 24], sizes = [8, 8], strides = [1, 1]} : vector<8x32xf32> to vector<8x8xf32>
    %cst_33 = arith.constant dense<0.000000e+00> : vector<8x8xf32>
    %87 = tpu.matmul %84, %85, %cst_33 {dimension_numbers = #tpu.dot_dimension_numbers<[1], [1], [0], [0], [0, 0, 1, 0], [], []>} : vector<8x8xf32>, vector<8x8xf32>, vector<8x8xf32> -> vector<8x8xf32>
    %cst_34 = arith.constant -1.000000e+09 : f32
    %88 = vector.shape_cast %16 : vector<1x8xi1> to vector<1x8xi1>
    %89 = vector.broadcast %88 : vector<1x8xi1> to vector<8x8xi1>
    %90 = vector.broadcast %cst_34 : f32 to vector<8x8xf32>
    %91 = arith.select %89, %87, %90 : vector<8x8xi1>, vector<8x8xf32>
    %cst_35 = arith.constant dense<0xFF800000> : vector<8xf32>
    %92 = vector.multi_reduction <maximumf>, %91, %cst_35 [1] : vector<8x8xf32> to vector<8xf32>
    %93 = vector.shape_cast %92 : vector<8xf32> to vector<8x1xf32>
    %94 = vector.broadcast %93 : vector<8x1xf32> to vector<8x8xf32>
    %95 = arith.subf %91, %94 : vector<8x8xf32>
    %96 = math.exp %95 : vector<8x8xf32>
    %cst_36 = arith.constant dense<0.000000e+00> : vector<8xf32>
    %97 = vector.multi_reduction <add>, %96, %cst_36 [1] : vector<8x8xf32> to vector<8xf32>
    %98 = vector.shape_cast %97 : vector<8xf32> to vector<8x1xf32>
    %99 = tpu.reciprocal %98 {approx = true} : vector<8x1xf32> -> vector<8x1xf32>
    %100 = vector.broadcast %99 : vector<8x1xf32> to vector<8x8xf32>
    %101 = arith.mulf %96, %100 : vector<8x8xf32>
    %cst_37 = arith.constant dense<0.000000e+00> : vector<8x8xf32>
    %102 = tpu.matmul %101, %86, %cst_37 {dimension_numbers = #tpu.dot_dimension_numbers<[1], [0], [0], [1], [0, 0, 1, 1], [], []>} : vector<8x8xf32>, vector<8x8xf32>, vector<8x8xf32> -> vector<8x8xf32>
    %103 = vector.extract_strided_slice %12 {offsets = [24, 0], sizes = [8, 32], strides = [1, 1]} : vector<32x32xf32> to vector<8x32xf32>
    %cst_38 = arith.constant dense<0.000000e+00> : vector<8x32xf32>
    %104 = tpu.matmul %102, %103, %cst_38 {dimension_numbers = #tpu.dot_dimension_numbers<[1], [0], [0], [1], [0, 0, 1, 1], [], []>} : vector<8x8xf32>, vector<8x32xf32>, vector<8x32xf32> -> vector<8x32xf32>
    %105 = arith.addf %83, %104 : vector<8x32xf32>
    %c0_39 = arith.constant 0 : index
    %c0_40 = arith.constant 0 : index
    %106 = vector.load %arg6[%c0_39, %c0_40] : memref<1x32xf32, #tpu.memory_space<vmem>>, vector<1x32xf32>
    %107 = vector.broadcast %106 : vector<1x32xf32> to vector<8x32xf32>
    %108 = arith.addf %105, %107 : vector<8x32xf32>
    %109 = arith.truncf %108 : vector<8x32xf32> to vector<8x32xbf16>
    %c0_41 = arith.constant 0 : index
    %c0_42 = arith.constant 0 : index
    %c0_43 = arith.constant 0 : index
    %110 = vector.load %arg7[%c0_41, %c0_42, %c0_43] : memref<1x8x32xbf16, #tpu.memory_space<vmem>>, vector<1x8x32xbf16>
    %111 = vector.shape_cast %110 : vector<1x8x32xbf16> to vector<8x32xbf16>
    %112 = vector.shape_cast %109 : vector<8x32xbf16> to vector<1x8x32xbf16>
    tpu.vector_store %arg7[%c0_41, %c0_42, %c0_43], %112 {strides = array<i32>} : memref<1x8x32xbf16, #tpu.memory_space<vmem>>, vector<1x8x32xbf16>,
    return
  }
  func.func @transform_0(%arg0: i32) -> (i32, i32, i32) {
    %c0_i32 = arith.constant 0 : i32
    %c0_i32_0 = arith.constant 0 : i32
    %c0_i32_1 = arith.constant 0 : i32
    return %arg0, %c0_i32, %c0_i32_0 : i32, i32, i32
  }
  func.func @transform_1(%arg0: i32) -> (i32, i32, i32) {
    %c0_i32 = arith.constant 0 : i32
    %c0_i32_0 = arith.constant 0 : i32
    %c0_i32_1 = arith.constant 0 : i32
    return %arg0, %c0_i32, %c0_i32_0 : i32, i32, i32
  }
  func.func @transform_2(%arg0: i32) -> (i32, i32, i32) {
    %c0_i32 = arith.constant 0 : i32
    %c0_i32_0 = arith.constant 0 : i32
    %c0_i32_1 = arith.constant 0 : i32
    return %arg0, %c0_i32, %c0_i32_0 : i32, i32, i32
  }
  func.func @transform_3(%arg0: i32) -> (i32, i32, i32) {
    %c0_i32 = arith.constant 0 : i32
    %c0_i32_0 = arith.constant 0 : i32
    %c0_i32_1 = arith.constant 0 : i32
    return %arg0, %c0_i32, %c0_i32_0 : i32, i32, i32
  }
  func.func @transform_4(%arg0: i32) -> (i32, i32) {
    %c0_i32 = arith.constant 0 : i32
    %c0_i32_0 = arith.constant 0 : i32
    %c0_i32_1 = arith.constant 0 : i32
    return %c0_i32, %c0_i32_0 : i32, i32
  }
  func.func @transform_5(%arg0: i32) -> (i32, i32) {
    %c0_i32 = arith.constant 0 : i32
    %c0_i32_0 = arith.constant 0 : i32
    %c0_i32_1 = arith.constant 0 : i32
    return %c0_i32, %c0_i32_0 : i32, i32
  }
  func.func @transform_6(%arg0: i32) -> (i32, i32, i32) {
    %c0_i32 = arith.constant 0 : i32
    %c0_i32_0 = arith.constant 0 : i32
    %c0_i32_1 = arith.constant 0 : i32
    return %arg0, %c0_i32, %c0_i32_0 : i32, i32, i32
  }
}

module attributes {stable_mosaic.version = 11 : i64} {
  func.func @_matmul_kernel(%arg0: i32, %arg1: i32, %arg2: i32, %arg3: memref<16x128xbf16, #tpu.memory_space<vmem>>, %arg4: memref<128x128xbf16, #tpu.memory_space<vmem>>, %arg5: memref<1x128xf32, #tpu.memory_space<vmem>>, %arg6: memref<16x128xbf16, #tpu.memory_space<vmem>>, %arg7: memref<16x128xf32, #tpu.memory_space<vmem>>) attributes {dimension_semantics = [#tpu.dimension_semantics<parallel>, #tpu.dimension_semantics<parallel>, #tpu.dimension_semantics<arbitrary>], iteration_bounds = array<i64: 1, 1, 1>, scalar_prefetch = 0 : i64, scratch_operands = 1 : i64, tpu.core_type = #tpu.core_type<tc>, window_params = [{transform_indices = @transform_0, window_bounds = array<i64: 16, 128>}, {transform_indices = @transform_1, window_bounds = array<i64: 128, 128>}, {transform_indices = @transform_2, window_bounds = array<i64: 1, 128>}, {transform_indices = @transform_3, window_bounds = array<i64: 16, 128>}]} {
    %c0_i32 = arith.constant 0 : i32
    %0 = arith.cmpi eq, %arg2, %c0_i32 : i32
    %1 = arith.extui %0 : i1 to i32
    %c0_i32_0 = arith.constant 0 : i32
    %2 = arith.cmpi ne, %1, %c0_i32_0 : i32
    scf.if %2 {
      %cst_10 = arith.constant 0.000000e+00 : f32
      %12 = vector.broadcast %cst_10 : f32 to vector<16x128xf32>
      %c0_11 = arith.constant 0 : index
      %c0_12 = arith.constant 0 : index
      %13 = vector.load %arg7[%c0_11, %c0_12] : memref<16x128xf32, #tpu.memory_space<vmem>>, vector<16x128xf32>
      tpu.vector_store %arg7[%c0_11, %c0_12], %12 {strides = array<i32>} : memref<16x128xf32, #tpu.memory_space<vmem>>, vector<16x128xf32>,
    } else {
    }
    %c0 = arith.constant 0 : index
    %c0_1 = arith.constant 0 : index
    %3 = vector.load %arg7[%c0, %c0_1] : memref<16x128xf32, #tpu.memory_space<vmem>>, vector<16x128xf32>
    %c0_2 = arith.constant 0 : index
    %c0_3 = arith.constant 0 : index
    %4 = vector.load %arg3[%c0_2, %c0_3] : memref<16x128xbf16, #tpu.memory_space<vmem>>, vector<16x128xbf16>
    %c0_4 = arith.constant 0 : index
    %c0_5 = arith.constant 0 : index
    %5 = vector.load %arg4[%c0_4, %c0_5] : memref<128x128xbf16, #tpu.memory_space<vmem>>, vector<128x128xbf16>
    %cst = arith.constant dense<0.000000e+00> : vector<16x128xf32>
    %6 = tpu.matmul %4, %5, %cst {dimension_numbers = #tpu.dot_dimension_numbers<[1], [0], [0], [1], [0, 0, 1, 1], [], []>} : vector<16x128xbf16>, vector<128x128xbf16>, vector<16x128xf32> -> vector<16x128xf32>
    %7 = arith.addf %3, %6 : vector<16x128xf32>
    %c0_6 = arith.constant 0 : index
    %c0_7 = arith.constant 0 : index
    %8 = vector.load %arg7[%c0_6, %c0_7] : memref<16x128xf32, #tpu.memory_space<vmem>>, vector<16x128xf32>
    tpu.vector_store %arg7[%c0_6, %c0_7], %7 {strides = array<i32>} : memref<16x128xf32, #tpu.memory_space<vmem>>, vector<16x128xf32>,
    %c0_i32_8 = arith.constant 0 : i32
    %9 = arith.cmpi eq, %arg2, %c0_i32_8 : i32
    %10 = arith.extui %9 : i1 to i32
    %c0_i32_9 = arith.constant 0 : i32
    %11 = arith.cmpi ne, %10, %c0_i32_9 : i32
    scf.if %11 {
      %c0_10 = arith.constant 0 : index
      %c0_11 = arith.constant 0 : index
      %12 = vector.load %arg7[%c0_10, %c0_11] : memref<16x128xf32, #tpu.memory_space<vmem>>, vector<16x128xf32>
      %c0_12 = arith.constant 0 : index
      %c0_13 = arith.constant 0 : index
      %13 = vector.load %arg5[%c0_12, %c0_13] : memref<1x128xf32, #tpu.memory_space<vmem>>, vector<1x128xf32>
      %14 = vector.broadcast %13 : vector<1x128xf32> to vector<16x128xf32>
      %15 = arith.addf %12, %14 : vector<16x128xf32>
      %cst_14 = arith.constant 0.000000e+00 : f32
      %16 = vector.broadcast %cst_14 : f32 to vector<16x128xf32>
      %17 = arith.maximumf %15, %16 : vector<16x128xf32>
      %18 = arith.truncf %17 : vector<16x128xf32> to vector<16x128xbf16>
      %c0_15 = arith.constant 0 : index
      %c0_16 = arith.constant 0 : index
      %19 = vector.load %arg6[%c0_15, %c0_16] : memref<16x128xbf16, #tpu.memory_space<vmem>>, vector<16x128xbf16>
      tpu.vector_store %arg6[%c0_15, %c0_16], %18 {strides = array<i32>} : memref<16x128xbf16, #tpu.memory_space<vmem>>, vector<16x128xbf16>,
    } else {
    }
    return
  }
  func.func @transform_0(%arg0: i32, %arg1: i32, %arg2: i32) -> (i32, i32) {
    %c0_i32 = arith.constant 0 : i32
    return %arg0, %arg2 : i32, i32
  }
  func.func @transform_1(%arg0: i32, %arg1: i32, %arg2: i32) -> (i32, i32) {
    %c0_i32 = arith.constant 0 : i32
    return %arg2, %arg1 : i32, i32
  }
  func.func @transform_2(%arg0: i32, %arg1: i32, %arg2: i32) -> (i32, i32) {
    %c0_i32 = arith.constant 0 : i32
    %c0_i32_0 = arith.constant 0 : i32
    return %c0_i32, %arg1 : i32, i32
  }
  func.func @transform_3(%arg0: i32, %arg1: i32, %arg2: i32) -> (i32, i32) {
    %c0_i32 = arith.constant 0 : i32
    return %arg0, %arg1 : i32, i32
  }
}

module attributes {stable_mosaic.version = 11 : i64} {
  func.func @_mha_kernel(%arg0: i32, %arg1: memref<1x8x32xbf16, #tpu.memory_space<vmem>>, %arg2: memref<1x8x32xbf16, #tpu.memory_space<vmem>>, %arg3: memref<1x8x32xbf16, #tpu.memory_space<vmem>>, %arg4: memref<1x1x8xf32, #tpu.memory_space<vmem>>, %arg5: memref<32x32xbf16, #tpu.memory_space<vmem>>, %arg6: memref<1x32xf32, #tpu.memory_space<vmem>>, %arg7: memref<1x8x32xbf16, #tpu.memory_space<vmem>>) attributes {dimension_semantics = [#tpu.dimension_semantics<parallel>], iteration_bounds = array<i64: 2>, scalar_prefetch = 0 : i64, scratch_operands = 0 : i64, tpu.core_type = #tpu.core_type<tc>, window_params = [{transform_indices = @transform_0, window_bounds = array<i64: 1, 8, 32>}, {transform_indices = @transform_1, window_bounds = array<i64: 1, 8, 32>}, {transform_indices = @transform_2, window_bounds = array<i64: 1, 8, 32>}, {transform_indices = @transform_3, window_bounds = array<i64: 1, 1, 8>}, {pipeline_mode = #tpu.pipeline_mode<synchronous>, transform_indices = @transform_4, window_bounds = array<i64: 32, 32>}, {pipeline_mode = #tpu.pipeline_mode<synchronous>, transform_indices = @transform_5, window_bounds = array<i64: 1, 32>}, {transform_indices = @transform_6, window_bounds = array<i64: 1, 8, 32>}]} {
    %c0 = arith.constant 0 : index
    %c0_0 = arith.constant 0 : index
    %c0_1 = arith.constant 0 : index
    %0 = vector.load %arg1[%c0, %c0_0, %c0_1] : memref<1x8x32xbf16, #tpu.memory_space<vmem>>, vector<1x8x32xbf16>
    %1 = vector.shape_cast %0 : vector<1x8x32xbf16> to vector<8x32xbf16>
    %2 = arith.extf %1 : vector<8x32xbf16> to vector<8x32xf32>
    %cst = arith.constant 0.353553385 : f32
    %3 = vector.broadcast %cst : f32 to vector<8x32xf32>
    %4 = arith.mulf %2, %3 : vector<8x32xf32>
    %c0_2 = arith.constant 0 : index
    %c0_3 = arith.constant 0 : index
    %c0_4 = arith.constant 0 : index
    %5 = vector.load %arg2[%c0_2, %c0_3, %c0_4] : memref<1x8x32xbf16, #tpu.memory_space<vmem>>, vector<1x8x32xbf16>
    %6 = vector.shape_cast %5 : vector<1x8x32xbf16> to vector<8x32xbf16>
    %7 = arith.extf %6 : vector<8x32xbf16> to vector<8x32xf32>
    %c0_5 = arith.constant 0 : index
    %c0_6 = arith.constant 0 : index
    %c0_7 = arith.constant 0 : index
    %8 = vector.load %arg3[%c0_5, %c0_6, %c0_7] : memref<1x8x32xbf16, #tpu.memory_space<vmem>>, vector<1x8x32xbf16>
    %9 = vector.shape_cast %8 : vector<1x8x32xbf16> to vector<8x32xbf16>
    %10 = arith.extf %9 : vector<8x32xbf16> to vector<8x32xf32>
    %c0_8 = arith.constant 0 : index
    %c0_9 = arith.constant 0 : index
    %11 = vector.load %arg5[%c0_8, %c0_9] : memref<32x32xbf16, #tpu.memory_space<vmem>>, vector<32x32xbf16>
    %12 = arith.extf %11 : vector<32x32xbf16> to vector<32x32xf32>
    %c0_10 = arith.constant 0 : index
    %c0_11 = arith.constant 0 : index
    %c0_12 = arith.constant 0 : index
    %13 = vector.load %arg4[%c0_10, %c0_11, %c0_12] : memref<1x1x8xf32, #tpu.memory_space<vmem>>, vector<1x1x8xf32>
    %14 = vector.shape_cast %13 : vector<1x1x8xf32> to vector<1x8xf32>
    %cst_13 = arith.constant 0.000000e+00 : f32
    %15 = vector.broadcast %cst_13 : f32 to vector<1x8xf32>
    %16 = arith.cmpf ogt, %14, %15 : vector<1x8xf32>
    %17 = tpu.iota {dimensions = array<i32: 0>} : vector<8x8xi32>
    %18 = tpu.iota {dimensions = array<i32: 1>} : vector<8x8xi32>
    %19 = arith.cmpi sle, %18, %17 : vector<8x8xi32>
    %20 = vector.broadcast %16 : vector<1x8xi1> to vector<8x8xi1>
    %21 = arith.andi %20, %19 : vector<8x8xi1>
    %cst_14 = arith.constant 0.000000e+00 : f32
    %22 = vector.broadcast %cst_14 : f32 to vector<8x32xf32>
    %23 = vector.extract_strided_slice %4 {offsets = [0, 0], sizes = [8, 8], strides = [1, 1]} : vector<8x32xf32> to vector<8x8xf32>
    %24 = vector.extract_strided_slice %7 {offsets = [0, 0], sizes = [8, 8], strides = [1, 1]} : vector<8x32xf32> to vector<8x8xf32>
    %25 = vector.extract_strided_slice %10 {offsets = [0, 0], sizes = [8, 8], strides = [1, 1]} : vector<8x32xf32> to vector<8x8xf32>
    %cst_15 = arith.constant dense<0.000000e+00> : vector<8x8xf32>
    %26 = tpu.matmul %23, %24, %cst_15 {dimension_numbers = #tpu.dot_dimension_numbers<[1], [1], [0], [0], [0, 0, 1, 0], [], []>} : vector<8x8xf32>, vector<8x8xf32>, vector<8x8xf32> -> vector<8x8xf32>
    %cst_16 = arith.constant -1.000000e+09 : f32
    %27 = vector.broadcast %cst_16 : f32 to vector<8x8xf32>
    %28 = arith.select %21, %26, %27 : vector<8x8xi1>, vector<8x8xf32>
    %cst_17 = arith.constant dense<0xFF800000> : vector<8xf32>
    %29 = vector.multi_reduction <maximumf>, %28, %cst_17 [1] : vector<8x8xf32> to vector<8xf32>
    %30 = vector.shape_cast %29 : vector<8xf32> to vector<8x1xf32>
    %31 = vector.broadcast %30 : vector<8x1xf32> to vector<8x8xf32>
    %32 = arith.subf %28, %31 : vector<8x8xf32>
    %33 = math.exp %32 : vector<8x8xf32>
    %cst_18 = arith.constant dense<0.000000e+00> : vector<8xf32>
    %34 = vector.multi_reduction <add>, %33, %cst_18 [1] : vector<8x8xf32> to vector<8xf32>
    %35 = vector.shape_cast %34 : vector<8xf32> to vector<8x1xf32>
    %36 = tpu.reciprocal %35 {approx = true} : vector<8x1xf32> -> vector<8x1xf32>
    %37 = vector.broadcast %36 : vector<8x1xf32> to vector<8x8xf32>
    %38 = arith.mulf %33, %37 : vector<8x8xf32>
    %cst_19 = arith.constant dense<0.000000e+00> : vector<8x8xf32>
    %39 = tpu.matmul %38, %25, %cst_19 {dimension_numbers = #tpu.dot_dimension_numbers<[1], [0], [0], [1], [0, 0, 1, 1], [], []>} : vector<8x8xf32>, vector<8x8xf32>, vector<8x8xf32> -> vector<8x8xf32>
    %40 = vector.extract_strided_slice %12 {offsets = [0, 0], sizes = [8, 32], strides = [1, 1]} : vector<32x32xf32> to vector<8x32xf32>
    %cst_20 = arith.constant dense<0.000000e+00> : vector<8x32xf32>
    %41 = tpu.matmul %39, %40, %cst_20 {dimension_numbers = #tpu.dot_dimension_numbers<[1], [0], [0], [1], [0, 0, 1, 1], [], []>} : vector<8x8xf32>, vector<8x32xf32>, vector<8x32xf32> -> vector<8x32xf32>
    %42 = arith.addf %22, %41 : vector<8x32xf32>
    %43 = vector.extract_strided_slice %4 {offsets = [0, 8], sizes = [8, 8], strides = [1, 1]} : vector<8x32xf32> to vector<8x8xf32>
    %44 = vector.extract_strided_slice %7 {offsets = [0, 8], sizes = [8, 8], strides = [1, 1]} : vector<8x32xf32> to vector<8x8xf32>
    %45 = vector.extract_strided_slice %10 {offsets = [0, 8], sizes = [8, 8], strides = [1, 1]} : vector<8x32xf32> to vector<8x8xf32>
    %cst_21 = arith.constant dense<0.000000e+00> : vector<8x8xf32>
    %46 = tpu.matmul %43, %44, %cst_21 {dimension_numbers = #tpu.dot_dimension_numbers<[1], [1], [0], [0], [0, 0, 1, 0], [], []>} : vector<8x8xf32>, vector<8x8xf32>, vector<8x8xf32> -> vector<8x8xf32>
    %cst_22 = arith.constant -1.000000e+09 : f32
    %47 = vector.broadcast %cst_22 : f32 to vector<8x8xf32>
    %48 = arith.select %21, %46, %47 : vector<8x8xi1>, vector<8x8xf32>
    %cst_23 = arith.constant dense<0xFF800000> : vector<8xf32>
    %49 = vector.multi_reduction <maximumf>, %48, %cst_23 [1] : vector<8x8xf32> to vector<8xf32>
    %50 = vector.shape_cast %49 : vector<8xf32> to vector<8x1xf32>
    %51 = vector.broadcast %50 : vector<8x1xf32> to vector<8x8xf32>
    %52 = arith.subf %48, %51 : vector<8x8xf32>
    %53 = math.exp %52 : vector<8x8xf32>
    %cst_24 = arith.constant dense<0.000000e+00> : vector<8xf32>
    %54 = vector.multi_reduction <add>, %53, %cst_24 [1] : vector<8x8xf32> to vector<8xf32>
    %55 = vector.shape_cast %54 : vector<8xf32> to vector<8x1xf32>
    %56 = tpu.reciprocal %55 {approx = true} : vector<8x1xf32> -> vector<8x1xf32>
    %57 = vector.broadcast %56 : vector<8x1xf32> to vector<8x8xf32>
    %58 = arith.mulf %53, %57 : vector<8x8xf32>
    %cst_25 = arith.constant dense<0.000000e+00> : vector<8x8xf32>
    %59 = tpu.matmul %58, %45, %cst_25 {dimension_numbers = #tpu.dot_dimension_numbers<[1], [0], [0], [1], [0, 0, 1, 1], [], []>} : vector<8x8xf32>, vector<8x8xf32>, vector<8x8xf32> -> vector<8x8xf32>
    %60 = vector.extract_strided_slice %12 {offsets = [8, 0], sizes = [8, 32], strides = [1, 1]} : vector<32x32xf32> to vector<8x32xf32>
    %cst_26 = arith.constant dense<0.000000e+00> : vector<8x32xf32>
    %61 = tpu.matmul %59, %60, %cst_26 {dimension_numbers = #tpu.dot_dimension_numbers<[1], [0], [0], [1], [0, 0, 1, 1], [], []>} : vector<8x8xf32>, vector<8x32xf32>, vector<8x32xf32> -> vector<8x32xf32>
    %62 = arith.addf %42, %61 : vector<8x32xf32>
    %63 = vector.extract_strided_slice %4 {offsets = [0, 16], sizes = [8, 8], strides = [1, 1]} : vector<8x32xf32> to vector<8x8xf32>
    %64 = vector.extract_strided_slice %7 {offsets = [0, 16], sizes = [8, 8], strides = [1, 1]} : vector<8x32xf32> to vector<8x8xf32>
    %65 = vector.extract_strided_slice %10 {offsets = [0, 16], sizes = [8, 8], strides = [1, 1]} : vector<8x32xf32> to vector<8x8xf32>
    %cst_27 = arith.constant dense<0.000000e+00> : vector<8x8xf32>
    %66 = tpu.matmul %63, %64, %cst_27 {dimension_numbers = #tpu.dot_dimension_numbers<[1], [1], [0], [0], [0, 0, 1, 0], [], []>} : vector<8x8xf32>, vector<8x8xf32>, vector<8x8xf32> -> vector<8x8xf32>
    %cst_28 = arith.constant -1.000000e+09 : f32
    %67 = vector.broadcast %cst_28 : f32 to vector<8x8xf32>
    %68 = arith.select %21, %66, %67 : vector<8x8xi1>, vector<8x8xf32>
    %cst_29 = arith.constant dense<0xFF800000> : vector<8xf32>
    %69 = vector.multi_reduction <maximumf>, %68, %cst_29 [1] : vector<8x8xf32> to vector<8xf32>
    %70 = vector.shape_cast %69 : vector<8xf32> to vector<8x1xf32>
    %71 = vector.broadcast %70 : vector<8x1xf32> to vector<8x8xf32>
    %72 = arith.subf %68, %71 : vector<8x8xf32>
    %73 = math.exp %72 : vector<8x8xf32>
    %cst_30 = arith.constant dense<0.000000e+00> : vector<8xf32>
    %74 = vector.multi_reduction <add>, %73, %cst_30 [1] : vector<8x8xf32> to vector<8xf32>
    %75 = vector.shape_cast %74 : vector<8xf32> to vector<8x1xf32>
    %76 = tpu.reciprocal %75 {approx = true} : vector<8x1xf32> -> vector<8x1xf32>
    %77 = vector.broadcast %76 : vector<8x1xf32> to vector<8x8xf32>
    %78 = arith.mulf %73, %77 : vector<8x8xf32>
    %cst_31 = arith.constant dense<0.000000e+00> : vector<8x8xf32>
    %79 = tpu.matmul %78, %65, %cst_31 {dimension_numbers = #tpu.dot_dimension_numbers<[1], [0], [0], [1], [0, 0, 1, 1], [], []>} : vector<8x8xf32>, vector<8x8xf32>, vector<8x8xf32> -> vector<8x8xf32>
    %80 = vector.extract_strided_slice %12 {offsets = [16, 0], sizes = [8, 32], strides = [1, 1]} : vector<32x32xf32> to vector<8x32xf32>
    %cst_32 = arith.constant dense<0.000000e+00> : vector<8x32xf32>
    %81 = tpu.matmul %79, %80, %cst_32 {dimension_numbers = #tpu.dot_dimension_numbers<[1], [0], [0], [1], [0, 0, 1, 1], [], []>} : vector<8x8xf32>, vector<8x32xf32>, vector<8x32xf32> -> vector<8x32xf32>
    %82 = arith.addf %62, %81 : vector<8x32xf32>
    %83 = vector.extract_strided_slice %4 {offsets = [0, 24], sizes = [8, 8], strides = [1, 1]} : vector<8x32xf32> to vector<8x8xf32>
    %84 = vector.extract_strided_slice %7 {offsets = [0, 24], sizes = [8, 8], strides = [1, 1]} : vector<8x32xf32> to vector<8x8xf32>
    %85 = vector.extract_strided_slice %10 {offsets = [0, 24], sizes = [8, 8], strides = [1, 1]} : vector<8x32xf32> to vector<8x8xf32>
    %cst_33 = arith.constant dense<0.000000e+00> : vector<8x8xf32>
    %86 = tpu.matmul %83, %84, %cst_33 {dimension_numbers = #tpu.dot_dimension_numbers<[1], [1], [0], [0], [0, 0, 1, 0], [], []>} : vector<8x8xf32>, vector<8x8xf32>, vector<8x8xf32> -> vector<8x8xf32>
    %cst_34 = arith.constant -1.000000e+09 : f32
    %87 = vector.broadcast %cst_34 : f32 to vector<8x8xf32>
    %88 = arith.select %21, %86, %87 : vector<8x8xi1>, vector<8x8xf32>
    %cst_35 = arith.constant dense<0xFF800000> : vector<8xf32>
    %89 = vector.multi_reduction <maximumf>, %88, %cst_35 [1] : vector<8x8xf32> to vector<8xf32>
    %90 = vector.shape_cast %89 : vector<8xf32> to vector<8x1xf32>
    %91 = vector.broadcast %90 : vector<8x1xf32> to vector<8x8xf32>
    %92 = arith.subf %88, %91 : vector<8x8xf32>
    %93 = math.exp %92 : vector<8x8xf32>
    %cst_36 = arith.constant dense<0.000000e+00> : vector<8xf32>
    %94 = vector.multi_reduction <add>, %93, %cst_36 [1] : vector<8x8xf32> to vector<8xf32>
    %95 = vector.shape_cast %94 : vector<8xf32> to vector<8x1xf32>
    %96 = tpu.reciprocal %95 {approx = true} : vector<8x1xf32> -> vector<8x1xf32>
    %97 = vector.broadcast %96 : vector<8x1xf32> to vector<8x8xf32>
    %98 = arith.mulf %93, %97 : vector<8x8xf32>
    %cst_37 = arith.constant dense<0.000000e+00> : vector<8x8xf32>
    %99 = tpu.matmul %98, %85, %cst_37 {dimension_numbers = #tpu.dot_dimension_numbers<[1], [0], [0], [1], [0, 0, 1, 1], [], []>} : vector<8x8xf32>, vector<8x8xf32>, vector<8x8xf32> -> vector<8x8xf32>
    %100 = vector.extract_strided_slice %12 {offsets = [24, 0], sizes = [8, 32], strides = [1, 1]} : vector<32x32xf32> to vector<8x32xf32>
    %cst_38 = arith.constant dense<0.000000e+00> : vector<8x32xf32>
    %101 = tpu.matmul %99, %100, %cst_38 {dimension_numbers = #tpu.dot_dimension_numbers<[1], [0], [0], [1], [0, 0, 1, 1], [], []>} : vector<8x8xf32>, vector<8x32xf32>, vector<8x32xf32> -> vector<8x32xf32>
    %102 = arith.addf %82, %101 : vector<8x32xf32>
    %c0_39 = arith.constant 0 : index
    %c0_40 = arith.constant 0 : index
    %103 = vector.load %arg6[%c0_39, %c0_40] : memref<1x32xf32, #tpu.memory_space<vmem>>, vector<1x32xf32>
    %104 = vector.broadcast %103 : vector<1x32xf32> to vector<8x32xf32>
    %105 = arith.addf %102, %104 : vector<8x32xf32>
    %106 = arith.truncf %105 : vector<8x32xf32> to vector<8x32xbf16>
    %c0_41 = arith.constant 0 : index
    %c0_42 = arith.constant 0 : index
    %c0_43 = arith.constant 0 : index
    %107 = vector.load %arg7[%c0_41, %c0_42, %c0_43] : memref<1x8x32xbf16, #tpu.memory_space<vmem>>, vector<1x8x32xbf16>
    %108 = vector.shape_cast %107 : vector<1x8x32xbf16> to vector<8x32xbf16>
    %109 = vector.shape_cast %106 : vector<8x32xbf16> to vector<1x8x32xbf16>
    tpu.vector_store %arg7[%c0_41, %c0_42, %c0_43], %109 {strides = array<i32>} : memref<1x8x32xbf16, #tpu.memory_space<vmem>>, vector<1x8x32xbf16>,
    return
  }
  func.func @transform_0(%arg0: i32) -> (i32, i32, i32) {
    %c0_i32 = arith.constant 0 : i32
    %c0_i32_0 = arith.constant 0 : i32
    %c0_i32_1 = arith.constant 0 : i32
    return %arg0, %c0_i32, %c0_i32_0 : i32, i32, i32
  }
  func.func @transform_1(%arg0: i32) -> (i32, i32, i32) {
    %c0_i32 = arith.constant 0 : i32
    %c0_i32_0 = arith.constant 0 : i32
    %c0_i32_1 = arith.constant 0 : i32
    return %arg0, %c0_i32, %c0_i32_0 : i32, i32, i32
  }
  func.func @transform_2(%arg0: i32) -> (i32, i32, i32) {
    %c0_i32 = arith.constant 0 : i32
    %c0_i32_0 = arith.constant 0 : i32
    %c0_i32_1 = arith.constant 0 : i32
    return %arg0, %c0_i32, %c0_i32_0 : i32, i32, i32
  }
  func.func @transform_3(%arg0: i32) -> (i32, i32, i32) {
    %c0_i32 = arith.constant 0 : i32
    %c0_i32_0 = arith.constant 0 : i32
    %c0_i32_1 = arith.constant 0 : i32
    return %arg0, %c0_i32, %c0_i32_0 : i32, i32, i32
  }
  func.func @transform_4(%arg0: i32) -> (i32, i32) {
    %c0_i32 = arith.constant 0 : i32
    %c0_i32_0 = arith.constant 0 : i32
    %c0_i32_1 = arith.constant 0 : i32
    return %c0_i32, %c0_i32_0 : i32, i32
  }
  func.func @transform_5(%arg0: i32) -> (i32, i32) {
    %c0_i32 = arith.constant 0 : i32
    %c0_i32_0 = arith.constant 0 : i32
    %c0_i32_1 = arith.constant 0 : i32
    return %c0_i32, %c0_i32_0 : i32, i32
  }
  func.func @transform_6(%arg0: i32) -> (i32, i32, i32) {
    %c0_i32 = arith.constant 0 : i32
    %c0_i32_0 = arith.constant 0 : i32
    %c0_i32_1 = arith.constant 0 : i32
    return %arg0, %c0_i32, %c0_i32_0 : i32, i32, i32
  }
}

module attributes {stable_mosaic.version = 11 : i64} {
  func.func @_matmul_kernel(%arg0: i32, %arg1: i32, %arg2: i32, %arg3: memref<16x128xbf16, #tpu.memory_space<vmem>>, %arg4: memref<128x128xbf16, #tpu.memory_space<vmem>>, %arg5: memref<1x128xf32, #tpu.memory_space<vmem>>, %arg6: memref<16x128xf32, #tpu.memory_space<vmem>>, %arg7: memref<16x128xf32, #tpu.memory_space<vmem>>) attributes {dimension_semantics = [#tpu.dimension_semantics<parallel>, #tpu.dimension_semantics<parallel>, #tpu.dimension_semantics<arbitrary>], iteration_bounds = array<i64: 1, 1, 1>, scalar_prefetch = 0 : i64, scratch_operands = 1 : i64, tpu.core_type = #tpu.core_type<tc>, window_params = [{transform_indices = @transform_0, window_bounds = array<i64: 16, 128>}, {transform_indices = @transform_1, window_bounds = array<i64: 128, 128>}, {transform_indices = @transform_2, window_bounds = array<i64: 1, 128>}, {transform_indices = @transform_3, window_bounds = array<i64: 16, 128>}]} {
    %c0_i32 = arith.constant 0 : i32
    %0 = arith.cmpi eq, %arg2, %c0_i32 : i32
    %1 = arith.extui %0 : i1 to i32
    %c0_i32_0 = arith.constant 0 : i32
    %2 = arith.cmpi ne, %1, %c0_i32_0 : i32
    scf.if %2 {
      %cst_10 = arith.constant 0.000000e+00 : f32
      %12 = vector.broadcast %cst_10 : f32 to vector<16x128xf32>
      %c0_11 = arith.constant 0 : index
      %c0_12 = arith.constant 0 : index
      %13 = vector.load %arg7[%c0_11, %c0_12] : memref<16x128xf32, #tpu.memory_space<vmem>>, vector<16x128xf32>
      tpu.vector_store %arg7[%c0_11, %c0_12], %12 {strides = array<i32>} : memref<16x128xf32, #tpu.memory_space<vmem>>, vector<16x128xf32>,
    } else {
    }
    %c0 = arith.constant 0 : index
    %c0_1 = arith.constant 0 : index
    %3 = vector.load %arg7[%c0, %c0_1] : memref<16x128xf32, #tpu.memory_space<vmem>>, vector<16x128xf32>
    %c0_2 = arith.constant 0 : index
    %c0_3 = arith.constant 0 : index
    %4 = vector.load %arg3[%c0_2, %c0_3] : memref<16x128xbf16, #tpu.memory_space<vmem>>, vector<16x128xbf16>
    %c0_4 = arith.constant 0 : index
    %c0_5 = arith.constant 0 : index
    %5 = vector.load %arg4[%c0_4, %c0_5] : memref<128x128xbf16, #tpu.memory_space<vmem>>, vector<128x128xbf16>
    %cst = arith.constant dense<0.000000e+00> : vector<16x128xf32>
    %6 = tpu.matmul %4, %5, %cst {dimension_numbers = #tpu.dot_dimension_numbers<[1], [0], [0], [1], [0, 0, 1, 1], [], []>} : vector<16x128xbf16>, vector<128x128xbf16>, vector<16x128xf32> -> vector<16x128xf32>
    %7 = arith.addf %3, %6 : vector<16x128xf32>
    %c0_6 = arith.constant 0 : index
    %c0_7 = arith.constant 0 : index
    %8 = vector.load %arg7[%c0_6, %c0_7] : memref<16x128xf32, #tpu.memory_space<vmem>>, vector<16x128xf32>
    tpu.vector_store %arg7[%c0_6, %c0_7], %7 {strides = array<i32>} : memref<16x128xf32, #tpu.memory_space<vmem>>, vector<16x128xf32>,
    %c0_i32_8 = arith.constant 0 : i32
    %9 = arith.cmpi eq, %arg2, %c0_i32_8 : i32
    %10 = arith.extui %9 : i1 to i32
    %c0_i32_9 = arith.constant 0 : i32
    %11 = arith.cmpi ne, %10, %c0_i32_9 : i32
    scf.if %11 {
      %c0_10 = arith.constant 0 : index
      %c0_11 = arith.constant 0 : index
      %12 = vector.load %arg7[%c0_10, %c0_11] : memref<16x128xf32, #tpu.memory_space<vmem>>, vector<16x128xf32>
      %c0_12 = arith.constant 0 : index
      %c0_13 = arith.constant 0 : index
      %13 = vector.load %arg5[%c0_12, %c0_13] : memref<1x128xf32, #tpu.memory_space<vmem>>, vector<1x128xf32>
      %14 = vector.broadcast %13 : vector<1x128xf32> to vector<16x128xf32>
      %15 = arith.addf %12, %14 : vector<16x128xf32>
      %c0_14 = arith.constant 0 : index
      %c0_15 = arith.constant 0 : index
      %16 = vector.load %arg6[%c0_14, %c0_15] : memref<16x128xf32, #tpu.memory_space<vmem>>, vector<16x128xf32>
      tpu.vector_store %arg6[%c0_14, %c0_15], %15 {strides = array<i32>} : memref<16x128xf32, #tpu.memory_space<vmem>>, vector<16x128xf32>,
    } else {
    }
    return
  }
  func.func @transform_0(%arg0: i32, %arg1: i32, %arg2: i32) -> (i32, i32) {
    %c0_i32 = arith.constant 0 : i32
    return %arg0, %arg2 : i32, i32
  }
  func.func @transform_1(%arg0: i32, %arg1: i32, %arg2: i32) -> (i32, i32) {
    %c0_i32 = arith.constant 0 : i32
    return %arg2, %arg1 : i32, i32
  }
  func.func @transform_2(%arg0: i32, %arg1: i32, %arg2: i32) -> (i32, i32) {
    %c0_i32 = arith.constant 0 : i32
    %c0_i32_0 = arith.constant 0 : i32
    return %c0_i32, %arg1 : i32, i32
  }
  func.func @transform_3(%arg0: i32, %arg1: i32, %arg2: i32) -> (i32, i32) {
    %c0_i32 = arith.constant 0 : i32
    return %arg0, %arg1 : i32, i32
  }
}

</mosaic_0001>

<llo_original>
// kernel: transformer_forward.35
$region0: #{transformer_forward.35}
  #allocation0 [shape = 'u32[]', space=smem, size = 0x4, offset = 0x4, fixed_abs, tag = 'smem constant byte address 0x4 - core index']
  #allocation1 [shape = 'u32[144,128]{1,0:T(1,128)}', space=vmem, size = 0x12000, scoped, tag = 'internal scratch']
  %s0 = inlined_call_operand.vmem [shape: bf16[16,32], index: 0, kind: input, shape index: {}]
  %s1 = inlined_call_operand.vmem [shape: bf16[16,32], index: 1, kind: input, shape index: {}]
  %s2 = inlined_call_operand.vmem [shape: f32[1,32], index: 2, kind: input, shape index: {}]
  %s3 = inlined_call_operand.vmem [shape: f32[1,32], index: 3, kind: input, shape index: {}]
  %s4 = inlined_call_operand.vmem [shape: bf16[16,32], index: 4, kind: output, shape index: {}]
  %s5 = sld [smem:[#allocation0]]
  $region26: #{transformer_forward.35} parent=0
    _
  %s7 = ssub.s32 1, %s5
  %s8 = scalar_select 0, %s7, %s5
  // Predicated region
  $region2: #{transformer_forward.35} parent=0 // pred_check
    _
  $region3: #{transformer_forward.35} parent=0 // pred_check_branch
    %10 = sbr.rel (0) target = $region5
  $region4: #{transformer_forward.35} parent=0 // pred_region
    _
  $region5: #{transformer_forward.35} parent=0 // pred_fallthru
    _
  // Predicated region
  $region6: #{transformer_forward.35} parent=0 // pred_check
    _
  $region7: #{transformer_forward.35} parent=0 // pred_check_branch
    %12 = sbr.rel (0) target = $region9
  $region8: #{transformer_forward.35} parent=0 // pred_region
    _
  $region9: #{transformer_forward.35} parent=0 // pred_fallthru
    _
  // Predicated region
  $region10: #{transformer_forward.35} parent=0 // pred_check
    _
  $region11: #{transformer_forward.35} parent=0 // pred_check_branch
    %14 = sbr.rel (0) target = $region13
  $region12: #{transformer_forward.35} parent=0 // pred_region
    _
  $region13: #{transformer_forward.35} parent=0 // pred_fallthru
    _
  // Predicated region
  $region14: #{transformer_forward.35} parent=0 // pred_check
    _
  $region15: #{transformer_forward.35} parent=0 // pred_check_branch
    %16 = sbr.rel (0) target = $region17
  $region16: #{transformer_forward.35} parent=0 // pred_region
    _
  $region17: #{transformer_forward.35} parent=0 // pred_fallthru
    _
  %v17 = vld [vmem:[%s0] sm:$0xf]
  %v18 = vld [vmem:[%s0 + $0x4] sm:$0xf]
  %v19 = vunpack.c.l.bf16 %v17
  %v20 = vunpack.c.l.bf16 %v18
  %v21 = vld [vmem:[%s1] sm:$0xf]
  %v22 = vld [vmem:[%s1 + $0x4] sm:$0xf]
  %v23 = vunpack.c.l.bf16 %v21
  %v24 = vunpack.c.l.bf16 %v22
  %v25 = vadd.f32 %v19, %v23
  %v26 = vadd.f32 %v20, %v24
  %vm27 = vcmask 261120
  %v28 = vsel %vm27, %v25, 0.0
  %29 = vadd.xlane.f32.xlu0 %v28
  %v30 = vpop.xlane.xlu0 %29
  %v31 = vsel %vm27, %v26, 0.0
  %32 = vadd.xlane.f32.xlu0 %v31
  %v33 = vpop.xlane.xlu0 %32
  %v34 = vrcp.pop 32.0
  %v35 = vmul.f32 %v30, %v34
  %v36 = vmul.f32 %v33, %v34
  %v37 = vsub.f32 %v25, %v35
  %v38 = vsub.f32 %v26, %v36
  %v39 = vmul.f32 %v37, %v37
  %v40 = vmul.f32 %v38, %v38
  %v41 = vsel %vm27, %v39, 0.0
  %42 = vadd.xlane.f32.xlu0 %v41
  %v43 = vpop.xlane.xlu0 %42
  %v44 = vsel %vm27, %v40, 0.0
  %45 = vadd.xlane.f32.xlu0 %v44
  %v46 = vpop.xlane.xlu0 %45
  %v47 = vmul.f32 %v43, %v34
  %v48 = vmul.f32 %v46, %v34
  %v49 = vadd.f32 %v47, 1e-05
  %v50 = vadd.f32 %v48, 1e-05
  %v51 = vrsqrt.pop %v49
  %v52 = vrsqrt.pop %v50
  %v53 = vmul.f32 %v37, %v51
  %v54 = vmul.f32 %v38, %v52
  %v55 = vld [vmem:[%s2] sm:$0x1]
  %v57 = vlaneseq
  %v58 = vshrl.u32 %v57, 7
  %v59 = vsub.s32 0, %v58
  %v60 = vrot.slane %v55, %v59
  %v62 = vmul.f32 %v53, %v60
  %v63 = vmul.f32 %v54, %v60
  %v64 = vld [vmem:[%s3] sm:$0x1]
  %v66 = vlaneseq
  %v67 = vshrl.u32 %v66, 7
  %v68 = vsub.s32 0, %v67
  %v69 = vrot.slane %v64, %v68
  %v71 = vadd.f32 %v62, %v69
  %v72 = vadd.f32 %v63, %v69
  %v73 = vpack.c.bf16 %v72, %v71
  %v75 = vunpack.c.l.b16 %v73
  %v76 = vunpack.c.h.b16 %v73
  %v77 = vpack.c.b16 %v75, %v75
  %v78 = vpack.c.b16 %v76, %v76
  %vm81 = vcmask 257024
  %82 = vst.msk [vmem:[%s4] sm:$0xf] %vm81, %v77
  %83 = vst.msk [vmem:[%s4 + $0x4] sm:$0xf] %vm81, %v78
  // Predicated region
  $region18: #{transformer_forward.35} parent=0 // pred_check
    _
  $region19: #{transformer_forward.35} parent=0 // pred_check_branch
    %85 = sbr.rel (0) target = $region21
  $region20: #{transformer_forward.35} parent=0 // pred_region
    _
  $region21: #{transformer_forward.35} parent=0 // pred_fallthru
    _
  // Predicated region
  $region22: #{transformer_forward.35} parent=0 // pred_check
    _
  $region23: #{transformer_forward.35} parent=0 // pred_check_branch
    %87 = sbr.rel (0) target = $region25
  $region24: #{transformer_forward.35} parent=0 // pred_region
    _
  $region25: #{transformer_forward.35} parent=0 // pred_fallthru
    _

// kernel: transformer_forward.33
$region0: #{transformer_forward.33}
  #allocation0 [shape = 'u32[]', space=smem, size = 0x4, offset = 0x4, fixed_abs, tag = 'smem constant byte address 0x4 - core index']
  #allocation1 [shape = 'u32[144,128]{1,0:T(1,128)}', space=vmem, size = 0x12000, scoped, tag = 'internal scratch']
  #allocation2 [shape = 'f32[16,128]{1,0:T(8,128)}', space=vmem, size = 0x2000, scoped, tag = 'scratch operand']
  %s0 = inlined_call_operand.vmem [shape: bf16[16,128], index: 0, kind: input, shape index: {}]
  %s1 = inlined_call_operand.vmem [shape: bf16[128,128], index: 1, kind: input, shape index: {}]
  %s2 = inlined_call_operand.vmem [shape: f32[1,128], index: 2, kind: input, shape index: {}]
  %s3 = inlined_call_operand.vmem [shape: bf16[16,128], index: 3, kind: output, shape index: {}]
  %s4 = sld [smem:[#allocation0]]
  $region30: #{transformer_forward.33} parent=0
    _
  %s6 = ssub.s32 1, %s4
  %s7 = scalar_select 0, %s6, %s4
  // Predicated region
  $region2: #{transformer_forward.33} parent=0 // pred_check
    _
  $region3: #{transformer_forward.33} parent=0 // pred_check_branch
    %9 = sbr.rel (0) target = $region5
  $region4: #{transformer_forward.33} parent=0 // pred_region
    _
  $region5: #{transformer_forward.33} parent=0 // pred_fallthru
    _
  // Predicated region
  $region6: #{transformer_forward.33} parent=0 // pred_check
    _
  $region7: #{transformer_forward.33} parent=0 // pred_check_branch
    %11 = sbr.rel (0) target = $region9
  $region8: #{transformer_forward.33} parent=0 // pred_region
    _
  $region9: #{transformer_forward.33} parent=0 // pred_fallthru
    _
  // Predicated region
  $region10: #{transformer_forward.33} parent=0 // pred_check
    _
  $region11: #{transformer_forward.33} parent=0 // pred_check_branch
    %13 = sbr.rel (0) target = $region13
  $region12: #{transformer_forward.33} parent=0 // pred_region
    _
  $region13: #{transformer_forward.33} parent=0 // pred_fallthru
    _
  %p15 = scmp.eq.s32.totalorder 0, 0
  // Predicated region
  $region14: #{transformer_forward.33} parent=0 // pred_check
    %p16 = pneg %p15
  $region15: #{transformer_forward.33} parent=0 // pred_check_branch
    %18 = sbr.rel (%p16) target = $region17
  $region16: #{transformer_forward.33} parent=0 // pred_region
    %19 = vst [vmem:[#allocation2] sm:$0xff] 0.0
    %20 = vst [vmem:[#allocation2 + $0x8] sm:$0xff] 0.0
  $region17: #{transformer_forward.33} parent=0 // pred_fallthru
    _
  %v21 = vld [vmem:[#allocation2] sm:$0xff]
  %v22 = vld [vmem:[#allocation2 + $0x8] sm:$0xff]
  %v23 = vld [vmem:[%s0] sm:$0xf]
  %v24 = vld [vmem:[%s0 + $0x4] sm:$0xf]
  %v25 = vld [vmem:[%s1] sm:$0xf]
  %v26 = vld [vmem:[%s1 + $0x4] sm:$0xf]
  %v27 = vld [vmem:[%s1 + $0x8] sm:$0xf]
  %v28 = vld [vmem:[%s1 + $0xc] sm:$0xf]
  %v29 = vld [vmem:[%s1 + $0x10] sm:$0xf]
  %v30 = vld [vmem:[%s1 + $0x14] sm:$0xf]
  %v31 = vld [vmem:[%s1 + $0x18] sm:$0xf]
  %v32 = vld [vmem:[%s1 + $0x1c] sm:$0xf]
  %v33 = vld [vmem:[%s1 + $0x20] sm:$0xf]
  %v34 = vld [vmem:[%s1 + $0x24] sm:$0xf]
  %v35 = vld [vmem:[%s1 + $0x28] sm:$0xf]
  %v36 = vld [vmem:[%s1 + $0x2c] sm:$0xf]
  %v37 = vld [vmem:[%s1 + $0x30] sm:$0xf]
  %v38 = vld [vmem:[%s1 + $0x34] sm:$0xf]
  %v39 = vld [vmem:[%s1 + $0x38] sm:$0xf]
  %v40 = vld [vmem:[%s1 + $0x3c] sm:$0xf]
  %v43 = vunpack.c.l.b16 %v23
  %v44 = vunpack.c.l.b16 %v24
  %v45 = vpack.c.b16 %v44, %v43
  %v63 = vunpack.c.l.b16 %v25
  %v64 = vunpack.c.l.b16 %v26
  %v65 = vunpack.c.l.b16 %v27
  %v66 = vunpack.c.l.b16 %v28
  %v67 = vunpack.c.l.b16 %v29
  %v68 = vunpack.c.l.b16 %v30
  %v69 = vunpack.c.l.b16 %v31
  %v70 = vunpack.c.l.b16 %v32
  %v71 = vunpack.c.l.b16 %v33
  %v72 = vunpack.c.l.b16 %v34
  %v73 = vunpack.c.l.b16 %v35
  %v74 = vunpack.c.l.b16 %v36
  %v75 = vunpack.c.l.b16 %v37
  %v76 = vunpack.c.l.b16 %v38
  %v77 = vunpack.c.l.b16 %v39
  %v78 = vunpack.c.l.b16 %v40
  %v79 = vpack.c.b16 %v64, %v63
  %v80 = vpack.c.b16 %v66, %v65
  %v81 = vpack.c.b16 %v68, %v67
  %v82 = vpack.c.b16 %v70, %v69
  %v83 = vpack.c.b16 %v72, %v71
  %v84 = vpack.c.b16 %v74, %v73
  %v85 = vpack.c.b16 %v76, %v75
  %v86 = vpack.c.b16 %v78, %v77
  %95 = vmatprep.subr.bf16.mxu0 0
  %96 = vmatpush1.bf16.msra.mxu0 %v86
  %97 = vmatprep.subr.bf16.mxu0 0
  %98 = vmatpush1.bf16.msra.mxu0 %v85
  %99 = vmatprep.subr.bf16.mxu0 0
  %100 = vmatpush1.bf16.msra.mxu0 %v84
  %101 = vmatprep.subr.bf16.mxu0 0
  %102 = vmatpush1.bf16.msra.mxu0 %v83
  %103 = vmatprep.subr.bf16.mxu0 0
  %104 = vmatpush1.bf16.msra.mxu0 %v82
  %105 = vmatprep.subr.bf16.mxu0 0
  %106 = vmatpush1.bf16.msra.mxu0 %v81
  %107 = vmatprep.subr.bf16.mxu0 0
  %108 = vmatpush1.bf16.msra.mxu0 %v80
  %109 = vmatprep.subr.bf16.mxu0 0
  %110 = vmatpush1.bf16.msra.mxu0 %v79
  %111 = vmatprep.subr.bf16.mxu0 0
  %112 = vmatpush2.bf16.msra.mxu0 0
  %113 = vmatprep.subr.bf16.mxu0 0
  %114 = vmatpush2.bf16.msra.mxu0 0
  %115 = vmatprep.subr.bf16.mxu0 0
  %116 = vmatpush2.bf16.msra.mxu0 0
  %117 = vmatprep.subr.bf16.mxu0 0
  %118 = vmatpush2.bf16.msra.mxu0 0
  %119 = vmatprep.subr.bf16.mxu0 0
  %120 = vmatpush2.bf16.msra.mxu0 0
  %121 = vmatprep.subr.bf16.mxu0 0
  %122 = vmatpush2.bf16.msra.mxu0 0
  %123 = vmatprep.subr.bf16.mxu0 0
  %124 = vmatpush2.bf16.msra.mxu0 0
  %125 = vmatprep.subr.bf16.mxu0 0
  %126 = vmatpush2.bf16.msra.mxu0 0
  %127 = vmatprep.mubr.bf16.mxu0 0
  %128 = vmatmul.mubr.bf16.gmra.mxu0 %v45
  %v129 = vpop.f32.mrf.mxu0
  %v130 = vadd.f32 0.0, %v129
  %v131 = vpop.f32.mrf.mxu0
  %v132 = vpop.f32.mrf.mxu0
  %v133 = vadd.f32 0.0, %v132
  %v134 = vpop.f32.mrf.mxu0
  %135 = vdwg.mxu0
  %v136 = vadd.f32 %v21, %v130
  %v137 = vadd.f32 %v22, %v133
  %138 = vst [vmem:[#allocation2] sm:$0xff] %v136
  %139 = vst [vmem:[#allocation2 + $0x8] sm:$0xff] %v137
  // Predicated region
  $region18: #{transformer_forward.33} parent=0 // pred_check
    %p140 = pneg %p15
  $region19: #{transformer_forward.33} parent=0 // pred_check_branch
    %142 = sbr.rel (%p140) target = $region21
  $region20: #{transformer_forward.33} parent=0 // pred_region
    %v143 = vld [vmem:[#allocation2] sm:$0xff]
    %v144 = vld [vmem:[#allocation2 + $0x8] sm:$0xff]
    %v145 = vld [vmem:[%s2] sm:$0x1]
    %v147 = vlaneseq
    %v148 = vshrl.u32 %v147, 7
    %v149 = vsub.s32 0, %v148
    %v150 = vrot.slane %v145, %v149
    %v152 = vadd.f32 %v143, %v150
    %v153 = vadd.f32 %v144, %v150
    %v154 = vpack.c.bf16 %v153, %v152
    %v156 = vunpack.c.l.b16 %v154
    %v157 = vunpack.c.h.b16 %v154
    %v158 = vpack.c.b16 %v156, %v156
    %v159 = vpack.c.b16 %v157, %v157
    %162 = vst [vmem:[%s3] sm:$0xf] %v158
    %163 = vst [vmem:[%s3 + $0x4] sm:$0xf] %v159
  $region21: #{transformer_forward.33} parent=0 // pred_fallthru
    _
  // Predicated region
  $region22: #{transformer_forward.33} parent=0 // pred_check
    _
  $region23: #{transformer_forward.33} parent=0 // pred_check_branch
    %165 = sbr.rel (0) target = $region25
  $region24: #{transformer_forward.33} parent=0 // pred_region
    _
  $region25: #{transformer_forward.33} parent=0 // pred_fallthru
    _
  // Predicated region
  $region26: #{transformer_forward.33} parent=0 // pred_check
    _
  $region27: #{transformer_forward.33} parent=0 // pred_check_branch
    %167 = sbr.rel (0) target = $region29
  $region28: #{transformer_forward.33} parent=0 // pred_region
    _
  $region29: #{transformer_forward.33} parent=0 // pred_fallthru
    _

// kernel: transformer_forward.36
$region0: #{transformer_forward.36}
  #allocation0 [shape = 'u32[]', space=smem, size = 0x4, offset = 0x4, fixed_abs, tag = 'smem constant byte address 0x4 - core index']
  #allocation1 [shape = 'u32[144,128]{1,0:T(1,128)}', space=vmem, size = 0x12000, scoped, tag = 'internal scratch']
  #allocation2 [shape = 'f32[16,128]{1,0:T(8,128)}', space=vmem, size = 0x2000, scoped, tag = 'scratch operand']
  %s0 = inlined_call_operand.vmem [shape: bf16[16,128], index: 0, kind: input, shape index: {}]
  %s1 = inlined_call_operand.vmem [shape: bf16[128,128], index: 1, kind: input, shape index: {}]
  %s2 = inlined_call_operand.vmem [shape: f32[1,128], index: 2, kind: input, shape index: {}]
  %s3 = inlined_call_operand.vmem [shape: bf16[16,128], index: 3, kind: output, shape index: {}]
  %s4 = sld [smem:[#allocation0]]
  $region30: #{transformer_forward.36} parent=0
    _
  %s6 = ssub.s32 1, %s4
  %s7 = scalar_select 0, %s6, %s4
  // Predicated region
  $region2: #{transformer_forward.36} parent=0 // pred_check
    _
  $region3: #{transformer_forward.36} parent=0 // pred_check_branch
    %9 = sbr.rel (0) target = $region5
  $region4: #{transformer_forward.36} parent=0 // pred_region
    _
  $region5: #{transformer_forward.36} parent=0 // pred_fallthru
    _
  // Predicated region
  $region6: #{transformer_forward.36} parent=0 // pred_check
    _
  $region7: #{transformer_forward.36} parent=0 // pred_check_branch
    %11 = sbr.rel (0) target = $region9
  $region8: #{transformer_forward.36} parent=0 // pred_region
    _
  $region9: #{transformer_forward.36} parent=0 // pred_fallthru
    _
  // Predicated region
  $region10: #{transformer_forward.36} parent=0 // pred_check
    _
  $region11: #{transformer_forward.36} parent=0 // pred_check_branch
    %13 = sbr.rel (0) target = $region13
  $region12: #{transformer_forward.36} parent=0 // pred_region
    _
  $region13: #{transformer_forward.36} parent=0 // pred_fallthru
    _
  %p15 = scmp.eq.s32.totalorder 0, 0
  // Predicated region
  $region14: #{transformer_forward.36} parent=0 // pred_check
    %p16 = pneg %p15
  $region15: #{transformer_forward.36} parent=0 // pred_check_branch
    %18 = sbr.rel (%p16) target = $region17
  $region16: #{transformer_forward.36} parent=0 // pred_region
    %19 = vst [vmem:[#allocation2] sm:$0xff] 0.0
    %20 = vst [vmem:[#allocation2 + $0x8] sm:$0xff] 0.0
  $region17: #{transformer_forward.36} parent=0 // pred_fallthru
    _
  %v21 = vld [vmem:[#allocation2] sm:$0xff]
  %v22 = vld [vmem:[#allocation2 + $0x8] sm:$0xff]
  %v23 = vld [vmem:[%s0] sm:$0xf]
  %v24 = vld [vmem:[%s0 + $0x4] sm:$0xf]
  %v25 = vld [vmem:[%s1] sm:$0xf]
  %v26 = vld [vmem:[%s1 + $0x4] sm:$0xf]
  %v27 = vld [vmem:[%s1 + $0x8] sm:$0xf]
  %v28 = vld [vmem:[%s1 + $0xc] sm:$0xf]
  %v29 = vld [vmem:[%s1 + $0x10] sm:$0xf]
  %v30 = vld [vmem:[%s1 + $0x14] sm:$0xf]
  %v31 = vld [vmem:[%s1 + $0x18] sm:$0xf]
  %v32 = vld [vmem:[%s1 + $0x1c] sm:$0xf]
  %v33 = vld [vmem:[%s1 + $0x20] sm:$0xf]
  %v34 = vld [vmem:[%s1 + $0x24] sm:$0xf]
  %v35 = vld [vmem:[%s1 + $0x28] sm:$0xf]
  %v36 = vld [vmem:[%s1 + $0x2c] sm:$0xf]
  %v37 = vld [vmem:[%s1 + $0x30] sm:$0xf]
  %v38 = vld [vmem:[%s1 + $0x34] sm:$0xf]
  %v39 = vld [vmem:[%s1 + $0x38] sm:$0xf]
  %v40 = vld [vmem:[%s1 + $0x3c] sm:$0xf]
  %v43 = vunpack.c.l.b16 %v23
  %v44 = vunpack.c.l.b16 %v24
  %v45 = vpack.c.b16 %v44, %v43
  %v63 = vunpack.c.l.b16 %v25
  %v64 = vunpack.c.l.b16 %v26
  %v65 = vunpack.c.l.b16 %v27
  %v66 = vunpack.c.l.b16 %v28
  %v67 = vunpack.c.l.b16 %v29
  %v68 = vunpack.c.l.b16 %v30
  %v69 = vunpack.c.l.b16 %v31
  %v70 = vunpack.c.l.b16 %v32
  %v71 = vunpack.c.l.b16 %v33
  %v72 = vunpack.c.l.b16 %v34
  %v73 = vunpack.c.l.b16 %v35
  %v74 = vunpack.c.l.b16 %v36
  %v75 = vunpack.c.l.b16 %v37
  %v76 = vunpack.c.l.b16 %v38
  %v77 = vunpack.c.l.b16 %v39
  %v78 = vunpack.c.l.b16 %v40
  %v79 = vpack.c.b16 %v64, %v63
  %v80 = vpack.c.b16 %v66, %v65
  %v81 = vpack.c.b16 %v68, %v67
  %v82 = vpack.c.b16 %v70, %v69
  %v83 = vpack.c.b16 %v72, %v71
  %v84 = vpack.c.b16 %v74, %v73
  %v85 = vpack.c.b16 %v76, %v75
  %v86 = vpack.c.b16 %v78, %v77
  %95 = vmatprep.subr.bf16.mxu0 0
  %96 = vmatpush1.bf16.msra.mxu0 %v86
  %97 = vmatprep.subr.bf16.mxu0 0
  %98 = vmatpush1.bf16.msra.mxu0 %v85
  %99 = vmatprep.subr.bf16.mxu0 0
  %100 = vmatpush1.bf16.msra.mxu0 %v84
  %101 = vmatprep.subr.bf16.mxu0 0
  %102 = vmatpush1.bf16.msra.mxu0 %v83
  %103 = vmatprep.subr.bf16.mxu0 0
  %104 = vmatpush1.bf16.msra.mxu0 %v82
  %105 = vmatprep.subr.bf16.mxu0 0
  %106 = vmatpush1.bf16.msra.mxu0 %v81
  %107 = vmatprep.subr.bf16.mxu0 0
  %108 = vmatpush1.bf16.msra.mxu0 %v80
  %109 = vmatprep.subr.bf16.mxu0 0
  %110 = vmatpush1.bf16.msra.mxu0 %v79
  %111 = vmatprep.subr.bf16.mxu0 0
  %112 = vmatpush2.bf16.msra.mxu0 0
  %113 = vmatprep.subr.bf16.mxu0 0
  %114 = vmatpush2.bf16.msra.mxu0 0
  %115 = vmatprep.subr.bf16.mxu0 0
  %116 = vmatpush2.bf16.msra.mxu0 0
  %117 = vmatprep.subr.bf16.mxu0 0
  %118 = vmatpush2.bf16.msra.mxu0 0
  %119 = vmatprep.subr.bf16.mxu0 0
  %120 = vmatpush2.bf16.msra.mxu0 0
  %121 = vmatprep.subr.bf16.mxu0 0
  %122 = vmatpush2.bf16.msra.mxu0 0
  %123 = vmatprep.subr.bf16.mxu0 0
  %124 = vmatpush2.bf16.msra.mxu0 0
  %125 = vmatprep.subr.bf16.mxu0 0
  %126 = vmatpush2.bf16.msra.mxu0 0
  %127 = vmatprep.mubr.bf16.mxu0 0
  %128 = vmatmul.mubr.bf16.gmra.mxu0 %v45
  %v129 = vpop.f32.mrf.mxu0
  %v130 = vadd.f32 0.0, %v129
  %v131 = vpop.f32.mrf.mxu0
  %v132 = vpop.f32.mrf.mxu0
  %v133 = vadd.f32 0.0, %v132
  %v134 = vpop.f32.mrf.mxu0
  %135 = vdwg.mxu0
  %v136 = vadd.f32 %v21, %v130
  %v137 = vadd.f32 %v22, %v133
  %138 = vst [vmem:[#allocation2] sm:$0xff] %v136
  %139 = vst [vmem:[#allocation2 + $0x8] sm:$0xff] %v137
  // Predicated region
  $region18: #{transformer_forward.36} parent=0 // pred_check
    %p140 = pneg %p15
  $region19: #{transformer_forward.36} parent=0 // pred_check_branch
    %142 = sbr.rel (%p140) target = $region21
  $region20: #{transformer_forward.36} parent=0 // pred_region
    %v143 = vld [vmem:[#allocation2] sm:$0xff]
    %v144 = vld [vmem:[#allocation2 + $0x8] sm:$0xff]
    %v145 = vld [vmem:[%s2] sm:$0x1]
    %v147 = vlaneseq
    %v148 = vshrl.u32 %v147, 7
    %v149 = vsub.s32 0, %v148
    %v150 = vrot.slane %v145, %v149
    %v152 = vadd.f32 %v143, %v150
    %v153 = vadd.f32 %v144, %v150
    %v154 = vmax.f32 %v152, 0.0
    %v155 = vmax.f32 %v153, 0.0
    %v156 = vpack.c.bf16 %v155, %v154
    %v158 = vunpack.c.l.b16 %v156
    %v159 = vunpack.c.h.b16 %v156
    %v160 = vpack.c.b16 %v158, %v158
    %v161 = vpack.c.b16 %v159, %v159
    %164 = vst [vmem:[%s3] sm:$0xf] %v160
    %165 = vst [vmem:[%s3 + $0x4] sm:$0xf] %v161
  $region21: #{transformer_forward.36} parent=0 // pred_fallthru
    _
  // Predicated region
  $region22: #{transformer_forward.36} parent=0 // pred_check
    _
  $region23: #{transformer_forward.36} parent=0 // pred_check_branch
    %167 = sbr.rel (0) target = $region25
  $region24: #{transformer_forward.36} parent=0 // pred_region
    _
  $region25: #{transformer_forward.36} parent=0 // pred_fallthru
    _
  // Predicated region
  $region26: #{transformer_forward.36} parent=0 // pred_check
    _
  $region27: #{transformer_forward.36} parent=0 // pred_check_branch
    %169 = sbr.rel (0) target = $region29
  $region28: #{transformer_forward.36} parent=0 // pred_region
    _
  $region29: #{transformer_forward.36} parent=0 // pred_fallthru
    _

// kernel: transformer_forward.34
$region0: #{transformer_forward.34}
  #allocation0 [shape = 'u32[]', space=smem, size = 0x4, offset = 0x4, fixed_abs, tag = 'smem constant byte address 0x4 - core index']
  #allocation1 [shape = 'u32[144,128]{1,0:T(1,128)}', space=vmem, size = 0x12000, scoped, tag = 'internal scratch']
  %s0 = inlined_call_operand.vmem [shape: bf16[2,8,32], index: 0, kind: input, shape index: {}]
  %s1 = inlined_call_operand.vmem [shape: bf16[2,8,32], index: 1, kind: input, shape index: {}]
  %s2 = inlined_call_operand.vmem [shape: bf16[2,8,32], index: 2, kind: input, shape index: {}]
  %s3 = inlined_call_operand.vmem [shape: f32[2,1,8], index: 3, kind: input, shape index: {}]
  %s4 = inlined_call_operand.vmem [shape: bf16[32,32], index: 4, kind: input, shape index: {}]
  %s5 = inlined_call_operand.vmem [shape: f32[1,32], index: 5, kind: input, shape index: {}]
  %s6 = inlined_call_operand.vmem [shape: bf16[2,8,32], index: 6, kind: output, shape index: {}]
  %s7 = sld [smem:[#allocation0]]
  $region57: #{transformer_forward.34} parent=0
    _
  %s9 = ssub.s32 1, %s7
  %s10 = scalar_select 0, %s9, %s7
  loop: start=0, step=1, limit=4
  $region2: #{transformer_forward.34} parent=0 // loop_pre_header
    _
  $region3: #{transformer_forward.34} parent=0 // loop_header
    %s12 = sphi 0, %s16
    %p13 = scmp.ge.s32.totalorder %s12, 4
    %s22 = sphi 0, %s24
    %s25 = sphi 0, %s22
    %s26 = sphi 0, %s25
    %s42 = sphi 0, %s26
    %s48 = sphi 0, %s50
    %s51 = sphi 0, %s48
    %s52 = sphi 0, %s51
    %s68 = sphi 0, %s52
    %s74 = sphi 0, %s76
    %s77 = sphi 0, %s74
    %s78 = sphi 0, %s77
    %s94 = sphi 0, %s78
    %s100 = sphi 0, %s102
    %s103 = sphi 0, %s100
    %s104 = sphi 0, %s103
    %s120 = sphi 0, %s104
    %s124 = sphi 0, %s124
    %s126 = sphi 0, %s124
    %s127 = sphi 0, %s126
    %s141 = sphi 0, %s127
    %s145 = sphi 0, %s145
    %s147 = sphi 0, %s145
    %s148 = sphi 0, %s147
    %s162 = sphi 0, %s148
    %s168 = sphi 0, %s170
    %s171 = sphi 0, %s168
    %s172 = sphi 0, %s171
    %s188 = sphi 0, %s172
  $region4: #{transformer_forward.34} parent=0 // loop_header_branch
    %15 = sbr.rel (%p13) target = $region8
  $region5: #{transformer_forward.34} parent=0 // loop_body
    %s17 = ssub.s32 %s12, 1
    %s18 = ssub.s32 %s12, 2
    %s19 = sadd.s32 %s12, 1
    %s20 = ssub.s32 %s12, %s19
    %p21 = scmp.eq.s32.totalorder %s20, 0
    %s23 = sadd.s32 %s22, 1
    %s24 = scalar_select %p21, %s22, %s23
    %p27 = pneg %p21
    %p28 = scmp.eq.s32.totalorder %s12, 1
    %p29 = por %p27, %p28
    %p30 = scmp.ne.s32.totalorder %s22, %s25
    %p31 = scmp.eq.s32.totalorder %s12, 0
    %p32 = por %p30, %p31
    %p33 = scmp.ne.s32.totalorder %s22, %s25
    %p34 = scmp.eq.s32.totalorder %s17, 1
    %p35 = por %p33, %p34
    %p36 = scmp.ne.s32.totalorder %s25, %s26
    %p37 = scmp.eq.s32.totalorder %s17, 0
    %p38 = por %p36, %p37
    %p39 = scmp.ne.s32.totalorder %s25, %s26
    %p40 = scmp.eq.s32.totalorder %s18, 1
    %p41 = por %p39, %p40
    %p43 = scmp.ne.s32.totalorder %s26, %s42
    %p44 = scmp.eq.s32.totalorder %s18, 0
    %p45 = por %p43, %p44
    %s46 = ssub.s32 %s12, %s19
    %p47 = scmp.eq.s32.totalorder %s46, 0
    %s49 = sadd.s32 %s48, 1
    %s50 = scalar_select %p47, %s48, %s49
    %p53 = pneg %p47
    %p54 = scmp.eq.s32.totalorder %s12, 1
    %p55 = por %p53, %p54
    %p56 = scmp.ne.s32.totalorder %s48, %s51
    %p57 = scmp.eq.s32.totalorder %s12, 0
    %p58 = por %p56, %p57
    %p59 = scmp.ne.s32.totalorder %s48, %s51
    %p60 = scmp.eq.s32.totalorder %s17, 1
    %p61 = por %p59, %p60
    %p62 = scmp.ne.s32.totalorder %s51, %s52
    %p63 = scmp.eq.s32.totalorder %s17, 0
    %p64 = por %p62, %p63
    %p65 = scmp.ne.s32.totalorder %s51, %s52
    %p66 = scmp.eq.s32.totalorder %s18, 1
    %p67 = por %p65, %p66
    %p69 = scmp.ne.s32.totalorder %s52, %s68
    %p70 = scmp.eq.s32.totalorder %s18, 0
    %p71 = por %p69, %p70
    %s72 = ssub.s32 %s12, %s19
    %p73 = scmp.eq.s32.totalorder %s72, 0
    %s75 = sadd.s32 %s74, 1
    %s76 = scalar_select %p73, %s74, %s75
    %p79 = pneg %p73
    %p80 = scmp.eq.s32.totalorder %s12, 1
    %p81 = por %p79, %p80
    %p82 = scmp.ne.s32.totalorder %s74, %s77
    %p83 = scmp.eq.s32.totalorder %s12, 0
    %p84 = por %p82, %p83
    %p85 = scmp.ne.s32.totalorder %s74, %s77
    %p86 = scmp.eq.s32.totalorder %s17, 1
    %p87 = por %p85, %p86
    %p88 = scmp.ne.s32.totalorder %s77, %s78
    %p89 = scmp.eq.s32.totalorder %s17, 0
    %p90 = por %p88, %p89
    %p91 = scmp.ne.s32.totalorder %s77, %s78
    %p92 = scmp.eq.s32.totalorder %s18, 1
    %p93 = por %p91, %p92
    %p95 = scmp.ne.s32.totalorder %s78, %s94
    %p96 = scmp.eq.s32.totalorder %s18, 0
    %p97 = por %p95, %p96
    %s98 = ssub.s32 %s12, %s19
    %p99 = scmp.eq.s32.totalorder %s98, 0
    %s101 = sadd.s32 %s100, 1
    %s102 = scalar_select %p99, %s100, %s101
    %p105 = pneg %p99
    %p106 = scmp.eq.s32.totalorder %s12, 1
    %p107 = por %p105, %p106
    %p108 = scmp.ne.s32.totalorder %s100, %s103
    %p109 = scmp.eq.s32.totalorder %s12, 0
    %p110 = por %p108, %p109
    %p111 = scmp.ne.s32.totalorder %s100, %s103
    %p112 = scmp.eq.s32.totalorder %s17, 1
    %p113 = por %p111, %p112
    %p114 = scmp.ne.s32.totalorder %s103, %s104
    %p115 = scmp.eq.s32.totalorder %s17, 0
    %p116 = por %p114, %p115
    %p117 = scmp.ne.s32.totalorder %s103, %s104
    %p118 = scmp.eq.s32.totalorder %s18, 1
    %p119 = por %p117, %p118
    %p121 = scmp.ne.s32.totalorder %s104, %s120
    %p122 = scmp.eq.s32.totalorder %s18, 0
    %p123 = por %p121, %p122
    %s125 = sadd.s32 %s124, 1
    %p128 = scmp.eq.s32.totalorder %s12, 1
    %p129 = scmp.ne.s32.totalorder %s124, %s126
    %p130 = scmp.eq.s32.totalorder %s12, 0
    %p131 = por %p129, %p130
    %p132 = scmp.ne.s32.totalorder %s124, %s126
    %p133 = scmp.eq.s32.totalorder %s17, 1
    %p134 = por %p132, %p133
    %p135 = scmp.ne.s32.totalorder %s126, %s127
    %p136 = scmp.eq.s32.totalorder %s17, 0
    %p137 = por %p135, %p136
    %p138 = scmp.ne.s32.totalorder %s126, %s127
    %p139 = scmp.eq.s32.totalorder %s18, 1
    %p140 = por %p138, %p139
    %p142 = scmp.ne.s32.totalorder %s127, %s141
    %p143 = scmp.eq.s32.totalorder %s18, 0
    %p144 = por %p142, %p143
    %s146 = sadd.s32 %s145, 1
    %p149 = scmp.eq.s32.totalorder %s12, 1
    %p150 = scmp.ne.s32.totalorder %s145, %s147
    %p151 = scmp.eq.s32.totalorder %s12, 0
    %p152 = por %p150, %p151
    %p153 = scmp.ne.s32.totalorder %s145, %s147
    %p154 = scmp.eq.s32.totalorder %s17, 1
    %p155 = por %p153, %p154
    %p156 = scmp.ne.s32.totalorder %s147, %s148
    %p157 = scmp.eq.s32.totalorder %s17, 0
    %p158 = por %p156, %p157
    %p159 = scmp.ne.s32.totalorder %s147, %s148
    %p160 = scmp.eq.s32.totalorder %s18, 1
    %p161 = por %p159, %p160
    %p163 = scmp.ne.s32.totalorder %s148, %s162
    %p164 = scmp.eq.s32.totalorder %s18, 0
    %p165 = por %p163, %p164
    %s166 = ssub.s32 %s12, %s19
    %p167 = scmp.eq.s32.totalorder %s166, 0
    %s169 = sadd.s32 %s168, 1
    %s170 = scalar_select %p167, %s168, %s169
    %p173 = pneg %p167
    %p174 = scmp.eq.s32.totalorder %s12, 1
    %p175 = por %p173, %p174
    %p176 = scmp.ne.s32.totalorder %s168, %s171
    %p177 = scmp.eq.s32.totalorder %s12, 0
    %p178 = por %p176, %p177
    %p179 = scmp.ne.s32.totalorder %s168, %s171
    %p180 = scmp.eq.s32.totalorder %s17, 1
    %p181 = por %p179, %p180
    %p182 = scmp.ne.s32.totalorder %s171, %s172
    %p183 = scmp.eq.s32.totalorder %s17, 0
    %p184 = por %p182, %p183
    %p185 = scmp.ne.s32.totalorder %s171, %s172
    %p186 = scmp.eq.s32.totalorder %s18, 1
    %p187 = por %p185, %p186
    %p189 = scmp.ne.s32.totalorder %s172, %s188
    %p190 = scmp.eq.s32.totalorder %s18, 0
    %p191 = por %p189, %p190
    %p192 = scmp.le.s32.totalorder 1, %s12
    %p193 = scmp.lt.s32.totalorder %s12, 3
    %p194 = pnand %p192, %p193
    %p195 = pneg %p194
    // Predicated region
    $region9: #{transformer_forward.34} parent=5 // pred_check
      _
    $region10: #{transformer_forward.34} parent=5 // pred_check_branch
      %197 = sbr.rel (%p194) target = $region12
    $region11: #{transformer_forward.34} parent=5 // pred_region
      %s198 = ssub.s32 %s12, 1
      // Predicated region
      $region13: #{transformer_forward.34} parent=11 // pred_check
        %p199 = pneg %p137
      $region14: #{transformer_forward.34} parent=11 // pred_check_branch
        %201 = sbr.rel (%p199) target = $region16
      $region15: #{transformer_forward.34} parent=11 // pred_region
        _
      $region16: #{transformer_forward.34} parent=11 // pred_fallthru
        _
      // Predicated region
      $region17: #{transformer_forward.34} parent=11 // pred_check
        %p202 = pneg %p158
      $region18: #{transformer_forward.34} parent=11 // pred_check_branch
        %204 = sbr.rel (%p202) target = $region20
      $region19: #{transformer_forward.34} parent=11 // pred_region
        _
      $region20: #{transformer_forward.34} parent=11 // pred_fallthru
        _
    $region12: #{transformer_forward.34} parent=5 // pred_fallthru
      _
    %p205 = scmp.lt.s32.totalorder %s12, 2
    // Predicated region
    $region21: #{transformer_forward.34} parent=5 // pred_check
      %p206 = pneg %p205
    $region22: #{transformer_forward.34} parent=5 // pred_check_branch
      %208 = sbr.rel (%p206) target = $region24
    $region23: #{transformer_forward.34} parent=5 // pred_region
      // Predicated region
      $region25: #{transformer_forward.34} parent=23 // pred_check
        %p209 = pneg %p32
      $region26: #{transformer_forward.34} parent=23 // pred_check_branch
        %211 = sbr.rel (%p209) target = $region28
      $region27: #{transformer_forward.34} parent=23 // pred_region
        %p212 = scmp.lt.s32.totalorder %s12, 1
        %s213 = scalar_select %p212, %s12, 1
        %s214 = smul.addr %s213, 4
        %s215 = scalar_lea.vmem %s0, %s214
      $region28: #{transformer_forward.34} parent=23 // pred_fallthru
        _
      // Predicated region
      $region29: #{transformer_forward.34} parent=23 // pred_check
        %p216 = pneg %p58
      $region30: #{transformer_forward.34} parent=23 // pred_check_branch
        %218 = sbr.rel (%p216) target = $region32
      $region31: #{transformer_forward.34} parent=23 // pred_region
        %p219 = scmp.lt.s32.totalorder %s12, 1
        %s220 = scalar_select %p219, %s12, 1
        %s221 = smul.addr %s220, 4
        %s222 = scalar_lea.vmem %s1, %s221
      $region32: #{transformer_forward.34} parent=23 // pred_fallthru
        _
      // Predicated region
      $region33: #{transformer_forward.34} parent=23 // pred_check
        %p223 = pneg %p84
      $region34: #{transformer_forward.34} parent=23 // pred_check_branch
        %225 = sbr.rel (%p223) target = $region36
      $region35: #{transformer_forward.34} parent=23 // pred_region
        %p226 = scmp.lt.s32.totalorder %s12, 1
        %s227 = scalar_select %p226, %s12, 1
        %s228 = smul.addr %s227, 4
        %s229 = scalar_lea.vmem %s2, %s228
      $region36: #{transformer_forward.34} parent=23 // pred_fallthru
        _
      // Predicated region
      $region37: #{transformer_forward.34} parent=23 // pred_check
        %p230 = pneg %p110
      $region38: #{transformer_forward.34} parent=23 // pred_check_branch
        %232 = sbr.rel (%p230) target = $region40
      $region39: #{transformer_forward.34} parent=23 // pred_region
        %p233 = scmp.lt.s32.totalorder %s12, 1
        %s234 = scalar_select %p233, %s12, 1
        %s235 = scalar_lea.vmem %s3, %s234
      $region40: #{transformer_forward.34} parent=23 // pred_fallthru
        _
    $region24: #{transformer_forward.34} parent=5 // pred_fallthru
      _
    %p236 = scmp.le.s32.totalorder 1, %s12
    %p237 = scmp.lt.s32.totalorder %s12, 3
    %p238 = pnand %p236, %p237
    %p239 = pneg %p238
    // Predicated region
    $region41: #{transformer_forward.34} parent=5 // pred_check
      _
    $region42: #{transformer_forward.34} parent=5 // pred_check_branch
      %241 = sbr.rel (%p238) target = $region44
    $region43: #{transformer_forward.34} parent=5 // pred_region
      %s242 = ssub.s32 %s12, 1
      %p243 = scmp.lt.s32.totalorder %s17, 1
      %s244 = scalar_select %p243, %s17, 1
      %s245 = smul.addr %s244, 4
      %s246 = scalar_lea.vmem %s0, %s245
      %p247 = pneg %p38
      %p248 = pneg %p35
      %p249 = scmp.lt.s32.totalorder %s17, 1
      %s250 = scalar_select %p249, %s17, 1
      %s251 = smul.addr %s250, 4
      %s252 = scalar_lea.vmem %s1, %s251
      %p253 = pneg %p64
      %p254 = pneg %p61
      %p255 = scmp.lt.s32.totalorder %s17, 1
      %s256 = scalar_select %p255, %s17, 1
      %s257 = smul.addr %s256, 4
      %s258 = scalar_lea.vmem %s2, %s257
      %p259 = pneg %p90
      %p260 = pneg %p87
      %p261 = scmp.lt.s32.totalorder %s17, 1
      %s262 = scalar_select %p261, %s17, 1
      %s263 = scalar_lea.vmem %s3, %s262
      %p264 = pneg %p116
      %p265 = pneg %p113
      %p266 = pneg %p137
      %p267 = pneg %p134
      %p268 = pneg %p158
      %p269 = pneg %p155
      %p270 = pneg %p184
      %p271 = pneg %p181
      %p272 = scmp.lt.s32.totalorder %s17, 1
      %s273 = scalar_select %p272, %s17, 1
      %s274 = smul.addr %s273, 4
      %s275 = scalar_lea.vmem %s6, %s274
      %p276 = scmp.lt.s32.totalorder %s17, 1
      %s277 = scalar_select %p276, %s17, 1
      %s278 = smul.addr %s277, 4
      %s279 = scalar_lea.vmem %s0, %s278
      %p280 = scmp.lt.s32.totalorder %s17, 1
      %s281 = scalar_select %p280, %s17, 1
      %s282 = smul.addr %s281, 4
      %s283 = scalar_lea.vmem %s1, %s282
      %p284 = scmp.lt.s32.totalorder %s17, 1
      %s285 = scalar_select %p284, %s17, 1
      %s286 = smul.addr %s285, 4
      %s287 = scalar_lea.vmem %s2, %s286
      %p288 = scmp.lt.s32.totalorder %s17, 1
      %s289 = scalar_select %p288, %s17, 1
      %s290 = scalar_lea.vmem %s3, %s289
      %p291 = scmp.lt.s32.totalorder %s17, 1
      %s292 = scalar_select %p291, %s17, 1
      %s293 = smul.addr %s292, 4
      %s294 = scalar_lea.vmem %s6, %s293
      %v295 = vld [vmem:[%s279] sm:$0xf]
      %v296 = vunpack.c.l.bf16 %v295
      %v297 = vmul.f32 %v296, 0.35355338
      %v298 = vld [vmem:[%s283] sm:$0xf]
      %v299 = vunpack.c.l.bf16 %v298
      %v300 = vld [vmem:[%s287] sm:$0xf]
      %v301 = vunpack.c.l.bf16 %v300
      %v302 = vld [vmem:[%s4] sm:$0xf]
      %v303 = vld [vmem:[%s4 + $0x4] sm:$0xf]
      %v304 = vld [vmem:[%s4 + $0x8] sm:$0xf]
      %v305 = vld [vmem:[%s4 + $0xc] sm:$0xf]
      %v306 = vunpack.c.l.bf16 %v302
      %v307 = vunpack.c.l.bf16 %v303
      %v308 = vunpack.c.l.bf16 %v304
      %v309 = vunpack.c.l.bf16 %v305
      %v310 = vld [vmem:[%s290] sm:$0x1]
      %vm311 = vcmp.gt.f32.partialorder %v310, 0.0
      %vm312 = vcmask 64512
      %v314 = vsel %vm312, %v297, 0
      %v317 = vsel %vm312, %v299, 0
      %319 = vmatprep.subr.mxu0 0.0
      %320 = vmatpush1.xpose.msra.mxu0 0.0
      %321 = vmatprep.subr.mxu0 0.0
      %322 = vmatpush1.xpose.msra.mxu0 0.0
      %323 = vmatprep.subr.mxu0 0.0
      %324 = vmatpush1.xpose.msra.mxu0 0.0
      %325 = vmatprep.subr.mxu0 0.0
      %326 = vmatpush1.xpose.msra.mxu0 0.0
      %327 = vmatprep.subr.mxu0 0.0
      %328 = vmatpush1.xpose.msra.mxu0 0.0
      %329 = vmatprep.subr.mxu0 0.0
      %330 = vmatpush1.xpose.msra.mxu0 0.0
      %331 = vmatprep.subr.mxu0 0.0
      %332 = vmatpush1.xpose.msra.mxu0 0.0
      %333 = vmatprep.subr.mxu0 0.0
      %334 = vmatpush1.xpose.msra.mxu0 0.0
      %335 = vmatprep.subr.mxu0 0.0
      %336 = vmatpush1.xpose.msra.mxu0 0.0
      %337 = vmatprep.subr.mxu0 0.0
      %338 = vmatpush1.xpose.msra.mxu0 0.0
      %339 = vmatprep.subr.mxu0 0.0
      %340 = vmatpush1.xpose.msra.mxu0 0.0
      %341 = vmatprep.subr.mxu0 0.0
      %342 = vmatpush1.xpose.msra.mxu0 0.0
      %343 = vmatprep.subr.mxu0 0.0
      %344 = vmatpush1.xpose.msra.mxu0 0.0
      %345 = vmatprep.subr.mxu0 0.0
      %346 = vmatpush1.xpose.msra.mxu0 0.0
      %347 = vmatprep.subr.mxu0 0.0
      %348 = vmatpush1.xpose.msra.mxu0 0.0
      %349 = vmatprep.subr.mxu0 0.0
      %350 = vmatpush1.xpose.msra.mxu0 %v317
      %351 = vmatprep.subr.mxu0 0.0
      %352 = vmatpush2.xpose.msra.mxu0 0.0
      %353 = vmatprep.subr.mxu0 0.0
      %354 = vmatpush2.xpose.msra.mxu0 0.0
      %355 = vmatprep.subr.mxu0 0.0
      %356 = vmatpush2.xpose.msra.mxu0 0.0
      %357 = vmatprep.subr.mxu0 0.0
      %358 = vmatpush2.xpose.msra.mxu0 0.0
      %359 = vmatprep.subr.mxu0 0.0
      %360 = vmatpush2.xpose.msra.mxu0 0.0
      %361 = vmatprep.subr.mxu0 0.0
      %362 = vmatpush2.xpose.msra.mxu0 0.0
      %363 = vmatprep.subr.mxu0 0.0
      %364 = vmatpush2.xpose.msra.mxu0 0.0
      %365 = vmatprep.subr.mxu0 0.0
      %366 = vmatpush2.xpose.msra.mxu0 0.0
      %367 = vmatprep.subr.mxu0 0.0
      %368 = vmatpush2.xpose.msra.mxu0 0.0
      %369 = vmatprep.subr.mxu0 0.0
      %370 = vmatpush2.xpose.msra.mxu0 0.0
      %371 = vmatprep.subr.mxu0 0.0
      %372 = vmatpush2.xpose.msra.mxu0 0.0
      %373 = vmatprep.subr.mxu0 0.0
      %374 = vmatpush2.xpose.msra.mxu0 0.0
      %375 = vmatprep.subr.mxu0 0.0
      %376 = vmatpush2.xpose.msra.mxu0 0.0
      %377 = vmatprep.subr.mxu0 0.0
      %378 = vmatpush2.xpose.msra.mxu0 0.0
      %379 = vmatprep.subr.mxu0 0.0
      %380 = vmatpush2.xpose.msra.mxu0 0.0
      %381 = vmatprep.subr.mxu0 0.0
      %382 = vmatpush2.xpose.msra.mxu0 0.0
      %383 = vmatprep.mubr.f32.mxu0 0.0
      %384 = vmatmul.mubr.f32.gmra.mxu0 %v314
      %v385 = vpop.f32.mrf.mxu0
      %v386 = vadd.f32 0.0, %v385
      %v387 = vpop.f32.mrf.mxu0
      %388 = vdwg.mxu0
      %v389 = vsel %vm311, 1, 0
      %v390 = vlaneseq
      %v391 = vshrl.u32 %v390, 7
      %v392 = vsub.s32 0, %v391
      %v393 = vrot.slane %v389, %v392
      %vm394 = vcmp.eq.s32.totalorder %v393, 1
      %v395 = vsel %vm394, %v386, -1e+09
      %v396 = vsel %vm312, %v395, -inf
      %397 = vmax.xlane.f32.xlu0 %v396
      %v398 = vpop.xlane.xlu0 %397
      %v399 = vsub.f32 %v395, %v398
      %v400 = vmul.f32 %v399, 1.442695
      %v401 = vpow.pop %v400
      %v402 = vsel %vm312, %v401, 0.0
      %403 = vadd.xlane.f32.xlu0 %v402
      %v404 = vpop.xlane.xlu0 %403
      %v405 = vrcp.pop %v404
      %v406 = vmul.f32 %v401, %v405
      %v408 = vsel %vm312, %v406, 0
      %410 = vmatprep.subr.mxu0 0.0
      %411 = vmatpush1.msra.mxu0 0.0
      %412 = vmatprep.subr.mxu0 0.0
      %413 = vmatpush1.msra.mxu0 0.0
      %414 = vmatprep.subr.mxu0 0.0
      %415 = vmatpush1.msra.mxu0 0.0
      %416 = vmatprep.subr.mxu0 0.0
      %417 = vmatpush1.msra.mxu0 0.0
      %418 = vmatprep.subr.mxu0 0.0
      %419 = vmatpush1.msra.mxu0 0.0
      %420 = vmatprep.subr.mxu0 0.0
      %421 = vmatpush1.msra.mxu0 0.0
      %422 = vmatprep.subr.mxu0 0.0
      %423 = vmatpush1.msra.mxu0 0.0
      %424 = vmatprep.subr.mxu0 0.0
      %425 = vmatpush1.msra.mxu0 0.0
      %426 = vmatprep.subr.mxu0 0.0
      %427 = vmatpush1.msra.mxu0 0.0
      %428 = vmatprep.subr.mxu0 0.0
      %429 = vmatpush1.msra.mxu0 0.0
      %430 = vmatprep.subr.mxu0 0.0
      %431 = vmatpush1.msra.mxu0 0.0
      %432 = vmatprep.subr.mxu0 0.0
      %433 = vmatpush1.msra.mxu0 0.0
      %434 = vmatprep.subr.mxu0 0.0
      %435 = vmatpush1.msra.mxu0 0.0
      %436 = vmatprep.subr.mxu0 0.0
      %437 = vmatpush1.msra.mxu0 0.0
      %438 = vmatprep.subr.mxu0 0.0
      %439 = vmatpush1.msra.mxu0 0.0
      %440 = vmatprep.subr.mxu0 0.0
      %441 = vmatpush1.msra.mxu0 %v301
      %442 = vmatprep.subr.mxu0 0.0
      %443 = vmatpush2.msra.mxu0 0.0
      %444 = vmatprep.subr.mxu0 0.0
      %445 = vmatpush2.msra.mxu0 0.0
      %446 = vmatprep.subr.mxu0 0.0
      %447 = vmatpush2.msra.mxu0 0.0
      %448 = vmatprep.subr.mxu0 0.0
      %449 = vmatpush2.msra.mxu0 0.0
      %450 = vmatprep.subr.mxu0 0.0
      %451 = vmatpush2.msra.mxu0 0.0
      %452 = vmatprep.subr.mxu0 0.0
      %453 = vmatpush2.msra.mxu0 0.0
      %454 = vmatprep.subr.mxu0 0.0
      %455 = vmatpush2.msra.mxu0 0.0
      %456 = vmatprep.subr.mxu0 0.0
      %457 = vmatpush2.msra.mxu0 0.0
      %458 = vmatprep.subr.mxu0 0.0
      %459 = vmatpush2.msra.mxu0 0.0
      %460 = vmatprep.subr.mxu0 0.0
      %461 = vmatpush2.msra.mxu0 0.0
      %462 = vmatprep.subr.mxu0 0.0
      %463 = vmatpush2.msra.mxu0 0.0
      %464 = vmatprep.subr.mxu0 0.0
      %465 = vmatpush2.msra.mxu0 0.0
      %466 = vmatprep.subr.mxu0 0.0
      %467 = vmatpush2.msra.mxu0 0.0
      %468 = vmatprep.subr.mxu0 0.0
      %469 = vmatpush2.msra.mxu0 0.0
      %470 = vmatprep.subr.mxu0 0.0
      %471 = vmatpush2.msra.mxu0 0.0
      %472 = vmatprep.subr.mxu0 0.0
      %473 = vmatpush2.msra.mxu0 0.0
      %474 = vmatprep.mubr.f32.mxu0 0.0
      %475 = vmatmul.mubr.f32.gmra.mxu0 %v408
      %v476 = vpop.f32.mrf.mxu0
      %v477 = vadd.f32 0.0, %v476
      %v478 = vpop.f32.mrf.mxu0
      %479 = vdwg.mxu0
      %480 = vrot.lane.b32.xlu0 %v297, 120
      %v481 = vpop.permute.xlu0 %480
      %482 = vrot.lane.b32.xlu0 %v299, 120
      %v483 = vpop.permute.xlu0 %482
      %v484 = vsel %vm312, %v481, 0
      %v486 = vsel %vm312, %v483, 0
      %488 = vmatprep.subr.mxu0 0.0
      %489 = vmatpush1.xpose.msra.mxu0 0.0
      %490 = vmatprep.subr.mxu0 0.0
      %491 = vmatpush1.xpose.msra.mxu0 0.0
      %492 = vmatprep.subr.mxu0 0.0
      %493 = vmatpush1.xpose.msra.mxu0 0.0
      %494 = vmatprep.subr.mxu0 0.0
      %495 = vmatpush1.xpose.msra.mxu0 0.0
      %496 = vmatprep.subr.mxu0 0.0
      %497 = vmatpush1.xpose.msra.mxu0 0.0
      %498 = vmatprep.subr.mxu0 0.0
      %499 = vmatpush1.xpose.msra.mxu0 0.0
      %500 = vmatprep.subr.mxu0 0.0
      %501 = vmatpush1.xpose.msra.mxu0 0.0
      %502 = vmatprep.subr.mxu0 0.0
      %503 = vmatpush1.xpose.msra.mxu0 0.0
      %504 = vmatprep.subr.mxu0 0.0
      %505 = vmatpush1.xpose.msra.mxu0 0.0
      %506 = vmatprep.subr.mxu0 0.0
      %507 = vmatpush1.xpose.msra.mxu0 0.0
      %508 = vmatprep.subr.mxu0 0.0
      %509 = vmatpush1.xpose.msra.mxu0 0.0
      %510 = vmatprep.subr.mxu0 0.0
      %511 = vmatpush1.xpose.msra.mxu0 0.0
      %512 = vmatprep.subr.mxu0 0.0
      %513 = vmatpush1.xpose.msra.mxu0 0.0
      %514 = vmatprep.subr.mxu0 0.0
      %515 = vmatpush1.xpose.msra.mxu0 0.0
      %516 = vmatprep.subr.mxu0 0.0
      %517 = vmatpush1.xpose.msra.mxu0 0.0
      %518 = vmatprep.subr.mxu0 0.0
      %519 = vmatpush1.xpose.msra.mxu0 %v486
      %520 = vmatprep.subr.mxu0 0.0
      %521 = vmatpush2.xpose.msra.mxu0 0.0
      %522 = vmatprep.subr.mxu0 0.0
      %523 = vmatpush2.xpose.msra.mxu0 0.0
      %524 = vmatprep.subr.mxu0 0.0
      %525 = vmatpush2.xpose.msra.mxu0 0.0
      %526 = vmatprep.subr.mxu0 0.0
      %527 = vmatpush2.xpose.msra.mxu0 0.0
      %528 = vmatprep.subr.mxu0 0.0
      %529 = vmatpush2.xpose.msra.mxu0 0.0
      %530 = vmatprep.subr.mxu0 0.0
      %531 = vmatpush2.xpose.msra.mxu0 0.0
      %532 = vmatprep.subr.mxu0 0.0
      %533 = vmatpush2.xpose.msra.mxu0 0.0
      %534 = vmatprep.subr.mxu0 0.0
      %535 = vmatpush2.xpose.msra.mxu0 0.0
      %536 = vmatprep.subr.mxu0 0.0
      %537 = vmatpush2.xpose.msra.mxu0 0.0
      %538 = vmatprep.subr.mxu0 0.0
      %539 = vmatpush2.xpose.msra.mxu0 0.0
      %540 = vmatprep.subr.mxu0 0.0
      %541 = vmatpush2.xpose.msra.mxu0 0.0
      %542 = vmatprep.subr.mxu0 0.0
      %543 = vmatpush2.xpose.msra.mxu0 0.0
      %544 = vmatprep.subr.mxu0 0.0
      %545 = vmatpush2.xpose.msra.mxu0 0.0
      %546 = vmatprep.subr.mxu0 0.0
      %547 = vmatpush2.xpose.msra.mxu0 0.0
      %548 = vmatprep.subr.mxu0 0.0
      %549 = vmatpush2.xpose.msra.mxu0 0.0
      %550 = vmatprep.subr.mxu0 0.0
      %551 = vmatpush2.xpose.msra.mxu0 0.0
      %552 = vmatprep.mubr.f32.mxu0 0.0
      %553 = vmatmul.mubr.f32.gmra.mxu0 %v484
      %v554 = vpop.f32.mrf.mxu0
      %v555 = vadd.f32 0.0, %v554
      %v556 = vpop.f32.mrf.mxu0
      %557 = vdwg.mxu0
      %v558 = vsel %vm394, %v555, -1e+09
      %v559 = vsel %vm312, %v558, -inf
      %560 = vmax.xlane.f32.xlu0 %v559
      %v561 = vpop.xlane.xlu0 %560
      %v562 = vsub.f32 %v558, %v561
      %v563 = vmul.f32 %v562, 1.442695
      %v564 = vpow.pop %v563
      %v565 = vsel %vm312, %v564, 0.0
      %566 = vadd.xlane.f32.xlu0 %v565
      %v567 = vpop.xlane.xlu0 %566
      %v568 = vrcp.pop %v567
      %v569 = vmul.f32 %v564, %v568
      %571 = vrot.lane.b32.xlu0 %v301, 120
      %v572 = vpop.permute.xlu0 %571
      %v575 = vsel %vm312, %v569, 0
      %577 = vmatprep.subr.mxu0 0.0
      %578 = vmatpush1.msra.mxu0 0.0
      %579 = vmatprep.subr.mxu0 0.0
      %580 = vmatpush1.msra.mxu0 0.0
      %581 = vmatprep.subr.mxu0 0.0
      %582 = vmatpush1.msra.mxu0 0.0
      %583 = vmatprep.subr.mxu0 0.0
      %584 = vmatpush1.msra.mxu0 0.0
      %585 = vmatprep.subr.mxu0 0.0
      %586 = vmatpush1.msra.mxu0 0.0
      %587 = vmatprep.subr.mxu0 0.0
      %588 = vmatpush1.msra.mxu0 0.0
      %589 = vmatprep.subr.mxu0 0.0
      %590 = vmatpush1.msra.mxu0 0.0
      %591 = vmatprep.subr.mxu0 0.0
      %592 = vmatpush1.msra.mxu0 0.0
      %593 = vmatprep.subr.mxu0 0.0
      %594 = vmatpush1.msra.mxu0 0.0
      %595 = vmatprep.subr.mxu0 0.0
      %596 = vmatpush1.msra.mxu0 0.0
      %597 = vmatprep.subr.mxu0 0.0
      %598 = vmatpush1.msra.mxu0 0.0
      %599 = vmatprep.subr.mxu0 0.0
      %600 = vmatpush1.msra.mxu0 0.0
      %601 = vmatprep.subr.mxu0 0.0
      %602 = vmatpush1.msra.mxu0 0.0
      %603 = vmatprep.subr.mxu0 0.0
      %604 = vmatpush1.msra.mxu0 0.0
      %605 = vmatprep.subr.mxu0 0.0
      %606 = vmatpush1.msra.mxu0 0.0
      %607 = vmatprep.subr.mxu0 0.0
      %608 = vmatpush1.msra.mxu0 %v572
      %609 = vmatprep.subr.mxu0 0.0
      %610 = vmatpush2.msra.mxu0 0.0
      %611 = vmatprep.subr.mxu0 0.0
      %612 = vmatpush2.msra.mxu0 0.0
      %613 = vmatprep.subr.mxu0 0.0
      %614 = vmatpush2.msra.mxu0 0.0
      %615 = vmatprep.subr.mxu0 0.0
      %616 = vmatpush2.msra.mxu0 0.0
      %617 = vmatprep.subr.mxu0 0.0
      %618 = vmatpush2.msra.mxu0 0.0
      %619 = vmatprep.subr.mxu0 0.0
      %620 = vmatpush2.msra.mxu0 0.0
      %621 = vmatprep.subr.mxu0 0.0
      %622 = vmatpush2.msra.mxu0 0.0
      %623 = vmatprep.subr.mxu0 0.0
      %624 = vmatpush2.msra.mxu0 0.0
      %625 = vmatprep.subr.mxu0 0.0
      %626 = vmatpush2.msra.mxu0 0.0
      %627 = vmatprep.subr.mxu0 0.0
      %628 = vmatpush2.msra.mxu0 0.0
      %629 = vmatprep.subr.mxu0 0.0
      %630 = vmatpush2.msra.mxu0 0.0
      %631 = vmatprep.subr.mxu0 0.0
      %632 = vmatpush2.msra.mxu0 0.0
      %633 = vmatprep.subr.mxu0 0.0
      %634 = vmatpush2.msra.mxu0 0.0
      %635 = vmatprep.subr.mxu0 0.0
      %636 = vmatpush2.msra.mxu0 0.0
      %637 = vmatprep.subr.mxu0 0.0
      %638 = vmatpush2.msra.mxu0 0.0
      %639 = vmatprep.subr.mxu0 0.0
      %640 = vmatpush2.msra.mxu0 0.0
      %641 = vmatprep.mubr.f32.mxu0 0.0
      %642 = vmatmul.mubr.f32.gmra.mxu0 %v575
      %v643 = vpop.f32.mrf.mxu0
      %v644 = vadd.f32 0.0, %v643
      %v645 = vpop.f32.mrf.mxu0
      %646 = vdwg.mxu0
      %v648 = vsel %vm312, %v644, 0
      %650 = vmatprep.subr.mxu0 0.0
      %651 = vmatpush1.msra.mxu0 0.0
      %652 = vmatprep.subr.mxu0 0.0
      %653 = vmatpush1.msra.mxu0 0.0
      %654 = vmatprep.subr.mxu0 0.0
      %655 = vmatpush1.msra.mxu0 0.0
      %656 = vmatprep.subr.mxu0 0.0
      %657 = vmatpush1.msra.mxu0 0.0
      %658 = vmatprep.subr.mxu0 0.0
      %659 = vmatpush1.msra.mxu0 0.0
      %660 = vmatprep.subr.mxu0 0.0
      %661 = vmatpush1.msra.mxu0 0.0
      %662 = vmatprep.subr.mxu0 0.0
      %663 = vmatpush1.msra.mxu0 0.0
      %664 = vmatprep.subr.mxu0 0.0
      %665 = vmatpush1.msra.mxu0 0.0
      %666 = vmatprep.subr.mxu0 0.0
      %667 = vmatpush1.msra.mxu0 0.0
      %668 = vmatprep.subr.mxu0 0.0
      %669 = vmatpush1.msra.mxu0 0.0
      %670 = vmatprep.subr.mxu0 0.0
      %671 = vmatpush1.msra.mxu0 0.0
      %672 = vmatprep.subr.mxu0 0.0
      %673 = vmatpush1.msra.mxu0 0.0
      %674 = vmatprep.subr.mxu0 0.0
      %675 = vmatpush1.msra.mxu0 0.0
      %676 = vmatprep.subr.mxu0 0.0
      %677 = vmatpush1.msra.mxu0 0.0
      %678 = vmatprep.subr.mxu0 0.0
      %679 = vmatpush1.msra.mxu0 0.0
      %680 = vmatprep.subr.mxu0 0.0
      %681 = vmatpush1.msra.mxu0 %v307
      %682 = vmatprep.subr.mxu0 0.0
      %683 = vmatpush2.msra.mxu0 0.0
      %684 = vmatprep.subr.mxu0 0.0
      %685 = vmatpush2.msra.mxu0 0.0
      %686 = vmatprep.subr.mxu0 0.0
      %687 = vmatpush2.msra.mxu0 0.0
      %688 = vmatprep.subr.mxu0 0.0
      %689 = vmatpush2.msra.mxu0 0.0
      %690 = vmatprep.subr.mxu0 0.0
      %691 = vmatpush2.msra.mxu0 0.0
      %692 = vmatprep.subr.mxu0 0.0
      %693 = vmatpush2.msra.mxu0 0.0
      %694 = vmatprep.subr.mxu0 0.0
      %695 = vmatpush2.msra.mxu0 0.0
      %696 = vmatprep.subr.mxu0 0.0
      %697 = vmatpush2.msra.mxu0 0.0
      %698 = vmatprep.subr.mxu0 0.0
      %699 = vmatpush2.msra.mxu0 0.0
      %700 = vmatprep.subr.mxu0 0.0
      %701 = vmatpush2.msra.mxu0 0.0
      %702 = vmatprep.subr.mxu0 0.0
      %703 = vmatpush2.msra.mxu0 0.0
      %704 = vmatprep.subr.mxu0 0.0
      %705 = vmatpush2.msra.mxu0 0.0
      %706 = vmatprep.subr.mxu0 0.0
      %707 = vmatpush2.msra.mxu0 0.0
      %708 = vmatprep.subr.mxu0 0.0
      %709 = vmatpush2.msra.mxu0 0.0
      %710 = vmatprep.subr.mxu0 0.0
      %711 = vmatpush2.msra.mxu0 0.0
      %712 = vmatprep.subr.mxu0 0.0
      %713 = vmatpush2.msra.mxu0 0.0
      %714 = vmatprep.mubr.f32.mxu0 0.0
      %715 = vmatmul.mubr.f32.gmra.mxu0 %v648
      %v716 = vpop.f32.mrf.mxu0
      %v717 = vadd.f32 0.0, %v716
      %v718 = vpop.f32.mrf.mxu0
      %719 = vdwg.mxu0
      %v721 = vsel %vm312, %v477, 0
      %723 = vmatprep.subr.mxu0 0.0
      %724 = vmatpush1.msra.mxu0 0.0
      %725 = vmatprep.subr.mxu0 0.0
      %726 = vmatpush1.msra.mxu0 0.0
      %727 = vmatprep.subr.mxu0 0.0
      %728 = vmatpush1.msra.mxu0 0.0
      %729 = vmatprep.subr.mxu0 0.0
      %730 = vmatpush1.msra.mxu0 0.0
      %731 = vmatprep.subr.mxu0 0.0
      %732 = vmatpush1.msra.mxu0 0.0
      %733 = vmatprep.subr.mxu0 0.0
      %734 = vmatpush1.msra.mxu0 0.0
      %735 = vmatprep.subr.mxu0 0.0
      %736 = vmatpush1.msra.mxu0 0.0
      %737 = vmatprep.subr.mxu0 0.0
      %738 = vmatpush1.msra.mxu0 0.0
      %739 = vmatprep.subr.mxu0 0.0
      %740 = vmatpush1.msra.mxu0 0.0
      %741 = vmatprep.subr.mxu0 0.0
      %742 = vmatpush1.msra.mxu0 0.0
      %743 = vmatprep.subr.mxu0 0.0
      %744 = vmatpush1.msra.mxu0 0.0
      %745 = vmatprep.subr.mxu0 0.0
      %746 = vmatpush1.msra.mxu0 0.0
      %747 = vmatprep.subr.mxu0 0.0
      %748 = vmatpush1.msra.mxu0 0.0
      %749 = vmatprep.subr.mxu0 0.0
      %750 = vmatpush1.msra.mxu0 0.0
      %751 = vmatprep.subr.mxu0 0.0
      %752 = vmatpush1.msra.mxu0 0.0
      %753 = vmatprep.subr.mxu0 0.0
      %754 = vmatpush1.msra.mxu0 %v306
      %755 = vmatprep.subr.mxu0 0.0
      %756 = vmatpush2.msra.mxu0 0.0
      %757 = vmatprep.subr.mxu0 0.0
      %758 = vmatpush2.msra.mxu0 0.0
      %759 = vmatprep.subr.mxu0 0.0
      %760 = vmatpush2.msra.mxu0 0.0
      %761 = vmatprep.subr.mxu0 0.0
      %762 = vmatpush2.msra.mxu0 0.0
      %763 = vmatprep.subr.mxu0 0.0
      %764 = vmatpush2.msra.mxu0 0.0
      %765 = vmatprep.subr.mxu0 0.0
      %766 = vmatpush2.msra.mxu0 0.0
      %767 = vmatprep.subr.mxu0 0.0
      %768 = vmatpush2.msra.mxu0 0.0
      %769 = vmatprep.subr.mxu0 0.0
      %770 = vmatpush2.msra.mxu0 0.0
      %771 = vmatprep.subr.mxu0 0.0
      %772 = vmatpush2.msra.mxu0 0.0
      %773 = vmatprep.subr.mxu0 0.0
      %774 = vmatpush2.msra.mxu0 0.0
      %775 = vmatprep.subr.mxu0 0.0
      %776 = vmatpush2.msra.mxu0 0.0
      %777 = vmatprep.subr.mxu0 0.0
      %778 = vmatpush2.msra.mxu0 0.0
      %779 = vmatprep.subr.mxu0 0.0
      %780 = vmatpush2.msra.mxu0 0.0
      %781 = vmatprep.subr.mxu0 0.0
      %782 = vmatpush2.msra.mxu0 0.0
      %783 = vmatprep.subr.mxu0 0.0
      %784 = vmatpush2.msra.mxu0 0.0
      %785 = vmatprep.subr.mxu0 0.0
      %786 = vmatpush2.msra.mxu0 0.0
      %787 = vmatprep.mubr.f32.mxu0 0.0
      %788 = vmatmul.mubr.f32.gmra.mxu0 %v721
      %v789 = vpop.f32.mrf.mxu0
      %v790 = vadd.f32 %v717, %v789
      %v791 = vpop.f32.mrf.mxu0
      %792 = vdwg.mxu0
      %793 = vrot.lane.b32.xlu0 %v297, 112
      %v794 = vpop.permute.xlu0 %793
      %795 = vrot.lane.b32.xlu0 %v299, 112
      %v796 = vpop.permute.xlu0 %795
      %v797 = vsel %vm312, %v794, 0
      %v799 = vsel %vm312, %v796, 0
      %801 = vmatprep.subr.mxu0 0.0
      %802 = vmatpush1.xpose.msra.mxu0 0.0
      %803 = vmatprep.subr.mxu0 0.0
      %804 = vmatpush1.xpose.msra.mxu0 0.0
      %805 = vmatprep.subr.mxu0 0.0
      %806 = vmatpush1.xpose.msra.mxu0 0.0
      %807 = vmatprep.subr.mxu0 0.0
      %808 = vmatpush1.xpose.msra.mxu0 0.0
      %809 = vmatprep.subr.mxu0 0.0
      %810 = vmatpush1.xpose.msra.mxu0 0.0
      %811 = vmatprep.subr.mxu0 0.0
      %812 = vmatpush1.xpose.msra.mxu0 0.0
      %813 = vmatprep.subr.mxu0 0.0
      %814 = vmatpush1.xpose.msra.mxu0 0.0
      %815 = vmatprep.subr.mxu0 0.0
      %816 = vmatpush1.xpose.msra.mxu0 0.0
      %817 = vmatprep.subr.mxu0 0.0
      %818 = vmatpush1.xpose.msra.mxu0 0.0
      %819 = vmatprep.subr.mxu0 0.0
      %820 = vmatpush1.xpose.msra.mxu0 0.0
      %821 = vmatprep.subr.mxu0 0.0
      %822 = vmatpush1.xpose.msra.mxu0 0.0
      %823 = vmatprep.subr.mxu0 0.0
      %824 = vmatpush1.xpose.msra.mxu0 0.0
      %825 = vmatprep.subr.mxu0 0.0
      %826 = vmatpush1.xpose.msra.mxu0 0.0
      %827 = vmatprep.subr.mxu0 0.0
      %828 = vmatpush1.xpose.msra.mxu0 0.0
      %829 = vmatprep.subr.mxu0 0.0
      %830 = vmatpush1.xpose.msra.mxu0 0.0
      %831 = vmatprep.subr.mxu0 0.0
      %832 = vmatpush1.xpose.msra.mxu0 %v799
      %833 = vmatprep.subr.mxu0 0.0
      %834 = vmatpush2.xpose.msra.mxu0 0.0
      %835 = vmatprep.subr.mxu0 0.0
      %836 = vmatpush2.xpose.msra.mxu0 0.0
      %837 = vmatprep.subr.mxu0 0.0
      %838 = vmatpush2.xpose.msra.mxu0 0.0
      %839 = vmatprep.subr.mxu0 0.0
      %840 = vmatpush2.xpose.msra.mxu0 0.0
      %841 = vmatprep.subr.mxu0 0.0
      %842 = vmatpush2.xpose.msra.mxu0 0.0
      %843 = vmatprep.subr.mxu0 0.0
      %844 = vmatpush2.xpose.msra.mxu0 0.0
      %845 = vmatprep.subr.mxu0 0.0
      %846 = vmatpush2.xpose.msra.mxu0 0.0
      %847 = vmatprep.subr.mxu0 0.0
      %848 = vmatpush2.xpose.msra.mxu0 0.0
      %849 = vmatprep.subr.mxu0 0.0
      %850 = vmatpush2.xpose.msra.mxu0 0.0
      %851 = vmatprep.subr.mxu0 0.0
      %852 = vmatpush2.xpose.msra.mxu0 0.0
      %853 = vmatprep.subr.mxu0 0.0
      %854 = vmatpush2.xpose.msra.mxu0 0.0
      %855 = vmatprep.subr.mxu0 0.0
      %856 = vmatpush2.xpose.msra.mxu0 0.0
      %857 = vmatprep.subr.mxu0 0.0
      %858 = vmatpush2.xpose.msra.mxu0 0.0
      %859 = vmatprep.subr.mxu0 0.0
      %860 = vmatpush2.xpose.msra.mxu0 0.0
      %861 = vmatprep.subr.mxu0 0.0
      %862 = vmatpush2.xpose.msra.mxu0 0.0
      %863 = vmatprep.subr.mxu0 0.0
      %864 = vmatpush2.xpose.msra.mxu0 0.0
      %865 = vmatprep.mubr.f32.mxu0 0.0
      %866 = vmatmul.mubr.f32.gmra.mxu0 %v797
      %v867 = vpop.f32.mrf.mxu0
      %v868 = vadd.f32 0.0, %v867
      %v869 = vpop.f32.mrf.mxu0
      %870 = vdwg.mxu0
      %v871 = vsel %vm394, %v868, -1e+09
      %v872 = vsel %vm312, %v871, -inf
      %873 = vmax.xlane.f32.xlu0 %v872
      %v874 = vpop.xlane.xlu0 %873
      %v875 = vsub.f32 %v871, %v874
      %v876 = vmul.f32 %v875, 1.442695
      %v877 = vpow.pop %v876
      %v878 = vsel %vm312, %v877, 0.0
      %879 = vadd.xlane.f32.xlu0 %v878
      %v880 = vpop.xlane.xlu0 %879
      %v881 = vrcp.pop %v880
      %v882 = vmul.f32 %v877, %v881
      %883 = vrot.lane.b32.xlu0 %v301, 112
      %v884 = vpop.permute.xlu0 %883
      %v887 = vsel %vm312, %v882, 0
      %889 = vmatprep.subr.mxu0 0.0
      %890 = vmatpush1.msra.mxu0 0.0
      %891 = vmatprep.subr.mxu0 0.0
      %892 = vmatpush1.msra.mxu0 0.0
      %893 = vmatprep.subr.mxu0 0.0
      %894 = vmatpush1.msra.mxu0 0.0
      %895 = vmatprep.subr.mxu0 0.0
      %896 = vmatpush1.msra.mxu0 0.0
      %897 = vmatprep.subr.mxu0 0.0
      %898 = vmatpush1.msra.mxu0 0.0
      %899 = vmatprep.subr.mxu0 0.0
      %900 = vmatpush1.msra.mxu0 0.0
      %901 = vmatprep.subr.mxu0 0.0
      %902 = vmatpush1.msra.mxu0 0.0
      %903 = vmatprep.subr.mxu0 0.0
      %904 = vmatpush1.msra.mxu0 0.0
      %905 = vmatprep.subr.mxu0 0.0
      %906 = vmatpush1.msra.mxu0 0.0
      %907 = vmatprep.subr.mxu0 0.0
      %908 = vmatpush1.msra.mxu0 0.0
      %909 = vmatprep.subr.mxu0 0.0
      %910 = vmatpush1.msra.mxu0 0.0
      %911 = vmatprep.subr.mxu0 0.0
      %912 = vmatpush1.msra.mxu0 0.0
      %913 = vmatprep.subr.mxu0 0.0
      %914 = vmatpush1.msra.mxu0 0.0
      %915 = vmatprep.subr.mxu0 0.0
      %916 = vmatpush1.msra.mxu0 0.0
      %917 = vmatprep.subr.mxu0 0.0
      %918 = vmatpush1.msra.mxu0 0.0
      %919 = vmatprep.subr.mxu0 0.0
      %920 = vmatpush1.msra.mxu0 %v884
      %921 = vmatprep.subr.mxu0 0.0
      %922 = vmatpush2.msra.mxu0 0.0
      %923 = vmatprep.subr.mxu0 0.0
      %924 = vmatpush2.msra.mxu0 0.0
      %925 = vmatprep.subr.mxu0 0.0
      %926 = vmatpush2.msra.mxu0 0.0
      %927 = vmatprep.subr.mxu0 0.0
      %928 = vmatpush2.msra.mxu0 0.0
      %929 = vmatprep.subr.mxu0 0.0
      %930 = vmatpush2.msra.mxu0 0.0
      %931 = vmatprep.subr.mxu0 0.0
      %932 = vmatpush2.msra.mxu0 0.0
      %933 = vmatprep.subr.mxu0 0.0
      %934 = vmatpush2.msra.mxu0 0.0
      %935 = vmatprep.subr.mxu0 0.0
      %936 = vmatpush2.msra.mxu0 0.0
      %937 = vmatprep.subr.mxu0 0.0
      %938 = vmatpush2.msra.mxu0 0.0
      %939 = vmatprep.subr.mxu0 0.0
      %940 = vmatpush2.msra.mxu0 0.0
      %941 = vmatprep.subr.mxu0 0.0
      %942 = vmatpush2.msra.mxu0 0.0
      %943 = vmatprep.subr.mxu0 0.0
      %944 = vmatpush2.msra.mxu0 0.0
      %945 = vmatprep.subr.mxu0 0.0
      %946 = vmatpush2.msra.mxu0 0.0
      %947 = vmatprep.subr.mxu0 0.0
      %948 = vmatpush2.msra.mxu0 0.0
      %949 = vmatprep.subr.mxu0 0.0
      %950 = vmatpush2.msra.mxu0 0.0
      %951 = vmatprep.subr.mxu0 0.0
      %952 = vmatpush2.msra.mxu0 0.0
      %953 = vmatprep.mubr.f32.mxu0 0.0
      %954 = vmatmul.mubr.f32.gmra.mxu0 %v887
      %v955 = vpop.f32.mrf.mxu0
      %v956 = vadd.f32 0.0, %v955
      %v957 = vpop.f32.mrf.mxu0
      %958 = vdwg.mxu0
      %v960 = vsel %vm312, %v956, 0
      %962 = vmatprep.subr.mxu0 0.0
      %963 = vmatpush1.msra.mxu0 0.0
      %964 = vmatprep.subr.mxu0 0.0
      %965 = vmatpush1.msra.mxu0 0.0
      %966 = vmatprep.subr.mxu0 0.0
      %967 = vmatpush1.msra.mxu0 0.0
      %968 = vmatprep.subr.mxu0 0.0
      %969 = vmatpush1.msra.mxu0 0.0
      %970 = vmatprep.subr.mxu0 0.0
      %971 = vmatpush1.msra.mxu0 0.0
      %972 = vmatprep.subr.mxu0 0.0
      %973 = vmatpush1.msra.mxu0 0.0
      %974 = vmatprep.subr.mxu0 0.0
      %975 = vmatpush1.msra.mxu0 0.0
      %976 = vmatprep.subr.mxu0 0.0
      %977 = vmatpush1.msra.mxu0 0.0
      %978 = vmatprep.subr.mxu0 0.0
      %979 = vmatpush1.msra.mxu0 0.0
      %980 = vmatprep.subr.mxu0 0.0
      %981 = vmatpush1.msra.mxu0 0.0
      %982 = vmatprep.subr.mxu0 0.0
      %983 = vmatpush1.msra.mxu0 0.0
      %984 = vmatprep.subr.mxu0 0.0
      %985 = vmatpush1.msra.mxu0 0.0
      %986 = vmatprep.subr.mxu0 0.0
      %987 = vmatpush1.msra.mxu0 0.0
      %988 = vmatprep.subr.mxu0 0.0
      %989 = vmatpush1.msra.mxu0 0.0
      %990 = vmatprep.subr.mxu0 0.0
      %991 = vmatpush1.msra.mxu0 0.0
      %992 = vmatprep.subr.mxu0 0.0
      %993 = vmatpush1.msra.mxu0 %v308
      %994 = vmatprep.subr.mxu0 0.0
      %995 = vmatpush2.msra.mxu0 0.0
      %996 = vmatprep.subr.mxu0 0.0
      %997 = vmatpush2.msra.mxu0 0.0
      %998 = vmatprep.subr.mxu0 0.0
      %999 = vmatpush2.msra.mxu0 0.0
      %1000 = vmatprep.subr.mxu0 0.0
      %1001 = vmatpush2.msra.mxu0 0.0
      %1002 = vmatprep.subr.mxu0 0.0
      %1003 = vmatpush2.msra.mxu0 0.0
      %1004 = vmatprep.subr.mxu0 0.0
      %1005 = vmatpush2.msra.mxu0 0.0
      %1006 = vmatprep.subr.mxu0 0.0
      %1007 = vmatpush2.msra.mxu0 0.0
      %1008 = vmatprep.subr.mxu0 0.0
      %1009 = vmatpush2.msra.mxu0 0.0
      %1010 = vmatprep.subr.mxu0 0.0
      %1011 = vmatpush2.msra.mxu0 0.0
      %1012 = vmatprep.subr.mxu0 0.0
      %1013 = vmatpush2.msra.mxu0 0.0
      %1014 = vmatprep.subr.mxu0 0.0
      %1015 = vmatpush2.msra.mxu0 0.0
      %1016 = vmatprep.subr.mxu0 0.0
      %1017 = vmatpush2.msra.mxu0 0.0
      %1018 = vmatprep.subr.mxu0 0.0
      %1019 = vmatpush2.msra.mxu0 0.0
      %1020 = vmatprep.subr.mxu0 0.0
      %1021 = vmatpush2.msra.mxu0 0.0
      %1022 = vmatprep.subr.mxu0 0.0
      %1023 = vmatpush2.msra.mxu0 0.0
      %1024 = vmatprep.subr.mxu0 0.0
      %1025 = vmatpush2.msra.mxu0 0.0
      %1026 = vmatprep.mubr.f32.mxu0 0.0
      %1027 = vmatmul.mubr.f32.gmra.mxu0 %v960
      %v1028 = vpop.f32.mrf.mxu0
      %v1029 = vadd.f32 0.0, %v1028
      %v1030 = vpop.f32.mrf.mxu0
      %1031 = vdwg.mxu0
      %v1032 = vadd.f32 %v790, %v1029
      %1033 = vrot.lane.b32.xlu0 %v297, 104
      %v1034 = vpop.permute.xlu0 %1033
      %1035 = vrot.lane.b32.xlu0 %v299, 104
      %v1036 = vpop.permute.xlu0 %1035
      %v1037 = vsel %vm312, %v1034, 0
      %v1039 = vsel %vm312, %v1036, 0
      %1041 = vmatprep.subr.mxu0 0.0
      %1042 = vmatpush1.xpose.msra.mxu0 0.0
      %1043 = vmatprep.subr.mxu0 0.0
      %1044 = vmatpush1.xpose.msra.mxu0 0.0
      %1045 = vmatprep.subr.mxu0 0.0
      %1046 = vmatpush1.xpose.msra.mxu0 0.0
      %1047 = vmatprep.subr.mxu0 0.0
      %1048 = vmatpush1.xpose.msra.mxu0 0.0
      %1049 = vmatprep.subr.mxu0 0.0
      %1050 = vmatpush1.xpose.msra.mxu0 0.0
      %1051 = vmatprep.subr.mxu0 0.0
      %1052 = vmatpush1.xpose.msra.mxu0 0.0
      %1053 = vmatprep.subr.mxu0 0.0
      %1054 = vmatpush1.xpose.msra.mxu0 0.0
      %1055 = vmatprep.subr.mxu0 0.0
      %1056 = vmatpush1.xpose.msra.mxu0 0.0
      %1057 = vmatprep.subr.mxu0 0.0
      %1058 = vmatpush1.xpose.msra.mxu0 0.0
      %1059 = vmatprep.subr.mxu0 0.0
      %1060 = vmatpush1.xpose.msra.mxu0 0.0
      %1061 = vmatprep.subr.mxu0 0.0
      %1062 = vmatpush1.xpose.msra.mxu0 0.0
      %1063 = vmatprep.subr.mxu0 0.0
      %1064 = vmatpush1.xpose.msra.mxu0 0.0
      %1065 = vmatprep.subr.mxu0 0.0
      %1066 = vmatpush1.xpose.msra.mxu0 0.0
      %1067 = vmatprep.subr.mxu0 0.0
      %1068 = vmatpush1.xpose.msra.mxu0 0.0
      %1069 = vmatprep.subr.mxu0 0.0
      %1070 = vmatpush1.xpose.msra.mxu0 0.0
      %1071 = vmatprep.subr.mxu0 0.0
      %1072 = vmatpush1.xpose.msra.mxu0 %v1039
      %1073 = vmatprep.subr.mxu0 0.0
      %1074 = vmatpush2.xpose.msra.mxu0 0.0
      %1075 = vmatprep.subr.mxu0 0.0
      %1076 = vmatpush2.xpose.msra.mxu0 0.0
      %1077 = vmatprep.subr.mxu0 0.0
      %1078 = vmatpush2.xpose.msra.mxu0 0.0
      %1079 = vmatprep.subr.mxu0 0.0
      %1080 = vmatpush2.xpose.msra.mxu0 0.0
      %1081 = vmatprep.subr.mxu0 0.0
      %1082 = vmatpush2.xpose.msra.mxu0 0.0
      %1083 = vmatprep.subr.mxu0 0.0
      %1084 = vmatpush2.xpose.msra.mxu0 0.0
      %1085 = vmatprep.subr.mxu0 0.0
      %1086 = vmatpush2.xpose.msra.mxu0 0.0
      %1087 = vmatprep.subr.mxu0 0.0
      %1088 = vmatpush2.xpose.msra.mxu0 0.0
      %1089 = vmatprep.subr.mxu0 0.0
      %1090 = vmatpush2.xpose.msra.mxu0 0.0
      %1091 = vmatprep.subr.mxu0 0.0
      %1092 = vmatpush2.xpose.msra.mxu0 0.0
      %1093 = vmatprep.subr.mxu0 0.0
      %1094 = vmatpush2.xpose.msra.mxu0 0.0
      %1095 = vmatprep.subr.mxu0 0.0
      %1096 = vmatpush2.xpose.msra.mxu0 0.0
      %1097 = vmatprep.subr.mxu0 0.0
      %1098 = vmatpush2.xpose.msra.mxu0 0.0
      %1099 = vmatprep.subr.mxu0 0.0
      %1100 = vmatpush2.xpose.msra.mxu0 0.0
      %1101 = vmatprep.subr.mxu0 0.0
      %1102 = vmatpush2.xpose.msra.mxu0 0.0
      %1103 = vmatprep.subr.mxu0 0.0
      %1104 = vmatpush2.xpose.msra.mxu0 0.0
      %1105 = vmatprep.mubr.f32.mxu0 0.0
      %1106 = vmatmul.mubr.f32.gmra.mxu0 %v1037
      %v1107 = vpop.f32.mrf.mxu0
      %v1108 = vadd.f32 0.0, %v1107
      %v1109 = vpop.f32.mrf.mxu0
      %1110 = vdwg.mxu0
      %v1111 = vsel %vm394, %v1108, -1e+09
      %v1112 = vsel %vm312, %v1111, -inf
      %1113 = vmax.xlane.f32.xlu0 %v1112
      %v1114 = vpop.xlane.xlu0 %1113
      %v1115 = vsub.f32 %v1111, %v1114
      %v1116 = vmul.f32 %v1115, 1.442695
      %v1117 = vpow.pop %v1116
      %v1118 = vsel %vm312, %v1117, 0.0
      %1119 = vadd.xlane.f32.xlu0 %v1118
      %v1120 = vpop.xlane.xlu0 %1119
      %v1121 = vrcp.pop %v1120
      %v1122 = vmul.f32 %v1117, %v1121
      %1123 = vrot.lane.b32.xlu0 %v301, 104
      %v1124 = vpop.permute.xlu0 %1123
      %v1127 = vsel %vm312, %v1122, 0
      %1129 = vmatprep.subr.mxu0 0.0
      %1130 = vmatpush1.msra.mxu0 0.0
      %1131 = vmatprep.subr.mxu0 0.0
      %1132 = vmatpush1.msra.mxu0 0.0
      %1133 = vmatprep.subr.mxu0 0.0
      %1134 = vmatpush1.msra.mxu0 0.0
      %1135 = vmatprep.subr.mxu0 0.0
      %1136 = vmatpush1.msra.mxu0 0.0
      %1137 = vmatprep.subr.mxu0 0.0
      %1138 = vmatpush1.msra.mxu0 0.0
      %1139 = vmatprep.subr.mxu0 0.0
      %1140 = vmatpush1.msra.mxu0 0.0
      %1141 = vmatprep.subr.mxu0 0.0
      %1142 = vmatpush1.msra.mxu0 0.0
      %1143 = vmatprep.subr.mxu0 0.0
      %1144 = vmatpush1.msra.mxu0 0.0
      %1145 = vmatprep.subr.mxu0 0.0
      %1146 = vmatpush1.msra.mxu0 0.0
      %1147 = vmatprep.subr.mxu0 0.0
      %1148 = vmatpush1.msra.mxu0 0.0
      %1149 = vmatprep.subr.mxu0 0.0
      %1150 = vmatpush1.msra.mxu0 0.0
      %1151 = vmatprep.subr.mxu0 0.0
      %1152 = vmatpush1.msra.mxu0 0.0
      %1153 = vmatprep.subr.mxu0 0.0
      %1154 = vmatpush1.msra.mxu0 0.0
      %1155 = vmatprep.subr.mxu0 0.0
      %1156 = vmatpush1.msra.mxu0 0.0
      %1157 = vmatprep.subr.mxu0 0.0
      %1158 = vmatpush1.msra.mxu0 0.0
      %1159 = vmatprep.subr.mxu0 0.0
      %1160 = vmatpush1.msra.mxu0 %v1124
      %1161 = vmatprep.subr.mxu0 0.0
      %1162 = vmatpush2.msra.mxu0 0.0
      %1163 = vmatprep.subr.mxu0 0.0
      %1164 = vmatpush2.msra.mxu0 0.0
      %1165 = vmatprep.subr.mxu0 0.0
      %1166 = vmatpush2.msra.mxu0 0.0
      %1167 = vmatprep.subr.mxu0 0.0
      %1168 = vmatpush2.msra.mxu0 0.0
      %1169 = vmatprep.subr.mxu0 0.0
      %1170 = vmatpush2.msra.mxu0 0.0
      %1171 = vmatprep.subr.mxu0 0.0
      %1172 = vmatpush2.msra.mxu0 0.0
      %1173 = vmatprep.subr.mxu0 0.0
      %1174 = vmatpush2.msra.mxu0 0.0
      %1175 = vmatprep.subr.mxu0 0.0
      %1176 = vmatpush2.msra.mxu0 0.0
      %1177 = vmatprep.subr.mxu0 0.0
      %1178 = vmatpush2.msra.mxu0 0.0
      %1179 = vmatprep.subr.mxu0 0.0
      %1180 = vmatpush2.msra.mxu0 0.0
      %1181 = vmatprep.subr.mxu0 0.0
      %1182 = vmatpush2.msra.mxu0 0.0
      %1183 = vmatprep.subr.mxu0 0.0
      %1184 = vmatpush2.msra.mxu0 0.0
      %1185 = vmatprep.subr.mxu0 0.0
      %1186 = vmatpush2.msra.mxu0 0.0
      %1187 = vmatprep.subr.mxu0 0.0
      %1188 = vmatpush2.msra.mxu0 0.0
      %1189 = vmatprep.subr.mxu0 0.0
      %1190 = vmatpush2.msra.mxu0 0.0
      %1191 = vmatprep.subr.mxu0 0.0
      %1192 = vmatpush2.msra.mxu0 0.0
      %1193 = vmatprep.mubr.f32.mxu0 0.0
      %1194 = vmatmul.mubr.f32.gmra.mxu0 %v1127
      %v1195 = vpop.f32.mrf.mxu0
      %v1196 = vadd.f32 0.0, %v1195
      %v1197 = vpop.f32.mrf.mxu0
      %1198 = vdwg.mxu0
      %v1200 = vsel %vm312, %v1196, 0
      %1202 = vmatprep.subr.mxu0 0.0
      %1203 = vmatpush1.msra.mxu0 0.0
      %1204 = vmatprep.subr.mxu0 0.0
      %1205 = vmatpush1.msra.mxu0 0.0
      %1206 = vmatprep.subr.mxu0 0.0
      %1207 = vmatpush1.msra.mxu0 0.0
      %1208 = vmatprep.subr.mxu0 0.0
      %1209 = vmatpush1.msra.mxu0 0.0
      %1210 = vmatprep.subr.mxu0 0.0
      %1211 = vmatpush1.msra.mxu0 0.0
      %1212 = vmatprep.subr.mxu0 0.0
      %1213 = vmatpush1.msra.mxu0 0.0
      %1214 = vmatprep.subr.mxu0 0.0
      %1215 = vmatpush1.msra.mxu0 0.0
      %1216 = vmatprep.subr.mxu0 0.0
      %1217 = vmatpush1.msra.mxu0 0.0
      %1218 = vmatprep.subr.mxu0 0.0
      %1219 = vmatpush1.msra.mxu0 0.0
      %1220 = vmatprep.subr.mxu0 0.0
      %1221 = vmatpush1.msra.mxu0 0.0
      %1222 = vmatprep.subr.mxu0 0.0
      %1223 = vmatpush1.msra.mxu0 0.0
      %1224 = vmatprep.subr.mxu0 0.0
      %1225 = vmatpush1.msra.mxu0 0.0
      %1226 = vmatprep.subr.mxu0 0.0
      %1227 = vmatpush1.msra.mxu0 0.0
      %1228 = vmatprep.subr.mxu0 0.0
      %1229 = vmatpush1.msra.mxu0 0.0
      %1230 = vmatprep.subr.mxu0 0.0
      %1231 = vmatpush1.msra.mxu0 0.0
      %1232 = vmatprep.subr.mxu0 0.0
      %1233 = vmatpush1.msra.mxu0 %v309
      %1234 = vmatprep.subr.mxu0 0.0
      %1235 = vmatpush2.msra.mxu0 0.0
      %1236 = vmatprep.subr.mxu0 0.0
      %1237 = vmatpush2.msra.mxu0 0.0
      %1238 = vmatprep.subr.mxu0 0.0
      %1239 = vmatpush2.msra.mxu0 0.0
      %1240 = vmatprep.subr.mxu0 0.0
      %1241 = vmatpush2.msra.mxu0 0.0
      %1242 = vmatprep.subr.mxu0 0.0
      %1243 = vmatpush2.msra.mxu0 0.0
      %1244 = vmatprep.subr.mxu0 0.0
      %1245 = vmatpush2.msra.mxu0 0.0
      %1246 = vmatprep.subr.mxu0 0.0
      %1247 = vmatpush2.msra.mxu0 0.0
      %1248 = vmatprep.subr.mxu0 0.0
      %1249 = vmatpush2.msra.mxu0 0.0
      %1250 = vmatprep.subr.mxu0 0.0
      %1251 = vmatpush2.msra.mxu0 0.0
      %1252 = vmatprep.subr.mxu0 0.0
      %1253 = vmatpush2.msra.mxu0 0.0
      %1254 = vmatprep.subr.mxu0 0.0
      %1255 = vmatpush2.msra.mxu0 0.0
      %1256 = vmatprep.subr.mxu0 0.0
      %1257 = vmatpush2.msra.mxu0 0.0
      %1258 = vmatprep.subr.mxu0 0.0
      %1259 = vmatpush2.msra.mxu0 0.0
      %1260 = vmatprep.subr.mxu0 0.0
      %1261 = vmatpush2.msra.mxu0 0.0
      %1262 = vmatprep.subr.mxu0 0.0
      %1263 = vmatpush2.msra.mxu0 0.0
      %1264 = vmatprep.subr.mxu0 0.0
      %1265 = vmatpush2.msra.mxu0 0.0
      %1266 = vmatprep.mubr.f32.mxu0 0.0
      %1267 = vmatmul.mubr.f32.gmra.mxu0 %v1200
      %v1268 = vpop.f32.mrf.mxu0
      %v1269 = vadd.f32 0.0, %v1268
      %v1270 = vpop.f32.mrf.mxu0
      %1271 = vdwg.mxu0
      %v1272 = vadd.f32 %v1032, %v1269
      %v1273 = vld [vmem:[%s5] sm:$0x1]
      %v1275 = vlaneseq
      %v1276 = vshrl.u32 %v1275, 7
      %v1277 = vsub.s32 0, %v1276
      %v1278 = vrot.slane %v1273, %v1277
      %v1280 = vadd.f32 %v1272, %v1278
      %v1281 = vpack.c.bf16 %v1280, %v1280
      %vm1282 = vcmask 257024
      %1283 = vst.msk [vmem:[%s294] sm:$0xf] %vm1282, %v1281
      %p1284 = scmp.lt.s32.totalorder %s17, 1
      %s1285 = scalar_select %p1284, %s17, 1
      %s1286 = smul.addr %s1285, 4
      %s1287 = scalar_lea.vmem %s6, %s1286
      // Predicated region
      $region45: #{transformer_forward.34} parent=43 // pred_check
        %p1288 = pneg %p181
      $region46: #{transformer_forward.34} parent=43 // pred_check_branch
        %1290 = sbr.rel (%p1288) target = $region48
      $region47: #{transformer_forward.34} parent=43 // pred_region
        _
      $region48: #{transformer_forward.34} parent=43 // pred_fallthru
        _
    $region44: #{transformer_forward.34} parent=5 // pred_fallthru
      _
    %p1291 = scmp.le.s32.totalorder 2, %s12
    // Predicated region
    $region49: #{transformer_forward.34} parent=5 // pred_check
      %p1292 = pneg %p1291
    $region50: #{transformer_forward.34} parent=5 // pred_check_branch
      %1294 = sbr.rel (%p1292) target = $region52
    $region51: #{transformer_forward.34} parent=5 // pred_region
      %s1295 = ssub.s32 %s12, 2
      // Predicated region
      $region53: #{transformer_forward.34} parent=51 // pred_check
        %p1296 = pneg %p187
      $region54: #{transformer_forward.34} parent=51 // pred_check_branch
        %1298 = sbr.rel (%p1296) target = $region56
      $region55: #{transformer_forward.34} parent=51 // pred_region
        %p1299 = scmp.lt.s32.totalorder %s18, 1
        %s1300 = scalar_select %p1299, %s18, 1
        %s1301 = smul.addr %s1300, 4
        %s1302 = scalar_lea.vmem %s6, %s1301
      $region56: #{transformer_forward.34} parent=51 // pred_fallthru
        _
    $region52: #{transformer_forward.34} parent=5 // pred_fallthru
      _
  $region6: #{transformer_forward.34} parent=0 // loop_footer
    %s16 = sadd.s32 1, %s12
  $region7: #{transformer_forward.34} parent=0 // loop_footer_branch
    %11 = sbr.rel target = $region3
  $region8: #{transformer_forward.34} parent=0 // loop_exit
    _

// kernel: transformer_forward.65
$region0: #{transformer_forward.65}
  #allocation0 [shape = 'u32[]', space=smem, size = 0x4, offset = 0x4, fixed_abs, tag = 'smem constant byte address 0x4 - core index']
  #allocation1 [shape = 'u32[144,128]{1,0:T(1,128)}', space=vmem, size = 0x12000, scoped, tag = 'internal scratch']
  #allocation2 [shape = 'f32[16,128]{1,0:T(8,128)}', space=vmem, size = 0x2000, scoped, tag = 'scratch operand']
  %s0 = inlined_call_operand.vmem [shape: bf16[16,128], index: 0, kind: input, shape index: {}]
  %s1 = inlined_call_operand.vmem [shape: bf16[128,128], index: 1, kind: input, shape index: {}]
  %s2 = inlined_call_operand.vmem [shape: f32[1,128], index: 2, kind: input, shape index: {}]
  %s3 = inlined_call_operand.vmem [shape: f32[16,128], index: 3, kind: output, shape index: {}]
  %s4 = sld [smem:[#allocation0]]
  $region30: #{transformer_forward.65} parent=0
    _
  %s6 = ssub.s32 1, %s4
  %s7 = scalar_select 0, %s6, %s4
  // Predicated region
  $region2: #{transformer_forward.65} parent=0 // pred_check
    _
  $region3: #{transformer_forward.65} parent=0 // pred_check_branch
    %9 = sbr.rel (0) target = $region5
  $region4: #{transformer_forward.65} parent=0 // pred_region
    _
  $region5: #{transformer_forward.65} parent=0 // pred_fallthru
    _
  // Predicated region
  $region6: #{transformer_forward.65} parent=0 // pred_check
    _
  $region7: #{transformer_forward.65} parent=0 // pred_check_branch
    %11 = sbr.rel (0) target = $region9
  $region8: #{transformer_forward.65} parent=0 // pred_region
    _
  $region9: #{transformer_forward.65} parent=0 // pred_fallthru
    _
  // Predicated region
  $region10: #{transformer_forward.65} parent=0 // pred_check
    _
  $region11: #{transformer_forward.65} parent=0 // pred_check_branch
    %13 = sbr.rel (0) target = $region13
  $region12: #{transformer_forward.65} parent=0 // pred_region
    _
  $region13: #{transformer_forward.65} parent=0 // pred_fallthru
    _
  %p15 = scmp.eq.s32.totalorder 0, 0
  // Predicated region
  $region14: #{transformer_forward.65} parent=0 // pred_check
    %p16 = pneg %p15
  $region15: #{transformer_forward.65} parent=0 // pred_check_branch
    %18 = sbr.rel (%p16) target = $region17
  $region16: #{transformer_forward.65} parent=0 // pred_region
    %19 = vst [vmem:[#allocation2] sm:$0xff] 0.0
    %20 = vst [vmem:[#allocation2 + $0x8] sm:$0xff] 0.0
  $region17: #{transformer_forward.65} parent=0 // pred_fallthru
    _
  %v21 = vld [vmem:[#allocation2] sm:$0xff]
  %v22 = vld [vmem:[#allocation2 + $0x8] sm:$0xff]
  %v23 = vld [vmem:[%s0] sm:$0xf]
  %v24 = vld [vmem:[%s0 + $0x4] sm:$0xf]
  %v25 = vld [vmem:[%s1] sm:$0xf]
  %v26 = vld [vmem:[%s1 + $0x4] sm:$0xf]
  %v27 = vld [vmem:[%s1 + $0x8] sm:$0xf]
  %v28 = vld [vmem:[%s1 + $0xc] sm:$0xf]
  %v29 = vld [vmem:[%s1 + $0x10] sm:$0xf]
  %v30 = vld [vmem:[%s1 + $0x14] sm:$0xf]
  %v31 = vld [vmem:[%s1 + $0x18] sm:$0xf]
  %v32 = vld [vmem:[%s1 + $0x1c] sm:$0xf]
  %v33 = vld [vmem:[%s1 + $0x20] sm:$0xf]
  %v34 = vld [vmem:[%s1 + $0x24] sm:$0xf]
  %v35 = vld [vmem:[%s1 + $0x28] sm:$0xf]
  %v36 = vld [vmem:[%s1 + $0x2c] sm:$0xf]
  %v37 = vld [vmem:[%s1 + $0x30] sm:$0xf]
  %v38 = vld [vmem:[%s1 + $0x34] sm:$0xf]
  %v39 = vld [vmem:[%s1 + $0x38] sm:$0xf]
  %v40 = vld [vmem:[%s1 + $0x3c] sm:$0xf]
  %v43 = vunpack.c.l.b16 %v23
  %v44 = vunpack.c.l.b16 %v24
  %v45 = vpack.c.b16 %v44, %v43
  %v63 = vunpack.c.l.b16 %v25
  %v64 = vunpack.c.l.b16 %v26
  %v65 = vunpack.c.l.b16 %v27
  %v66 = vunpack.c.l.b16 %v28
  %v67 = vunpack.c.l.b16 %v29
  %v68 = vunpack.c.l.b16 %v30
  %v69 = vunpack.c.l.b16 %v31
  %v70 = vunpack.c.l.b16 %v32
  %v71 = vunpack.c.l.b16 %v33
  %v72 = vunpack.c.l.b16 %v34
  %v73 = vunpack.c.l.b16 %v35
  %v74 = vunpack.c.l.b16 %v36
  %v75 = vunpack.c.l.b16 %v37
  %v76 = vunpack.c.l.b16 %v38
  %v77 = vunpack.c.l.b16 %v39
  %v78 = vunpack.c.l.b16 %v40
  %v79 = vpack.c.b16 %v64, %v63
  %v80 = vpack.c.b16 %v66, %v65
  %v81 = vpack.c.b16 %v68, %v67
  %v82 = vpack.c.b16 %v70, %v69
  %v83 = vpack.c.b16 %v72, %v71
  %v84 = vpack.c.b16 %v74, %v73
  %v85 = vpack.c.b16 %v76, %v75
  %v86 = vpack.c.b16 %v78, %v77
  %95 = vmatprep.subr.bf16.mxu0 0
  %96 = vmatpush1.bf16.msra.mxu0 %v86
  %97 = vmatprep.subr.bf16.mxu0 0
  %98 = vmatpush1.bf16.msra.mxu0 %v85
  %99 = vmatprep.subr.bf16.mxu0 0
  %100 = vmatpush1.bf16.msra.mxu0 %v84
  %101 = vmatprep.subr.bf16.mxu0 0
  %102 = vmatpush1.bf16.msra.mxu0 %v83
  %103 = vmatprep.subr.bf16.mxu0 0
  %104 = vmatpush1.bf16.msra.mxu0 %v82
  %105 = vmatprep.subr.bf16.mxu0 0
  %106 = vmatpush1.bf16.msra.mxu0 %v81
  %107 = vmatprep.subr.bf16.mxu0 0
  %108 = vmatpush1.bf16.msra.mxu0 %v80
  %109 = vmatprep.subr.bf16.mxu0 0
  %110 = vmatpush1.bf16.msra.mxu0 %v79
  %111 = vmatprep.subr.bf16.mxu0 0
  %112 = vmatpush2.bf16.msra.mxu0 0
  %113 = vmatprep.subr.bf16.mxu0 0
  %114 = vmatpush2.bf16.msra.mxu0 0
  %115 = vmatprep.subr.bf16.mxu0 0
  %116 = vmatpush2.bf16.msra.mxu0 0
  %117 = vmatprep.subr.bf16.mxu0 0
  %118 = vmatpush2.bf16.msra.mxu0 0
  %119 = vmatprep.subr.bf16.mxu0 0
  %120 = vmatpush2.bf16.msra.mxu0 0
  %121 = vmatprep.subr.bf16.mxu0 0
  %122 = vmatpush2.bf16.msra.mxu0 0
  %123 = vmatprep.subr.bf16.mxu0 0
  %124 = vmatpush2.bf16.msra.mxu0 0
  %125 = vmatprep.subr.bf16.mxu0 0
  %126 = vmatpush2.bf16.msra.mxu0 0
  %127 = vmatprep.mubr.bf16.mxu0 0
  %128 = vmatmul.mubr.bf16.gmra.mxu0 %v45
  %v129 = vpop.f32.mrf.mxu0
  %v130 = vadd.f32 0.0, %v129
  %v131 = vpop.f32.mrf.mxu0
  %v132 = vpop.f32.mrf.mxu0
  %v133 = vadd.f32 0.0, %v132
  %v134 = vpop.f32.mrf.mxu0
  %135 = vdwg.mxu0
  %v136 = vadd.f32 %v21, %v130
  %v137 = vadd.f32 %v22, %v133
  %138 = vst [vmem:[#allocation2] sm:$0xff] %v136
  %139 = vst [vmem:[#allocation2 + $0x8] sm:$0xff] %v137
  // Predicated region
  $region18: #{transformer_forward.65} parent=0 // pred_check
    %p140 = pneg %p15
  $region19: #{transformer_forward.65} parent=0 // pred_check_branch
    %142 = sbr.rel (%p140) target = $region21
  $region20: #{transformer_forward.65} parent=0 // pred_region
    %v143 = vld [vmem:[#allocation2] sm:$0xff]
    %v144 = vld [vmem:[#allocation2 + $0x8] sm:$0xff]
    %v145 = vld [vmem:[%s2] sm:$0x1]
    %v147 = vlaneseq
    %v148 = vshrl.u32 %v147, 7
    %v149 = vsub.s32 0, %v148
    %v150 = vrot.slane %v145, %v149
    %v152 = vadd.f32 %v143, %v150
    %v153 = vadd.f32 %v144, %v150
    %154 = vst [vmem:[%s3] sm:$0xff] %v152
    %155 = vst [vmem:[%s3 + $0x8] sm:$0xff] %v153
  $region21: #{transformer_forward.65} parent=0 // pred_fallthru
    _
  // Predicated region
  $region22: #{transformer_forward.65} parent=0 // pred_check
    _
  $region23: #{transformer_forward.65} parent=0 // pred_check_branch
    %157 = sbr.rel (0) target = $region25
  $region24: #{transformer_forward.65} parent=0 // pred_region
    _
  $region25: #{transformer_forward.65} parent=0 // pred_fallthru
    _
  // Predicated region
  $region26: #{transformer_forward.65} parent=0 // pred_check
    _
  $region27: #{transformer_forward.65} parent=0 // pred_check_branch
    %159 = sbr.rel (0) target = $region29
  $region28: #{transformer_forward.65} parent=0 // pred_region
    _
  $region29: #{transformer_forward.65} parent=0 // pred_fallthru
    _

// kernel: transformer_forward.46
$region0: #{transformer_forward.46}
  #allocation0 [shape = 'u32[]', space=smem, size = 0x4, offset = 0x4, fixed_abs, tag = 'smem constant byte address 0x4 - core index']
  #allocation1 [shape = 'u32[144,128]{1,0:T(1,128)}', space=vmem, size = 0x12000, scoped, tag = 'internal scratch']
  %s0 = inlined_call_operand.vmem [shape: bf16[2,8,32], index: 0, kind: input, shape index: {}]
  %s1 = inlined_call_operand.vmem [shape: bf16[2,8,32], index: 1, kind: input, shape index: {}]
  %s2 = inlined_call_operand.vmem [shape: bf16[2,8,32], index: 2, kind: input, shape index: {}]
  %s3 = inlined_call_operand.vmem [shape: f32[2,1,8], index: 3, kind: input, shape index: {}]
  %s4 = inlined_call_operand.vmem [shape: bf16[32,32], index: 4, kind: input, shape index: {}]
  %s5 = inlined_call_operand.vmem [shape: f32[1,32], index: 5, kind: input, shape index: {}]
  %s6 = inlined_call_operand.vmem [shape: bf16[2,8,32], index: 6, kind: output, shape index: {}]
  %s7 = sld [smem:[#allocation0]]
  $region57: #{transformer_forward.46} parent=0
    _
  %s9 = ssub.s32 1, %s7
  %s10 = scalar_select 0, %s9, %s7
  loop: start=0, step=1, limit=4
  $region2: #{transformer_forward.46} parent=0 // loop_pre_header
    _
  $region3: #{transformer_forward.46} parent=0 // loop_header
    %s12 = sphi 0, %s16
    %p13 = scmp.ge.s32.totalorder %s12, 4
    %s22 = sphi 0, %s24
    %s25 = sphi 0, %s22
    %s26 = sphi 0, %s25
    %s42 = sphi 0, %s26
    %s48 = sphi 0, %s50
    %s51 = sphi 0, %s48
    %s52 = sphi 0, %s51
    %s68 = sphi 0, %s52
    %s74 = sphi 0, %s76
    %s77 = sphi 0, %s74
    %s78 = sphi 0, %s77
    %s94 = sphi 0, %s78
    %s100 = sphi 0, %s102
    %s103 = sphi 0, %s100
    %s104 = sphi 0, %s103
    %s120 = sphi 0, %s104
    %s124 = sphi 0, %s124
    %s126 = sphi 0, %s124
    %s127 = sphi 0, %s126
    %s141 = sphi 0, %s127
    %s145 = sphi 0, %s145
    %s147 = sphi 0, %s145
    %s148 = sphi 0, %s147
    %s162 = sphi 0, %s148
    %s168 = sphi 0, %s170
    %s171 = sphi 0, %s168
    %s172 = sphi 0, %s171
    %s188 = sphi 0, %s172
  $region4: #{transformer_forward.46} parent=0 // loop_header_branch
    %15 = sbr.rel (%p13) target = $region8
  $region5: #{transformer_forward.46} parent=0 // loop_body
    %s17 = ssub.s32 %s12, 1
    %s18 = ssub.s32 %s12, 2
    %s19 = sadd.s32 %s12, 1
    %s20 = ssub.s32 %s12, %s19
    %p21 = scmp.eq.s32.totalorder %s20, 0
    %s23 = sadd.s32 %s22, 1
    %s24 = scalar_select %p21, %s22, %s23
    %p27 = pneg %p21
    %p28 = scmp.eq.s32.totalorder %s12, 1
    %p29 = por %p27, %p28
    %p30 = scmp.ne.s32.totalorder %s22, %s25
    %p31 = scmp.eq.s32.totalorder %s12, 0
    %p32 = por %p30, %p31
    %p33 = scmp.ne.s32.totalorder %s22, %s25
    %p34 = scmp.eq.s32.totalorder %s17, 1
    %p35 = por %p33, %p34
    %p36 = scmp.ne.s32.totalorder %s25, %s26
    %p37 = scmp.eq.s32.totalorder %s17, 0
    %p38 = por %p36, %p37
    %p39 = scmp.ne.s32.totalorder %s25, %s26
    %p40 = scmp.eq.s32.totalorder %s18, 1
    %p41 = por %p39, %p40
    %p43 = scmp.ne.s32.totalorder %s26, %s42
    %p44 = scmp.eq.s32.totalorder %s18, 0
    %p45 = por %p43, %p44
    %s46 = ssub.s32 %s12, %s19
    %p47 = scmp.eq.s32.totalorder %s46, 0
    %s49 = sadd.s32 %s48, 1
    %s50 = scalar_select %p47, %s48, %s49
    %p53 = pneg %p47
    %p54 = scmp.eq.s32.totalorder %s12, 1
    %p55 = por %p53, %p54
    %p56 = scmp.ne.s32.totalorder %s48, %s51
    %p57 = scmp.eq.s32.totalorder %s12, 0
    %p58 = por %p56, %p57
    %p59 = scmp.ne.s32.totalorder %s48, %s51
    %p60 = scmp.eq.s32.totalorder %s17, 1
    %p61 = por %p59, %p60
    %p62 = scmp.ne.s32.totalorder %s51, %s52
    %p63 = scmp.eq.s32.totalorder %s17, 0
    %p64 = por %p62, %p63
    %p65 = scmp.ne.s32.totalorder %s51, %s52
    %p66 = scmp.eq.s32.totalorder %s18, 1
    %p67 = por %p65, %p66
    %p69 = scmp.ne.s32.totalorder %s52, %s68
    %p70 = scmp.eq.s32.totalorder %s18, 0
    %p71 = por %p69, %p70
    %s72 = ssub.s32 %s12, %s19
    %p73 = scmp.eq.s32.totalorder %s72, 0
    %s75 = sadd.s32 %s74, 1
    %s76 = scalar_select %p73, %s74, %s75
    %p79 = pneg %p73
    %p80 = scmp.eq.s32.totalorder %s12, 1
    %p81 = por %p79, %p80
    %p82 = scmp.ne.s32.totalorder %s74, %s77
    %p83 = scmp.eq.s32.totalorder %s12, 0
    %p84 = por %p82, %p83
    %p85 = scmp.ne.s32.totalorder %s74, %s77
    %p86 = scmp.eq.s32.totalorder %s17, 1
    %p87 = por %p85, %p86
    %p88 = scmp.ne.s32.totalorder %s77, %s78
    %p89 = scmp.eq.s32.totalorder %s17, 0
    %p90 = por %p88, %p89
    %p91 = scmp.ne.s32.totalorder %s77, %s78
    %p92 = scmp.eq.s32.totalorder %s18, 1
    %p93 = por %p91, %p92
    %p95 = scmp.ne.s32.totalorder %s78, %s94
    %p96 = scmp.eq.s32.totalorder %s18, 0
    %p97 = por %p95, %p96
    %s98 = ssub.s32 %s12, %s19
    %p99 = scmp.eq.s32.totalorder %s98, 0
    %s101 = sadd.s32 %s100, 1
    %s102 = scalar_select %p99, %s100, %s101
    %p105 = pneg %p99
    %p106 = scmp.eq.s32.totalorder %s12, 1
    %p107 = por %p105, %p106
    %p108 = scmp.ne.s32.totalorder %s100, %s103
    %p109 = scmp.eq.s32.totalorder %s12, 0
    %p110 = por %p108, %p109
    %p111 = scmp.ne.s32.totalorder %s100, %s103
    %p112 = scmp.eq.s32.totalorder %s17, 1
    %p113 = por %p111, %p112
    %p114 = scmp.ne.s32.totalorder %s103, %s104
    %p115 = scmp.eq.s32.totalorder %s17, 0
    %p116 = por %p114, %p115
    %p117 = scmp.ne.s32.totalorder %s103, %s104
    %p118 = scmp.eq.s32.totalorder %s18, 1
    %p119 = por %p117, %p118
    %p121 = scmp.ne.s32.totalorder %s104, %s120
    %p122 = scmp.eq.s32.totalorder %s18, 0
    %p123 = por %p121, %p122
    %s125 = sadd.s32 %s124, 1
    %p128 = scmp.eq.s32.totalorder %s12, 1
    %p129 = scmp.ne.s32.totalorder %s124, %s126
    %p130 = scmp.eq.s32.totalorder %s12, 0
    %p131 = por %p129, %p130
    %p132 = scmp.ne.s32.totalorder %s124, %s126
    %p133 = scmp.eq.s32.totalorder %s17, 1
    %p134 = por %p132, %p133
    %p135 = scmp.ne.s32.totalorder %s126, %s127
    %p136 = scmp.eq.s32.totalorder %s17, 0
    %p137 = por %p135, %p136
    %p138 = scmp.ne.s32.totalorder %s126, %s127
    %p139 = scmp.eq.s32.totalorder %s18, 1
    %p140 = por %p138, %p139
    %p142 = scmp.ne.s32.totalorder %s127, %s141
    %p143 = scmp.eq.s32.totalorder %s18, 0
    %p144 = por %p142, %p143
    %s146 = sadd.s32 %s145, 1
    %p149 = scmp.eq.s32.totalorder %s12, 1
    %p150 = scmp.ne.s32.totalorder %s145, %s147
    %p151 = scmp.eq.s32.totalorder %s12, 0
    %p152 = por %p150, %p151
    %p153 = scmp.ne.s32.totalorder %s145, %s147
    %p154 = scmp.eq.s32.totalorder %s17, 1
    %p155 = por %p153, %p154
    %p156 = scmp.ne.s32.totalorder %s147, %s148
    %p157 = scmp.eq.s32.totalorder %s17, 0
    %p158 = por %p156, %p157
    %p159 = scmp.ne.s32.totalorder %s147, %s148
    %p160 = scmp.eq.s32.totalorder %s18, 1
    %p161 = por %p159, %p160
    %p163 = scmp.ne.s32.totalorder %s148, %s162
    %p164 = scmp.eq.s32.totalorder %s18, 0
    %p165 = por %p163, %p164
    %s166 = ssub.s32 %s12, %s19
    %p167 = scmp.eq.s32.totalorder %s166, 0
    %s169 = sadd.s32 %s168, 1
    %s170 = scalar_select %p167, %s168, %s169
    %p173 = pneg %p167
    %p174 = scmp.eq.s32.totalorder %s12, 1
    %p175 = por %p173, %p174
    %p176 = scmp.ne.s32.totalorder %s168, %s171
    %p177 = scmp.eq.s32.totalorder %s12, 0
    %p178 = por %p176, %p177
    %p179 = scmp.ne.s32.totalorder %s168, %s171
    %p180 = scmp.eq.s32.totalorder %s17, 1
    %p181 = por %p179, %p180
    %p182 = scmp.ne.s32.totalorder %s171, %s172
    %p183 = scmp.eq.s32.totalorder %s17, 0
    %p184 = por %p182, %p183
    %p185 = scmp.ne.s32.totalorder %s171, %s172
    %p186 = scmp.eq.s32.totalorder %s18, 1
    %p187 = por %p185, %p186
    %p189 = scmp.ne.s32.totalorder %s172, %s188
    %p190 = scmp.eq.s32.totalorder %s18, 0
    %p191 = por %p189, %p190
    %p192 = scmp.le.s32.totalorder 1, %s12
    %p193 = scmp.lt.s32.totalorder %s12, 3
    %p194 = pnand %p192, %p193
    %p195 = pneg %p194
    // Predicated region
    $region9: #{transformer_forward.46} parent=5 // pred_check
      _
    $region10: #{transformer_forward.46} parent=5 // pred_check_branch
      %197 = sbr.rel (%p194) target = $region12
    $region11: #{transformer_forward.46} parent=5 // pred_region
      %s198 = ssub.s32 %s12, 1
      // Predicated region
      $region13: #{transformer_forward.46} parent=11 // pred_check
        %p199 = pneg %p137
      $region14: #{transformer_forward.46} parent=11 // pred_check_branch
        %201 = sbr.rel (%p199) target = $region16
      $region15: #{transformer_forward.46} parent=11 // pred_region
        _
      $region16: #{transformer_forward.46} parent=11 // pred_fallthru
        _
      // Predicated region
      $region17: #{transformer_forward.46} parent=11 // pred_check
        %p202 = pneg %p158
      $region18: #{transformer_forward.46} parent=11 // pred_check_branch
        %204 = sbr.rel (%p202) target = $region20
      $region19: #{transformer_forward.46} parent=11 // pred_region
        _
      $region20: #{transformer_forward.46} parent=11 // pred_fallthru
        _
    $region12: #{transformer_forward.46} parent=5 // pred_fallthru
      _
    %p205 = scmp.lt.s32.totalorder %s12, 2
    // Predicated region
    $region21: #{transformer_forward.46} parent=5 // pred_check
      %p206 = pneg %p205
    $region22: #{transformer_forward.46} parent=5 // pred_check_branch
      %208 = sbr.rel (%p206) target = $region24
    $region23: #{transformer_forward.46} parent=5 // pred_region
      // Predicated region
      $region25: #{transformer_forward.46} parent=23 // pred_check
        %p209 = pneg %p32
      $region26: #{transformer_forward.46} parent=23 // pred_check_branch
        %211 = sbr.rel (%p209) target = $region28
      $region27: #{transformer_forward.46} parent=23 // pred_region
        %p212 = scmp.lt.s32.totalorder %s12, 1
        %s213 = scalar_select %p212, %s12, 1
        %s214 = smul.addr %s213, 4
        %s215 = scalar_lea.vmem %s0, %s214
      $region28: #{transformer_forward.46} parent=23 // pred_fallthru
        _
      // Predicated region
      $region29: #{transformer_forward.46} parent=23 // pred_check
        %p216 = pneg %p58
      $region30: #{transformer_forward.46} parent=23 // pred_check_branch
        %218 = sbr.rel (%p216) target = $region32
      $region31: #{transformer_forward.46} parent=23 // pred_region
        %p219 = scmp.lt.s32.totalorder %s12, 1
        %s220 = scalar_select %p219, %s12, 1
        %s221 = smul.addr %s220, 4
        %s222 = scalar_lea.vmem %s1, %s221
      $region32: #{transformer_forward.46} parent=23 // pred_fallthru
        _
      // Predicated region
      $region33: #{transformer_forward.46} parent=23 // pred_check
        %p223 = pneg %p84
      $region34: #{transformer_forward.46} parent=23 // pred_check_branch
        %225 = sbr.rel (%p223) target = $region36
      $region35: #{transformer_forward.46} parent=23 // pred_region
        %p226 = scmp.lt.s32.totalorder %s12, 1
        %s227 = scalar_select %p226, %s12, 1
        %s228 = smul.addr %s227, 4
        %s229 = scalar_lea.vmem %s2, %s228
      $region36: #{transformer_forward.46} parent=23 // pred_fallthru
        _
      // Predicated region
      $region37: #{transformer_forward.46} parent=23 // pred_check
        %p230 = pneg %p110
      $region38: #{transformer_forward.46} parent=23 // pred_check_branch
        %232 = sbr.rel (%p230) target = $region40
      $region39: #{transformer_forward.46} parent=23 // pred_region
        %p233 = scmp.lt.s32.totalorder %s12, 1
        %s234 = scalar_select %p233, %s12, 1
        %s235 = scalar_lea.vmem %s3, %s234
      $region40: #{transformer_forward.46} parent=23 // pred_fallthru
        _
    $region24: #{transformer_forward.46} parent=5 // pred_fallthru
      _
    %p236 = scmp.le.s32.totalorder 1, %s12
    %p237 = scmp.lt.s32.totalorder %s12, 3
    %p238 = pnand %p236, %p237
    %p239 = pneg %p238
    // Predicated region
    $region41: #{transformer_forward.46} parent=5 // pred_check
      _
    $region42: #{transformer_forward.46} parent=5 // pred_check_branch
      %241 = sbr.rel (%p238) target = $region44
    $region43: #{transformer_forward.46} parent=5 // pred_region
      %s242 = ssub.s32 %s12, 1
      %p243 = scmp.lt.s32.totalorder %s17, 1
      %s244 = scalar_select %p243, %s17, 1
      %s245 = smul.addr %s244, 4
      %s246 = scalar_lea.vmem %s0, %s245
      %p247 = pneg %p38
      %p248 = pneg %p35
      %p249 = scmp.lt.s32.totalorder %s17, 1
      %s250 = scalar_select %p249, %s17, 1
      %s251 = smul.addr %s250, 4
      %s252 = scalar_lea.vmem %s1, %s251
      %p253 = pneg %p64
      %p254 = pneg %p61
      %p255 = scmp.lt.s32.totalorder %s17, 1
      %s256 = scalar_select %p255, %s17, 1
      %s257 = smul.addr %s256, 4
      %s258 = scalar_lea.vmem %s2, %s257
      %p259 = pneg %p90
      %p260 = pneg %p87
      %p261 = scmp.lt.s32.totalorder %s17, 1
      %s262 = scalar_select %p261, %s17, 1
      %s263 = scalar_lea.vmem %s3, %s262
      %p264 = pneg %p116
      %p265 = pneg %p113
      %p266 = pneg %p137
      %p267 = pneg %p134
      %p268 = pneg %p158
      %p269 = pneg %p155
      %p270 = pneg %p184
      %p271 = pneg %p181
      %p272 = scmp.lt.s32.totalorder %s17, 1
      %s273 = scalar_select %p272, %s17, 1
      %s274 = smul.addr %s273, 4
      %s275 = scalar_lea.vmem %s6, %s274
      %p276 = scmp.lt.s32.totalorder %s17, 1
      %s277 = scalar_select %p276, %s17, 1
      %s278 = smul.addr %s277, 4
      %s279 = scalar_lea.vmem %s0, %s278
      %p280 = scmp.lt.s32.totalorder %s17, 1
      %s281 = scalar_select %p280, %s17, 1
      %s282 = smul.addr %s281, 4
      %s283 = scalar_lea.vmem %s1, %s282
      %p284 = scmp.lt.s32.totalorder %s17, 1
      %s285 = scalar_select %p284, %s17, 1
      %s286 = smul.addr %s285, 4
      %s287 = scalar_lea.vmem %s2, %s286
      %p288 = scmp.lt.s32.totalorder %s17, 1
      %s289 = scalar_select %p288, %s17, 1
      %s290 = scalar_lea.vmem %s3, %s289
      %p291 = scmp.lt.s32.totalorder %s17, 1
      %s292 = scalar_select %p291, %s17, 1
      %s293 = smul.addr %s292, 4
      %s294 = scalar_lea.vmem %s6, %s293
      %v295 = vld [vmem:[%s279] sm:$0xf]
      %v296 = vunpack.c.l.bf16 %v295
      %v297 = vmul.f32 %v296, 0.35355338
      %v298 = vld [vmem:[%s283] sm:$0xf]
      %v299 = vunpack.c.l.bf16 %v298
      %v300 = vld [vmem:[%s287] sm:$0xf]
      %v301 = vunpack.c.l.bf16 %v300
      %v302 = vld [vmem:[%s4] sm:$0xf]
      %v303 = vld [vmem:[%s4 + $0x4] sm:$0xf]
      %v304 = vld [vmem:[%s4 + $0x8] sm:$0xf]
      %v305 = vld [vmem:[%s4 + $0xc] sm:$0xf]
      %v306 = vunpack.c.l.bf16 %v302
      %v307 = vunpack.c.l.bf16 %v303
      %v308 = vunpack.c.l.bf16 %v304
      %v309 = vunpack.c.l.bf16 %v305
      %v310 = vld [vmem:[%s290] sm:$0x1]
      %vm311 = vcmp.gt.f32.partialorder %v310, 0.0
      %v312 = vlaneseq
      %v313 = vshrl.u32 %v312, 7
      %v314 = vlaneseq
      %v315 = vand.u32 %v314, 127
      %vm316 = vcmp.le.s32.totalorder %v315, %v313
      %v317 = vsel %vm311, 1, 0
      %v318 = vlaneseq
      %v319 = vshrl.u32 %v318, 7
      %v320 = vsub.s32 0, %v319
      %v321 = vrot.slane %v317, %v320
      %vm322 = vcmp.eq.s32.totalorder %v321, 1
      %vm323 = vmand %vm322, %vm316
      %vm324 = vcmask 64512
      %v326 = vsel %vm324, %v297, 0
      %v329 = vsel %vm324, %v299, 0
      %331 = vmatprep.subr.mxu0 0.0
      %332 = vmatpush1.xpose.msra.mxu0 0.0
      %333 = vmatprep.subr.mxu0 0.0
      %334 = vmatpush1.xpose.msra.mxu0 0.0
      %335 = vmatprep.subr.mxu0 0.0
      %336 = vmatpush1.xpose.msra.mxu0 0.0
      %337 = vmatprep.subr.mxu0 0.0
      %338 = vmatpush1.xpose.msra.mxu0 0.0
      %339 = vmatprep.subr.mxu0 0.0
      %340 = vmatpush1.xpose.msra.mxu0 0.0
      %341 = vmatprep.subr.mxu0 0.0
      %342 = vmatpush1.xpose.msra.mxu0 0.0
      %343 = vmatprep.subr.mxu0 0.0
      %344 = vmatpush1.xpose.msra.mxu0 0.0
      %345 = vmatprep.subr.mxu0 0.0
      %346 = vmatpush1.xpose.msra.mxu0 0.0
      %347 = vmatprep.subr.mxu0 0.0
      %348 = vmatpush1.xpose.msra.mxu0 0.0
      %349 = vmatprep.subr.mxu0 0.0
      %350 = vmatpush1.xpose.msra.mxu0 0.0
      %351 = vmatprep.subr.mxu0 0.0
      %352 = vmatpush1.xpose.msra.mxu0 0.0
      %353 = vmatprep.subr.mxu0 0.0
      %354 = vmatpush1.xpose.msra.mxu0 0.0
      %355 = vmatprep.subr.mxu0 0.0
      %356 = vmatpush1.xpose.msra.mxu0 0.0
      %357 = vmatprep.subr.mxu0 0.0
      %358 = vmatpush1.xpose.msra.mxu0 0.0
      %359 = vmatprep.subr.mxu0 0.0
      %360 = vmatpush1.xpose.msra.mxu0 0.0
      %361 = vmatprep.subr.mxu0 0.0
      %362 = vmatpush1.xpose.msra.mxu0 %v329
      %363 = vmatprep.subr.mxu0 0.0
      %364 = vmatpush2.xpose.msra.mxu0 0.0
      %365 = vmatprep.subr.mxu0 0.0
      %366 = vmatpush2.xpose.msra.mxu0 0.0
      %367 = vmatprep.subr.mxu0 0.0
      %368 = vmatpush2.xpose.msra.mxu0 0.0
      %369 = vmatprep.subr.mxu0 0.0
      %370 = vmatpush2.xpose.msra.mxu0 0.0
      %371 = vmatprep.subr.mxu0 0.0
      %372 = vmatpush2.xpose.msra.mxu0 0.0
      %373 = vmatprep.subr.mxu0 0.0
      %374 = vmatpush2.xpose.msra.mxu0 0.0
      %375 = vmatprep.subr.mxu0 0.0
      %376 = vmatpush2.xpose.msra.mxu0 0.0
      %377 = vmatprep.subr.mxu0 0.0
      %378 = vmatpush2.xpose.msra.mxu0 0.0
      %379 = vmatprep.subr.mxu0 0.0
      %380 = vmatpush2.xpose.msra.mxu0 0.0
      %381 = vmatprep.subr.mxu0 0.0
      %382 = vmatpush2.xpose.msra.mxu0 0.0
      %383 = vmatprep.subr.mxu0 0.0
      %384 = vmatpush2.xpose.msra.mxu0 0.0
      %385 = vmatprep.subr.mxu0 0.0
      %386 = vmatpush2.xpose.msra.mxu0 0.0
      %387 = vmatprep.subr.mxu0 0.0
      %388 = vmatpush2.xpose.msra.mxu0 0.0
      %389 = vmatprep.subr.mxu0 0.0
      %390 = vmatpush2.xpose.msra.mxu0 0.0
      %391 = vmatprep.subr.mxu0 0.0
      %392 = vmatpush2.xpose.msra.mxu0 0.0
      %393 = vmatprep.subr.mxu0 0.0
      %394 = vmatpush2.xpose.msra.mxu0 0.0
      %395 = vmatprep.mubr.f32.mxu0 0.0
      %396 = vmatmul.mubr.f32.gmra.mxu0 %v326
      %v397 = vpop.f32.mrf.mxu0
      %v398 = vadd.f32 0.0, %v397
      %v399 = vpop.f32.mrf.mxu0
      %400 = vdwg.mxu0
      %v401 = vsel %vm323, %v398, -1e+09
      %v402 = vsel %vm324, %v401, -inf
      %403 = vmax.xlane.f32.xlu0 %v402
      %v404 = vpop.xlane.xlu0 %403
      %v405 = vsub.f32 %v401, %v404
      %v406 = vmul.f32 %v405, 1.442695
      %v407 = vpow.pop %v406
      %v408 = vsel %vm324, %v407, 0.0
      %409 = vadd.xlane.f32.xlu0 %v408
      %v410 = vpop.xlane.xlu0 %409
      %v411 = vrcp.pop %v410
      %v412 = vmul.f32 %v407, %v411
      %v414 = vsel %vm324, %v412, 0
      %416 = vmatprep.subr.mxu0 0.0
      %417 = vmatpush1.msra.mxu0 0.0
      %418 = vmatprep.subr.mxu0 0.0
      %419 = vmatpush1.msra.mxu0 0.0
      %420 = vmatprep.subr.mxu0 0.0
      %421 = vmatpush1.msra.mxu0 0.0
      %422 = vmatprep.subr.mxu0 0.0
      %423 = vmatpush1.msra.mxu0 0.0
      %424 = vmatprep.subr.mxu0 0.0
      %425 = vmatpush1.msra.mxu0 0.0
      %426 = vmatprep.subr.mxu0 0.0
      %427 = vmatpush1.msra.mxu0 0.0
      %428 = vmatprep.subr.mxu0 0.0
      %429 = vmatpush1.msra.mxu0 0.0
      %430 = vmatprep.subr.mxu0 0.0
      %431 = vmatpush1.msra.mxu0 0.0
      %432 = vmatprep.subr.mxu0 0.0
      %433 = vmatpush1.msra.mxu0 0.0
      %434 = vmatprep.subr.mxu0 0.0
      %435 = vmatpush1.msra.mxu0 0.0
      %436 = vmatprep.subr.mxu0 0.0
      %437 = vmatpush1.msra.mxu0 0.0
      %438 = vmatprep.subr.mxu0 0.0
      %439 = vmatpush1.msra.mxu0 0.0
      %440 = vmatprep.subr.mxu0 0.0
      %441 = vmatpush1.msra.mxu0 0.0
      %442 = vmatprep.subr.mxu0 0.0
      %443 = vmatpush1.msra.mxu0 0.0
      %444 = vmatprep.subr.mxu0 0.0
      %445 = vmatpush1.msra.mxu0 0.0
      %446 = vmatprep.subr.mxu0 0.0
      %447 = vmatpush1.msra.mxu0 %v301
      %448 = vmatprep.subr.mxu0 0.0
      %449 = vmatpush2.msra.mxu0 0.0
      %450 = vmatprep.subr.mxu0 0.0
      %451 = vmatpush2.msra.mxu0 0.0
      %452 = vmatprep.subr.mxu0 0.0
      %453 = vmatpush2.msra.mxu0 0.0
      %454 = vmatprep.subr.mxu0 0.0
      %455 = vmatpush2.msra.mxu0 0.0
      %456 = vmatprep.subr.mxu0 0.0
      %457 = vmatpush2.msra.mxu0 0.0
      %458 = vmatprep.subr.mxu0 0.0
      %459 = vmatpush2.msra.mxu0 0.0
      %460 = vmatprep.subr.mxu0 0.0
      %461 = vmatpush2.msra.mxu0 0.0
      %462 = vmatprep.subr.mxu0 0.0
      %463 = vmatpush2.msra.mxu0 0.0
      %464 = vmatprep.subr.mxu0 0.0
      %465 = vmatpush2.msra.mxu0 0.0
      %466 = vmatprep.subr.mxu0 0.0
      %467 = vmatpush2.msra.mxu0 0.0
      %468 = vmatprep.subr.mxu0 0.0
      %469 = vmatpush2.msra.mxu0 0.0
      %470 = vmatprep.subr.mxu0 0.0
      %471 = vmatpush2.msra.mxu0 0.0
      %472 = vmatprep.subr.mxu0 0.0
      %473 = vmatpush2.msra.mxu0 0.0
      %474 = vmatprep.subr.mxu0 0.0
      %475 = vmatpush2.msra.mxu0 0.0
      %476 = vmatprep.subr.mxu0 0.0
      %477 = vmatpush2.msra.mxu0 0.0
      %478 = vmatprep.subr.mxu0 0.0
      %479 = vmatpush2.msra.mxu0 0.0
      %480 = vmatprep.mubr.f32.mxu0 0.0
      %481 = vmatmul.mubr.f32.gmra.mxu0 %v414
      %v482 = vpop.f32.mrf.mxu0
      %v483 = vadd.f32 0.0, %v482
      %v484 = vpop.f32.mrf.mxu0
      %485 = vdwg.mxu0
      %486 = vrot.lane.b32.xlu0 %v297, 120
      %v487 = vpop.permute.xlu0 %486
      %488 = vrot.lane.b32.xlu0 %v299, 120
      %v489 = vpop.permute.xlu0 %488
      %v490 = vsel %vm324, %v487, 0
      %v492 = vsel %vm324, %v489, 0
      %494 = vmatprep.subr.mxu0 0.0
      %495 = vmatpush1.xpose.msra.mxu0 0.0
      %496 = vmatprep.subr.mxu0 0.0
      %497 = vmatpush1.xpose.msra.mxu0 0.0
      %498 = vmatprep.subr.mxu0 0.0
      %499 = vmatpush1.xpose.msra.mxu0 0.0
      %500 = vmatprep.subr.mxu0 0.0
      %501 = vmatpush1.xpose.msra.mxu0 0.0
      %502 = vmatprep.subr.mxu0 0.0
      %503 = vmatpush1.xpose.msra.mxu0 0.0
      %504 = vmatprep.subr.mxu0 0.0
      %505 = vmatpush1.xpose.msra.mxu0 0.0
      %506 = vmatprep.subr.mxu0 0.0
      %507 = vmatpush1.xpose.msra.mxu0 0.0
      %508 = vmatprep.subr.mxu0 0.0
      %509 = vmatpush1.xpose.msra.mxu0 0.0
      %510 = vmatprep.subr.mxu0 0.0
      %511 = vmatpush1.xpose.msra.mxu0 0.0
      %512 = vmatprep.subr.mxu0 0.0
      %513 = vmatpush1.xpose.msra.mxu0 0.0
      %514 = vmatprep.subr.mxu0 0.0
      %515 = vmatpush1.xpose.msra.mxu0 0.0
      %516 = vmatprep.subr.mxu0 0.0
      %517 = vmatpush1.xpose.msra.mxu0 0.0
      %518 = vmatprep.subr.mxu0 0.0
      %519 = vmatpush1.xpose.msra.mxu0 0.0
      %520 = vmatprep.subr.mxu0 0.0
      %521 = vmatpush1.xpose.msra.mxu0 0.0
      %522 = vmatprep.subr.mxu0 0.0
      %523 = vmatpush1.xpose.msra.mxu0 0.0
      %524 = vmatprep.subr.mxu0 0.0
      %525 = vmatpush1.xpose.msra.mxu0 %v492
      %526 = vmatprep.subr.mxu0 0.0
      %527 = vmatpush2.xpose.msra.mxu0 0.0
      %528 = vmatprep.subr.mxu0 0.0
      %529 = vmatpush2.xpose.msra.mxu0 0.0
      %530 = vmatprep.subr.mxu0 0.0
      %531 = vmatpush2.xpose.msra.mxu0 0.0
      %532 = vmatprep.subr.mxu0 0.0
      %533 = vmatpush2.xpose.msra.mxu0 0.0
      %534 = vmatprep.subr.mxu0 0.0
      %535 = vmatpush2.xpose.msra.mxu0 0.0
      %536 = vmatprep.subr.mxu0 0.0
      %537 = vmatpush2.xpose.msra.mxu0 0.0
      %538 = vmatprep.subr.mxu0 0.0
      %539 = vmatpush2.xpose.msra.mxu0 0.0
      %540 = vmatprep.subr.mxu0 0.0
      %541 = vmatpush2.xpose.msra.mxu0 0.0
      %542 = vmatprep.subr.mxu0 0.0
      %543 = vmatpush2.xpose.msra.mxu0 0.0
      %544 = vmatprep.subr.mxu0 0.0
      %545 = vmatpush2.xpose.msra.mxu0 0.0
      %546 = vmatprep.subr.mxu0 0.0
      %547 = vmatpush2.xpose.msra.mxu0 0.0
      %548 = vmatprep.subr.mxu0 0.0
      %549 = vmatpush2.xpose.msra.mxu0 0.0
      %550 = vmatprep.subr.mxu0 0.0
      %551 = vmatpush2.xpose.msra.mxu0 0.0
      %552 = vmatprep.subr.mxu0 0.0
      %553 = vmatpush2.xpose.msra.mxu0 0.0
      %554 = vmatprep.subr.mxu0 0.0
      %555 = vmatpush2.xpose.msra.mxu0 0.0
      %556 = vmatprep.subr.mxu0 0.0
      %557 = vmatpush2.xpose.msra.mxu0 0.0
      %558 = vmatprep.mubr.f32.mxu0 0.0
      %559 = vmatmul.mubr.f32.gmra.mxu0 %v490
      %v560 = vpop.f32.mrf.mxu0
      %v561 = vadd.f32 0.0, %v560
      %v562 = vpop.f32.mrf.mxu0
      %563 = vdwg.mxu0
      %v564 = vsel %vm323, %v561, -1e+09
      %v565 = vsel %vm324, %v564, -inf
      %566 = vmax.xlane.f32.xlu0 %v565
      %v567 = vpop.xlane.xlu0 %566
      %v568 = vsub.f32 %v564, %v567
      %v569 = vmul.f32 %v568, 1.442695
      %v570 = vpow.pop %v569
      %v571 = vsel %vm324, %v570, 0.0
      %572 = vadd.xlane.f32.xlu0 %v571
      %v573 = vpop.xlane.xlu0 %572
      %v574 = vrcp.pop %v573
      %v575 = vmul.f32 %v570, %v574
      %577 = vrot.lane.b32.xlu0 %v301, 120
      %v578 = vpop.permute.xlu0 %577
      %v581 = vsel %vm324, %v575, 0
      %583 = vmatprep.subr.mxu0 0.0
      %584 = vmatpush1.msra.mxu0 0.0
      %585 = vmatprep.subr.mxu0 0.0
      %586 = vmatpush1.msra.mxu0 0.0
      %587 = vmatprep.subr.mxu0 0.0
      %588 = vmatpush1.msra.mxu0 0.0
      %589 = vmatprep.subr.mxu0 0.0
      %590 = vmatpush1.msra.mxu0 0.0
      %591 = vmatprep.subr.mxu0 0.0
      %592 = vmatpush1.msra.mxu0 0.0
      %593 = vmatprep.subr.mxu0 0.0
      %594 = vmatpush1.msra.mxu0 0.0
      %595 = vmatprep.subr.mxu0 0.0
      %596 = vmatpush1.msra.mxu0 0.0
      %597 = vmatprep.subr.mxu0 0.0
      %598 = vmatpush1.msra.mxu0 0.0
      %599 = vmatprep.subr.mxu0 0.0
      %600 = vmatpush1.msra.mxu0 0.0
      %601 = vmatprep.subr.mxu0 0.0
      %602 = vmatpush1.msra.mxu0 0.0
      %603 = vmatprep.subr.mxu0 0.0
      %604 = vmatpush1.msra.mxu0 0.0
      %605 = vmatprep.subr.mxu0 0.0
      %606 = vmatpush1.msra.mxu0 0.0
      %607 = vmatprep.subr.mxu0 0.0
      %608 = vmatpush1.msra.mxu0 0.0
      %609 = vmatprep.subr.mxu0 0.0
      %610 = vmatpush1.msra.mxu0 0.0
      %611 = vmatprep.subr.mxu0 0.0
      %612 = vmatpush1.msra.mxu0 0.0
      %613 = vmatprep.subr.mxu0 0.0
      %614 = vmatpush1.msra.mxu0 %v578
      %615 = vmatprep.subr.mxu0 0.0
      %616 = vmatpush2.msra.mxu0 0.0
      %617 = vmatprep.subr.mxu0 0.0
      %618 = vmatpush2.msra.mxu0 0.0
      %619 = vmatprep.subr.mxu0 0.0
      %620 = vmatpush2.msra.mxu0 0.0
      %621 = vmatprep.subr.mxu0 0.0
      %622 = vmatpush2.msra.mxu0 0.0
      %623 = vmatprep.subr.mxu0 0.0
      %624 = vmatpush2.msra.mxu0 0.0
      %625 = vmatprep.subr.mxu0 0.0
      %626 = vmatpush2.msra.mxu0 0.0
      %627 = vmatprep.subr.mxu0 0.0
      %628 = vmatpush2.msra.mxu0 0.0
      %629 = vmatprep.subr.mxu0 0.0
      %630 = vmatpush2.msra.mxu0 0.0
      %631 = vmatprep.subr.mxu0 0.0
      %632 = vmatpush2.msra.mxu0 0.0
      %633 = vmatprep.subr.mxu0 0.0
      %634 = vmatpush2.msra.mxu0 0.0
      %635 = vmatprep.subr.mxu0 0.0
      %636 = vmatpush2.msra.mxu0 0.0
      %637 = vmatprep.subr.mxu0 0.0
      %638 = vmatpush2.msra.mxu0 0.0
      %639 = vmatprep.subr.mxu0 0.0
      %640 = vmatpush2.msra.mxu0 0.0
      %641 = vmatprep.subr.mxu0 0.0
      %642 = vmatpush2.msra.mxu0 0.0
      %643 = vmatprep.subr.mxu0 0.0
      %644 = vmatpush2.msra.mxu0 0.0
      %645 = vmatprep.subr.mxu0 0.0
      %646 = vmatpush2.msra.mxu0 0.0
      %647 = vmatprep.mubr.f32.mxu0 0.0
      %648 = vmatmul.mubr.f32.gmra.mxu0 %v581
      %v649 = vpop.f32.mrf.mxu0
      %v650 = vadd.f32 0.0, %v649
      %v651 = vpop.f32.mrf.mxu0
      %652 = vdwg.mxu0
      %v654 = vsel %vm324, %v650, 0
      %656 = vmatprep.subr.mxu0 0.0
      %657 = vmatpush1.msra.mxu0 0.0
      %658 = vmatprep.subr.mxu0 0.0
      %659 = vmatpush1.msra.mxu0 0.0
      %660 = vmatprep.subr.mxu0 0.0
      %661 = vmatpush1.msra.mxu0 0.0
      %662 = vmatprep.subr.mxu0 0.0
      %663 = vmatpush1.msra.mxu0 0.0
      %664 = vmatprep.subr.mxu0 0.0
      %665 = vmatpush1.msra.mxu0 0.0
      %666 = vmatprep.subr.mxu0 0.0
      %667 = vmatpush1.msra.mxu0 0.0
      %668 = vmatprep.subr.mxu0 0.0
      %669 = vmatpush1.msra.mxu0 0.0
      %670 = vmatprep.subr.mxu0 0.0
      %671 = vmatpush1.msra.mxu0 0.0
      %672 = vmatprep.subr.mxu0 0.0
      %673 = vmatpush1.msra.mxu0 0.0
      %674 = vmatprep.subr.mxu0 0.0
      %675 = vmatpush1.msra.mxu0 0.0
      %676 = vmatprep.subr.mxu0 0.0
      %677 = vmatpush1.msra.mxu0 0.0
      %678 = vmatprep.subr.mxu0 0.0
      %679 = vmatpush1.msra.mxu0 0.0
      %680 = vmatprep.subr.mxu0 0.0
      %681 = vmatpush1.msra.mxu0 0.0
      %682 = vmatprep.subr.mxu0 0.0
      %683 = vmatpush1.msra.mxu0 0.0
      %684 = vmatprep.subr.mxu0 0.0
      %685 = vmatpush1.msra.mxu0 0.0
      %686 = vmatprep.subr.mxu0 0.0
      %687 = vmatpush1.msra.mxu0 %v307
      %688 = vmatprep.subr.mxu0 0.0
      %689 = vmatpush2.msra.mxu0 0.0
      %690 = vmatprep.subr.mxu0 0.0
      %691 = vmatpush2.msra.mxu0 0.0
      %692 = vmatprep.subr.mxu0 0.0
      %693 = vmatpush2.msra.mxu0 0.0
      %694 = vmatprep.subr.mxu0 0.0
      %695 = vmatpush2.msra.mxu0 0.0
      %696 = vmatprep.subr.mxu0 0.0
      %697 = vmatpush2.msra.mxu0 0.0
      %698 = vmatprep.subr.mxu0 0.0
      %699 = vmatpush2.msra.mxu0 0.0
      %700 = vmatprep.subr.mxu0 0.0
      %701 = vmatpush2.msra.mxu0 0.0
      %702 = vmatprep.subr.mxu0 0.0
      %703 = vmatpush2.msra.mxu0 0.0
      %704 = vmatprep.subr.mxu0 0.0
      %705 = vmatpush2.msra.mxu0 0.0
      %706 = vmatprep.subr.mxu0 0.0
      %707 = vmatpush2.msra.mxu0 0.0
      %708 = vmatprep.subr.mxu0 0.0
      %709 = vmatpush2.msra.mxu0 0.0
      %710 = vmatprep.subr.mxu0 0.0
      %711 = vmatpush2.msra.mxu0 0.0
      %712 = vmatprep.subr.mxu0 0.0
      %713 = vmatpush2.msra.mxu0 0.0
      %714 = vmatprep.subr.mxu0 0.0
      %715 = vmatpush2.msra.mxu0 0.0
      %716 = vmatprep.subr.mxu0 0.0
      %717 = vmatpush2.msra.mxu0 0.0
      %718 = vmatprep.subr.mxu0 0.0
      %719 = vmatpush2.msra.mxu0 0.0
      %720 = vmatprep.mubr.f32.mxu0 0.0
      %721 = vmatmul.mubr.f32.gmra.mxu0 %v654
      %v722 = vpop.f32.mrf.mxu0
      %v723 = vadd.f32 0.0, %v722
      %v724 = vpop.f32.mrf.mxu0
      %725 = vdwg.mxu0
      %v727 = vsel %vm324, %v483, 0
      %729 = vmatprep.subr.mxu0 0.0
      %730 = vmatpush1.msra.mxu0 0.0
      %731 = vmatprep.subr.mxu0 0.0
      %732 = vmatpush1.msra.mxu0 0.0
      %733 = vmatprep.subr.mxu0 0.0
      %734 = vmatpush1.msra.mxu0 0.0
      %735 = vmatprep.subr.mxu0 0.0
      %736 = vmatpush1.msra.mxu0 0.0
      %737 = vmatprep.subr.mxu0 0.0
      %738 = vmatpush1.msra.mxu0 0.0
      %739 = vmatprep.subr.mxu0 0.0
      %740 = vmatpush1.msra.mxu0 0.0
      %741 = vmatprep.subr.mxu0 0.0
      %742 = vmatpush1.msra.mxu0 0.0
      %743 = vmatprep.subr.mxu0 0.0
      %744 = vmatpush1.msra.mxu0 0.0
      %745 = vmatprep.subr.mxu0 0.0
      %746 = vmatpush1.msra.mxu0 0.0
      %747 = vmatprep.subr.mxu0 0.0
      %748 = vmatpush1.msra.mxu0 0.0
      %749 = vmatprep.subr.mxu0 0.0
      %750 = vmatpush1.msra.mxu0 0.0
      %751 = vmatprep.subr.mxu0 0.0
      %752 = vmatpush1.msra.mxu0 0.0
      %753 = vmatprep.subr.mxu0 0.0
      %754 = vmatpush1.msra.mxu0 0.0
      %755 = vmatprep.subr.mxu0 0.0
      %756 = vmatpush1.msra.mxu0 0.0
      %757 = vmatprep.subr.mxu0 0.0
      %758 = vmatpush1.msra.mxu0 0.0
      %759 = vmatprep.subr.mxu0 0.0
      %760 = vmatpush1.msra.mxu0 %v306
      %761 = vmatprep.subr.mxu0 0.0
      %762 = vmatpush2.msra.mxu0 0.0
      %763 = vmatprep.subr.mxu0 0.0
      %764 = vmatpush2.msra.mxu0 0.0
      %765 = vmatprep.subr.mxu0 0.0
      %766 = vmatpush2.msra.mxu0 0.0
      %767 = vmatprep.subr.mxu0 0.0
      %768 = vmatpush2.msra.mxu0 0.0
      %769 = vmatprep.subr.mxu0 0.0
      %770 = vmatpush2.msra.mxu0 0.0
      %771 = vmatprep.subr.mxu0 0.0
      %772 = vmatpush2.msra.mxu0 0.0
      %773 = vmatprep.subr.mxu0 0.0
      %774 = vmatpush2.msra.mxu0 0.0
      %775 = vmatprep.subr.mxu0 0.0
      %776 = vmatpush2.msra.mxu0 0.0
      %777 = vmatprep.subr.mxu0 0.0
      %778 = vmatpush2.msra.mxu0 0.0
      %779 = vmatprep.subr.mxu0 0.0
      %780 = vmatpush2.msra.mxu0 0.0
      %781 = vmatprep.subr.mxu0 0.0
      %782 = vmatpush2.msra.mxu0 0.0
      %783 = vmatprep.subr.mxu0 0.0
      %784 = vmatpush2.msra.mxu0 0.0
      %785 = vmatprep.subr.mxu0 0.0
      %786 = vmatpush2.msra.mxu0 0.0
      %787 = vmatprep.subr.mxu0 0.0
      %788 = vmatpush2.msra.mxu0 0.0
      %789 = vmatprep.subr.mxu0 0.0
      %790 = vmatpush2.msra.mxu0 0.0
      %791 = vmatprep.subr.mxu0 0.0
      %792 = vmatpush2.msra.mxu0 0.0
      %793 = vmatprep.mubr.f32.mxu0 0.0
      %794 = vmatmul.mubr.f32.gmra.mxu0 %v727
      %v795 = vpop.f32.mrf.mxu0
      %v796 = vadd.f32 %v723, %v795
      %v797 = vpop.f32.mrf.mxu0
      %798 = vdwg.mxu0
      %799 = vrot.lane.b32.xlu0 %v297, 112
      %v800 = vpop.permute.xlu0 %799
      %801 = vrot.lane.b32.xlu0 %v299, 112
      %v802 = vpop.permute.xlu0 %801
      %v803 = vsel %vm324, %v800, 0
      %v805 = vsel %vm324, %v802, 0
      %807 = vmatprep.subr.mxu0 0.0
      %808 = vmatpush1.xpose.msra.mxu0 0.0
      %809 = vmatprep.subr.mxu0 0.0
      %810 = vmatpush1.xpose.msra.mxu0 0.0
      %811 = vmatprep.subr.mxu0 0.0
      %812 = vmatpush1.xpose.msra.mxu0 0.0
      %813 = vmatprep.subr.mxu0 0.0
      %814 = vmatpush1.xpose.msra.mxu0 0.0
      %815 = vmatprep.subr.mxu0 0.0
      %816 = vmatpush1.xpose.msra.mxu0 0.0
      %817 = vmatprep.subr.mxu0 0.0
      %818 = vmatpush1.xpose.msra.mxu0 0.0
      %819 = vmatprep.subr.mxu0 0.0
      %820 = vmatpush1.xpose.msra.mxu0 0.0
      %821 = vmatprep.subr.mxu0 0.0
      %822 = vmatpush1.xpose.msra.mxu0 0.0
      %823 = vmatprep.subr.mxu0 0.0
      %824 = vmatpush1.xpose.msra.mxu0 0.0
      %825 = vmatprep.subr.mxu0 0.0
      %826 = vmatpush1.xpose.msra.mxu0 0.0
      %827 = vmatprep.subr.mxu0 0.0
      %828 = vmatpush1.xpose.msra.mxu0 0.0
      %829 = vmatprep.subr.mxu0 0.0
      %830 = vmatpush1.xpose.msra.mxu0 0.0
      %831 = vmatprep.subr.mxu0 0.0
      %832 = vmatpush1.xpose.msra.mxu0 0.0
      %833 = vmatprep.subr.mxu0 0.0
      %834 = vmatpush1.xpose.msra.mxu0 0.0
      %835 = vmatprep.subr.mxu0 0.0
      %836 = vmatpush1.xpose.msra.mxu0 0.0
      %837 = vmatprep.subr.mxu0 0.0
      %838 = vmatpush1.xpose.msra.mxu0 %v805
      %839 = vmatprep.subr.mxu0 0.0
      %840 = vmatpush2.xpose.msra.mxu0 0.0
      %841 = vmatprep.subr.mxu0 0.0
      %842 = vmatpush2.xpose.msra.mxu0 0.0
      %843 = vmatprep.subr.mxu0 0.0
      %844 = vmatpush2.xpose.msra.mxu0 0.0
      %845 = vmatprep.subr.mxu0 0.0
      %846 = vmatpush2.xpose.msra.mxu0 0.0
      %847 = vmatprep.subr.mxu0 0.0
      %848 = vmatpush2.xpose.msra.mxu0 0.0
      %849 = vmatprep.subr.mxu0 0.0
      %850 = vmatpush2.xpose.msra.mxu0 0.0
      %851 = vmatprep.subr.mxu0 0.0
      %852 = vmatpush2.xpose.msra.mxu0 0.0
      %853 = vmatprep.subr.mxu0 0.0
      %854 = vmatpush2.xpose.msra.mxu0 0.0
      %855 = vmatprep.subr.mxu0 0.0
      %856 = vmatpush2.xpose.msra.mxu0 0.0
      %857 = vmatprep.subr.mxu0 0.0
      %858 = vmatpush2.xpose.msra.mxu0 0.0
      %859 = vmatprep.subr.mxu0 0.0
      %860 = vmatpush2.xpose.msra.mxu0 0.0
      %861 = vmatprep.subr.mxu0 0.0
      %862 = vmatpush2.xpose.msra.mxu0 0.0
      %863 = vmatprep.subr.mxu0 0.0
      %864 = vmatpush2.xpose.msra.mxu0 0.0
      %865 = vmatprep.subr.mxu0 0.0
      %866 = vmatpush2.xpose.msra.mxu0 0.0
      %867 = vmatprep.subr.mxu0 0.0
      %868 = vmatpush2.xpose.msra.mxu0 0.0
      %869 = vmatprep.subr.mxu0 0.0
      %870 = vmatpush2.xpose.msra.mxu0 0.0
      %871 = vmatprep.mubr.f32.mxu0 0.0
      %872 = vmatmul.mubr.f32.gmra.mxu0 %v803
      %v873 = vpop.f32.mrf.mxu0
      %v874 = vadd.f32 0.0, %v873
      %v875 = vpop.f32.mrf.mxu0
      %876 = vdwg.mxu0
      %v877 = vsel %vm323, %v874, -1e+09
      %v878 = vsel %vm324, %v877, -inf
      %879 = vmax.xlane.f32.xlu0 %v878
      %v880 = vpop.xlane.xlu0 %879
      %v881 = vsub.f32 %v877, %v880
      %v882 = vmul.f32 %v881, 1.442695
      %v883 = vpow.pop %v882
      %v884 = vsel %vm324, %v883, 0.0
      %885 = vadd.xlane.f32.xlu0 %v884
      %v886 = vpop.xlane.xlu0 %885
      %v887 = vrcp.pop %v886
      %v888 = vmul.f32 %v883, %v887
      %889 = vrot.lane.b32.xlu0 %v301, 112
      %v890 = vpop.permute.xlu0 %889
      %v893 = vsel %vm324, %v888, 0
      %895 = vmatprep.subr.mxu0 0.0
      %896 = vmatpush1.msra.mxu0 0.0
      %897 = vmatprep.subr.mxu0 0.0
      %898 = vmatpush1.msra.mxu0 0.0
      %899 = vmatprep.subr.mxu0 0.0
      %900 = vmatpush1.msra.mxu0 0.0
      %901 = vmatprep.subr.mxu0 0.0
      %902 = vmatpush1.msra.mxu0 0.0
      %903 = vmatprep.subr.mxu0 0.0
      %904 = vmatpush1.msra.mxu0 0.0
      %905 = vmatprep.subr.mxu0 0.0
      %906 = vmatpush1.msra.mxu0 0.0
      %907 = vmatprep.subr.mxu0 0.0
      %908 = vmatpush1.msra.mxu0 0.0
      %909 = vmatprep.subr.mxu0 0.0
      %910 = vmatpush1.msra.mxu0 0.0
      %911 = vmatprep.subr.mxu0 0.0
      %912 = vmatpush1.msra.mxu0 0.0
      %913 = vmatprep.subr.mxu0 0.0
      %914 = vmatpush1.msra.mxu0 0.0
      %915 = vmatprep.subr.mxu0 0.0
      %916 = vmatpush1.msra.mxu0 0.0
      %917 = vmatprep.subr.mxu0 0.0
      %918 = vmatpush1.msra.mxu0 0.0
      %919 = vmatprep.subr.mxu0 0.0
      %920 = vmatpush1.msra.mxu0 0.0
      %921 = vmatprep.subr.mxu0 0.0
      %922 = vmatpush1.msra.mxu0 0.0
      %923 = vmatprep.subr.mxu0 0.0
      %924 = vmatpush1.msra.mxu0 0.0
      %925 = vmatprep.subr.mxu0 0.0
      %926 = vmatpush1.msra.mxu0 %v890
      %927 = vmatprep.subr.mxu0 0.0
      %928 = vmatpush2.msra.mxu0 0.0
      %929 = vmatprep.subr.mxu0 0.0
      %930 = vmatpush2.msra.mxu0 0.0
      %931 = vmatprep.subr.mxu0 0.0
      %932 = vmatpush2.msra.mxu0 0.0
      %933 = vmatprep.subr.mxu0 0.0
      %934 = vmatpush2.msra.mxu0 0.0
      %935 = vmatprep.subr.mxu0 0.0
      %936 = vmatpush2.msra.mxu0 0.0
      %937 = vmatprep.subr.mxu0 0.0
      %938 = vmatpush2.msra.mxu0 0.0
      %939 = vmatprep.subr.mxu0 0.0
      %940 = vmatpush2.msra.mxu0 0.0
      %941 = vmatprep.subr.mxu0 0.0
      %942 = vmatpush2.msra.mxu0 0.0
      %943 = vmatprep.subr.mxu0 0.0
      %944 = vmatpush2.msra.mxu0 0.0
      %945 = vmatprep.subr.mxu0 0.0
      %946 = vmatpush2.msra.mxu0 0.0
      %947 = vmatprep.subr.mxu0 0.0
      %948 = vmatpush2.msra.mxu0 0.0
      %949 = vmatprep.subr.mxu0 0.0
      %950 = vmatpush2.msra.mxu0 0.0
      %951 = vmatprep.subr.mxu0 0.0
      %952 = vmatpush2.msra.mxu0 0.0
      %953 = vmatprep.subr.mxu0 0.0
      %954 = vmatpush2.msra.mxu0 0.0
      %955 = vmatprep.subr.mxu0 0.0
      %956 = vmatpush2.msra.mxu0 0.0
      %957 = vmatprep.subr.mxu0 0.0
      %958 = vmatpush2.msra.mxu0 0.0
      %959 = vmatprep.mubr.f32.mxu0 0.0
      %960 = vmatmul.mubr.f32.gmra.mxu0 %v893
      %v961 = vpop.f32.mrf.mxu0
      %v962 = vadd.f32 0.0, %v961
      %v963 = vpop.f32.mrf.mxu0
      %964 = vdwg.mxu0
      %v966 = vsel %vm324, %v962, 0
      %968 = vmatprep.subr.mxu0 0.0
      %969 = vmatpush1.msra.mxu0 0.0
      %970 = vmatprep.subr.mxu0 0.0
      %971 = vmatpush1.msra.mxu0 0.0
      %972 = vmatprep.subr.mxu0 0.0
      %973 = vmatpush1.msra.mxu0 0.0
      %974 = vmatprep.subr.mxu0 0.0
      %975 = vmatpush1.msra.mxu0 0.0
      %976 = vmatprep.subr.mxu0 0.0
      %977 = vmatpush1.msra.mxu0 0.0
      %978 = vmatprep.subr.mxu0 0.0
      %979 = vmatpush1.msra.mxu0 0.0
      %980 = vmatprep.subr.mxu0 0.0
      %981 = vmatpush1.msra.mxu0 0.0
      %982 = vmatprep.subr.mxu0 0.0
      %983 = vmatpush1.msra.mxu0 0.0
      %984 = vmatprep.subr.mxu0 0.0
      %985 = vmatpush1.msra.mxu0 0.0
      %986 = vmatprep.subr.mxu0 0.0
      %987 = vmatpush1.msra.mxu0 0.0
      %988 = vmatprep.subr.mxu0 0.0
      %989 = vmatpush1.msra.mxu0 0.0
      %990 = vmatprep.subr.mxu0 0.0
      %991 = vmatpush1.msra.mxu0 0.0
      %992 = vmatprep.subr.mxu0 0.0
      %993 = vmatpush1.msra.mxu0 0.0
      %994 = vmatprep.subr.mxu0 0.0
      %995 = vmatpush1.msra.mxu0 0.0
      %996 = vmatprep.subr.mxu0 0.0
      %997 = vmatpush1.msra.mxu0 0.0
      %998 = vmatprep.subr.mxu0 0.0
      %999 = vmatpush1.msra.mxu0 %v308
      %1000 = vmatprep.subr.mxu0 0.0
      %1001 = vmatpush2.msra.mxu0 0.0
      %1002 = vmatprep.subr.mxu0 0.0
      %1003 = vmatpush2.msra.mxu0 0.0
      %1004 = vmatprep.subr.mxu0 0.0
      %1005 = vmatpush2.msra.mxu0 0.0
      %1006 = vmatprep.subr.mxu0 0.0
      %1007 = vmatpush2.msra.mxu0 0.0
      %1008 = vmatprep.subr.mxu0 0.0
      %1009 = vmatpush2.msra.mxu0 0.0
      %1010 = vmatprep.subr.mxu0 0.0
      %1011 = vmatpush2.msra.mxu0 0.0
      %1012 = vmatprep.subr.mxu0 0.0
      %1013 = vmatpush2.msra.mxu0 0.0
      %1014 = vmatprep.subr.mxu0 0.0
      %1015 = vmatpush2.msra.mxu0 0.0
      %1016 = vmatprep.subr.mxu0 0.0
      %1017 = vmatpush2.msra.mxu0 0.0
      %1018 = vmatprep.subr.mxu0 0.0
      %1019 = vmatpush2.msra.mxu0 0.0
      %1020 = vmatprep.subr.mxu0 0.0
      %1021 = vmatpush2.msra.mxu0 0.0
      %1022 = vmatprep.subr.mxu0 0.0
      %1023 = vmatpush2.msra.mxu0 0.0
      %1024 = vmatprep.subr.mxu0 0.0
      %1025 = vmatpush2.msra.mxu0 0.0
      %1026 = vmatprep.subr.mxu0 0.0
      %1027 = vmatpush2.msra.mxu0 0.0
      %1028 = vmatprep.subr.mxu0 0.0
      %1029 = vmatpush2.msra.mxu0 0.0
      %1030 = vmatprep.subr.mxu0 0.0
      %1031 = vmatpush2.msra.mxu0 0.0
      %1032 = vmatprep.mubr.f32.mxu0 0.0
      %1033 = vmatmul.mubr.f32.gmra.mxu0 %v966
      %v1034 = vpop.f32.mrf.mxu0
      %v1035 = vadd.f32 0.0, %v1034
      %v1036 = vpop.f32.mrf.mxu0
      %1037 = vdwg.mxu0
      %v1038 = vadd.f32 %v796, %v1035
      %1039 = vrot.lane.b32.xlu0 %v297, 104
      %v1040 = vpop.permute.xlu0 %1039
      %1041 = vrot.lane.b32.xlu0 %v299, 104
      %v1042 = vpop.permute.xlu0 %1041
      %v1043 = vsel %vm324, %v1040, 0
      %v1045 = vsel %vm324, %v1042, 0
      %1047 = vmatprep.subr.mxu0 0.0
      %1048 = vmatpush1.xpose.msra.mxu0 0.0
      %1049 = vmatprep.subr.mxu0 0.0
      %1050 = vmatpush1.xpose.msra.mxu0 0.0
      %1051 = vmatprep.subr.mxu0 0.0
      %1052 = vmatpush1.xpose.msra.mxu0 0.0
      %1053 = vmatprep.subr.mxu0 0.0
      %1054 = vmatpush1.xpose.msra.mxu0 0.0
      %1055 = vmatprep.subr.mxu0 0.0
      %1056 = vmatpush1.xpose.msra.mxu0 0.0
      %1057 = vmatprep.subr.mxu0 0.0
      %1058 = vmatpush1.xpose.msra.mxu0 0.0
      %1059 = vmatprep.subr.mxu0 0.0
      %1060 = vmatpush1.xpose.msra.mxu0 0.0
      %1061 = vmatprep.subr.mxu0 0.0
      %1062 = vmatpush1.xpose.msra.mxu0 0.0
      %1063 = vmatprep.subr.mxu0 0.0
      %1064 = vmatpush1.xpose.msra.mxu0 0.0
      %1065 = vmatprep.subr.mxu0 0.0
      %1066 = vmatpush1.xpose.msra.mxu0 0.0
      %1067 = vmatprep.subr.mxu0 0.0
      %1068 = vmatpush1.xpose.msra.mxu0 0.0
      %1069 = vmatprep.subr.mxu0 0.0
      %1070 = vmatpush1.xpose.msra.mxu0 0.0
      %1071 = vmatprep.subr.mxu0 0.0
      %1072 = vmatpush1.xpose.msra.mxu0 0.0
      %1073 = vmatprep.subr.mxu0 0.0
      %1074 = vmatpush1.xpose.msra.mxu0 0.0
      %1075 = vmatprep.subr.mxu0 0.0
      %1076 = vmatpush1.xpose.msra.mxu0 0.0
      %1077 = vmatprep.subr.mxu0 0.0
      %1078 = vmatpush1.xpose.msra.mxu0 %v1045
      %1079 = vmatprep.subr.mxu0 0.0
      %1080 = vmatpush2.xpose.msra.mxu0 0.0
      %1081 = vmatprep.subr.mxu0 0.0
      %1082 = vmatpush2.xpose.msra.mxu0 0.0
      %1083 = vmatprep.subr.mxu0 0.0
      %1084 = vmatpush2.xpose.msra.mxu0 0.0
      %1085 = vmatprep.subr.mxu0 0.0
      %1086 = vmatpush2.xpose.msra.mxu0 0.0
      %1087 = vmatprep.subr.mxu0 0.0
      %1088 = vmatpush2.xpose.msra.mxu0 0.0
      %1089 = vmatprep.subr.mxu0 0.0
      %1090 = vmatpush2.xpose.msra.mxu0 0.0
      %1091 = vmatprep.subr.mxu0 0.0
      %1092 = vmatpush2.xpose.msra.mxu0 0.0
      %1093 = vmatprep.subr.mxu0 0.0
      %1094 = vmatpush2.xpose.msra.mxu0 0.0
      %1095 = vmatprep.subr.mxu0 0.0
      %1096 = vmatpush2.xpose.msra.mxu0 0.0
      %1097 = vmatprep.subr.mxu0 0.0
      %1098 = vmatpush2.xpose.msra.mxu0 0.0
      %1099 = vmatprep.subr.mxu0 0.0
      %1100 = vmatpush2.xpose.msra.mxu0 0.0
      %1101 = vmatprep.subr.mxu0 0.0
      %1102 = vmatpush2.xpose.msra.mxu0 0.0
      %1103 = vmatprep.subr.mxu0 0.0
      %1104 = vmatpush2.xpose.msra.mxu0 0.0
      %1105 = vmatprep.subr.mxu0 0.0
      %1106 = vmatpush2.xpose.msra.mxu0 0.0
      %1107 = vmatprep.subr.mxu0 0.0
      %1108 = vmatpush2.xpose.msra.mxu0 0.0
      %1109 = vmatprep.subr.mxu0 0.0
      %1110 = vmatpush2.xpose.msra.mxu0 0.0
      %1111 = vmatprep.mubr.f32.mxu0 0.0
      %1112 = vmatmul.mubr.f32.gmra.mxu0 %v1043
      %v1113 = vpop.f32.mrf.mxu0
      %v1114 = vadd.f32 0.0, %v1113
      %v1115 = vpop.f32.mrf.mxu0
      %1116 = vdwg.mxu0
      %v1117 = vsel %vm323, %v1114, -1e+09
      %v1118 = vsel %vm324, %v1117, -inf
      %1119 = vmax.xlane.f32.xlu0 %v1118
      %v1120 = vpop.xlane.xlu0 %1119
      %v1121 = vsub.f32 %v1117, %v1120
      %v1122 = vmul.f32 %v1121, 1.442695
      %v1123 = vpow.pop %v1122
      %v1124 = vsel %vm324, %v1123, 0.0
      %1125 = vadd.xlane.f32.xlu0 %v1124
      %v1126 = vpop.xlane.xlu0 %1125
      %v1127 = vrcp.pop %v1126
      %v1128 = vmul.f32 %v1123, %v1127
      %1129 = vrot.lane.b32.xlu0 %v301, 104
      %v1130 = vpop.permute.xlu0 %1129
      %v1133 = vsel %vm324, %v1128, 0
      %1135 = vmatprep.subr.mxu0 0.0
      %1136 = vmatpush1.msra.mxu0 0.0
      %1137 = vmatprep.subr.mxu0 0.0
      %1138 = vmatpush1.msra.mxu0 0.0
      %1139 = vmatprep.subr.mxu0 0.0
      %1140 = vmatpush1.msra.mxu0 0.0
      %1141 = vmatprep.subr.mxu0 0.0
      %1142 = vmatpush1.msra.mxu0 0.0
      %1143 = vmatprep.subr.mxu0 0.0
      %1144 = vmatpush1.msra.mxu0 0.0
      %1145 = vmatprep.subr.mxu0 0.0
      %1146 = vmatpush1.msra.mxu0 0.0
      %1147 = vmatprep.subr.mxu0 0.0
      %1148 = vmatpush1.msra.mxu0 0.0
      %1149 = vmatprep.subr.mxu0 0.0
      %1150 = vmatpush1.msra.mxu0 0.0
      %1151 = vmatprep.subr.mxu0 0.0
      %1152 = vmatpush1.msra.mxu0 0.0
      %1153 = vmatprep.subr.mxu0 0.0
      %1154 = vmatpush1.msra.mxu0 0.0
      %1155 = vmatprep.subr.mxu0 0.0
      %1156 = vmatpush1.msra.mxu0 0.0
      %1157 = vmatprep.subr.mxu0 0.0
      %1158 = vmatpush1.msra.mxu0 0.0
      %1159 = vmatprep.subr.mxu0 0.0
      %1160 = vmatpush1.msra.mxu0 0.0
      %1161 = vmatprep.subr.mxu0 0.0
      %1162 = vmatpush1.msra.mxu0 0.0
      %1163 = vmatprep.subr.mxu0 0.0
      %1164 = vmatpush1.msra.mxu0 0.0
      %1165 = vmatprep.subr.mxu0 0.0
      %1166 = vmatpush1.msra.mxu0 %v1130
      %1167 = vmatprep.subr.mxu0 0.0
      %1168 = vmatpush2.msra.mxu0 0.0
      %1169 = vmatprep.subr.mxu0 0.0
      %1170 = vmatpush2.msra.mxu0 0.0
      %1171 = vmatprep.subr.mxu0 0.0
      %1172 = vmatpush2.msra.mxu0 0.0
      %1173 = vmatprep.subr.mxu0 0.0
      %1174 = vmatpush2.msra.mxu0 0.0
      %1175 = vmatprep.subr.mxu0 0.0
      %1176 = vmatpush2.msra.mxu0 0.0
      %1177 = vmatprep.subr.mxu0 0.0
      %1178 = vmatpush2.msra.mxu0 0.0
      %1179 = vmatprep.subr.mxu0 0.0
      %1180 = vmatpush2.msra.mxu0 0.0
      %1181 = vmatprep.subr.mxu0 0.0
      %1182 = vmatpush2.msra.mxu0 0.0
      %1183 = vmatprep.subr.mxu0 0.0
      %1184 = vmatpush2.msra.mxu0 0.0
      %1185 = vmatprep.subr.mxu0 0.0
      %1186 = vmatpush2.msra.mxu0 0.0
      %1187 = vmatprep.subr.mxu0 0.0
      %1188 = vmatpush2.msra.mxu0 0.0
      %1189 = vmatprep.subr.mxu0 0.0
      %1190 = vmatpush2.msra.mxu0 0.0
      %1191 = vmatprep.subr.mxu0 0.0
      %1192 = vmatpush2.msra.mxu0 0.0
      %1193 = vmatprep.subr.mxu0 0.0
      %1194 = vmatpush2.msra.mxu0 0.0
      %1195 = vmatprep.subr.mxu0 0.0
      %1196 = vmatpush2.msra.mxu0 0.0
      %1197 = vmatprep.subr.mxu0 0.0
      %1198 = vmatpush2.msra.mxu0 0.0
      %1199 = vmatprep.mubr.f32.mxu0 0.0
      %1200 = vmatmul.mubr.f32.gmra.mxu0 %v1133
      %v1201 = vpop.f32.mrf.mxu0
      %v1202 = vadd.f32 0.0, %v1201
      %v1203 = vpop.f32.mrf.mxu0
      %1204 = vdwg.mxu0
      %v1206 = vsel %vm324, %v1202, 0
      %1208 = vmatprep.subr.mxu0 0.0
      %1209 = vmatpush1.msra.mxu0 0.0
      %1210 = vmatprep.subr.mxu0 0.0
      %1211 = vmatpush1.msra.mxu0 0.0
      %1212 = vmatprep.subr.mxu0 0.0
      %1213 = vmatpush1.msra.mxu0 0.0
      %1214 = vmatprep.subr.mxu0 0.0
      %1215 = vmatpush1.msra.mxu0 0.0
      %1216 = vmatprep.subr.mxu0 0.0
      %1217 = vmatpush1.msra.mxu0 0.0
      %1218 = vmatprep.subr.mxu0 0.0
      %1219 = vmatpush1.msra.mxu0 0.0
      %1220 = vmatprep.subr.mxu0 0.0
      %1221 = vmatpush1.msra.mxu0 0.0
      %1222 = vmatprep.subr.mxu0 0.0
      %1223 = vmatpush1.msra.mxu0 0.0
      %1224 = vmatprep.subr.mxu0 0.0
      %1225 = vmatpush1.msra.mxu0 0.0
      %1226 = vmatprep.subr.mxu0 0.0
      %1227 = vmatpush1.msra.mxu0 0.0
      %1228 = vmatprep.subr.mxu0 0.0
      %1229 = vmatpush1.msra.mxu0 0.0
      %1230 = vmatprep.subr.mxu0 0.0
      %1231 = vmatpush1.msra.mxu0 0.0
      %1232 = vmatprep.subr.mxu0 0.0
      %1233 = vmatpush1.msra.mxu0 0.0
      %1234 = vmatprep.subr.mxu0 0.0
      %1235 = vmatpush1.msra.mxu0 0.0
      %1236 = vmatprep.subr.mxu0 0.0
      %1237 = vmatpush1.msra.mxu0 0.0
      %1238 = vmatprep.subr.mxu0 0.0
      %1239 = vmatpush1.msra.mxu0 %v309
      %1240 = vmatprep.subr.mxu0 0.0
      %1241 = vmatpush2.msra.mxu0 0.0
      %1242 = vmatprep.subr.mxu0 0.0
      %1243 = vmatpush2.msra.mxu0 0.0
      %1244 = vmatprep.subr.mxu0 0.0
      %1245 = vmatpush2.msra.mxu0 0.0
      %1246 = vmatprep.subr.mxu0 0.0
      %1247 = vmatpush2.msra.mxu0 0.0
      %1248 = vmatprep.subr.mxu0 0.0
      %1249 = vmatpush2.msra.mxu0 0.0
      %1250 = vmatprep.subr.mxu0 0.0
      %1251 = vmatpush2.msra.mxu0 0.0
      %1252 = vmatprep.subr.mxu0 0.0
      %1253 = vmatpush2.msra.mxu0 0.0
      %1254 = vmatprep.subr.mxu0 0.0
      %1255 = vmatpush2.msra.mxu0 0.0
      %1256 = vmatprep.subr.mxu0 0.0
      %1257 = vmatpush2.msra.mxu0 0.0
      %1258 = vmatprep.subr.mxu0 0.0
      %1259 = vmatpush2.msra.mxu0 0.0
      %1260 = vmatprep.subr.mxu0 0.0
      %1261 = vmatpush2.msra.mxu0 0.0
      %1262 = vmatprep.subr.mxu0 0.0
      %1263 = vmatpush2.msra.mxu0 0.0
      %1264 = vmatprep.subr.mxu0 0.0
      %1265 = vmatpush2.msra.mxu0 0.0
      %1266 = vmatprep.subr.mxu0 0.0
      %1267 = vmatpush2.msra.mxu0 0.0
      %1268 = vmatprep.subr.mxu0 0.0
      %1269 = vmatpush2.msra.mxu0 0.0
      %1270 = vmatprep.subr.mxu0 0.0
      %1271 = vmatpush2.msra.mxu0 0.0
      %1272 = vmatprep.mubr.f32.mxu0 0.0
      %1273 = vmatmul.mubr.f32.gmra.mxu0 %v1206
      %v1274 = vpop.f32.mrf.mxu0
      %v1275 = vadd.f32 0.0, %v1274
      %v1276 = vpop.f32.mrf.mxu0
      %1277 = vdwg.mxu0
      %v1278 = vadd.f32 %v1038, %v1275
      %v1279 = vld [vmem:[%s5] sm:$0x1]
      %v1281 = vlaneseq
      %v1282 = vshrl.u32 %v1281, 7
      %v1283 = vsub.s32 0, %v1282
      %v1284 = vrot.slane %v1279, %v1283
      %v1286 = vadd.f32 %v1278, %v1284
      %v1287 = vpack.c.bf16 %v1286, %v1286
      %vm1288 = vcmask 257024
      %1289 = vst.msk [vmem:[%s294] sm:$0xf] %vm1288, %v1287
      %p1290 = scmp.lt.s32.totalorder %s17, 1
      %s1291 = scalar_select %p1290, %s17, 1
      %s1292 = smul.addr %s1291, 4
      %s1293 = scalar_lea.vmem %s6, %s1292
      // Predicated region
      $region45: #{transformer_forward.46} parent=43 // pred_check
        %p1294 = pneg %p181
      $region46: #{transformer_forward.46} parent=43 // pred_check_branch
        %1296 = sbr.rel (%p1294) target = $region48
      $region47: #{transformer_forward.46} parent=43 // pred_region
        _
      $region48: #{transformer_forward.46} parent=43 // pred_fallthru
        _
    $region44: #{transformer_forward.46} parent=5 // pred_fallthru
      _
    %p1297 = scmp.le.s32.totalorder 2, %s12
    // Predicated region
    $region49: #{transformer_forward.46} parent=5 // pred_check
      %p1298 = pneg %p1297
    $region50: #{transformer_forward.46} parent=5 // pred_check_branch
      %1300 = sbr.rel (%p1298) target = $region52
    $region51: #{transformer_forward.46} parent=5 // pred_region
      %s1301 = ssub.s32 %s12, 2
      // Predicated region
      $region53: #{transformer_forward.46} parent=51 // pred_check
        %p1302 = pneg %p187
      $region54: #{transformer_forward.46} parent=51 // pred_check_branch
        %1304 = sbr.rel (%p1302) target = $region56
      $region55: #{transformer_forward.46} parent=51 // pred_region
        %p1305 = scmp.lt.s32.totalorder %s18, 1
        %s1306 = scalar_select %p1305, %s18, 1
        %s1307 = smul.addr %s1306, 4
        %s1308 = scalar_lea.vmem %s6, %s1307
      $region56: #{transformer_forward.46} parent=51 // pred_fallthru
        _
    $region52: #{transformer_forward.46} parent=5 // pred_fallthru
      _
  $region6: #{transformer_forward.46} parent=0 // loop_footer
    %s16 = sadd.s32 1, %s12
  $region7: #{transformer_forward.46} parent=0 // loop_footer_branch
    %11 = sbr.rel target = $region3
  $region8: #{transformer_forward.46} parent=0 // loop_exit
    _

</llo_original>
